<compile_context>
chip_gen: v7x
topology: tpu7x:2x2x1
jax: 0.10.0
libtpu: 0.0.40
codegen_flags: <defaults>
</compile_context>

<pallas_src>
import functools

import jax
import jax.numpy as jnp
import numpy as np
from jax import lax
from jax.experimental import pallas as pl
from jax.experimental.pallas import tpu as pltpu

EPS = 1e-5                      # torch.nn.LayerNorm default eps
COMPUTE_DTYPE = jnp.bfloat16    # MXU operand dtype (accumulation is fp32)


# ------------------------------ fused kernel -------------------------------

def _gtrxl_layer_kernel(
    # per-batch activations
    x_ref, mem_ref,
    # broadcast inputs
    pos_ref, mask_ref,
    wq_ref, wkv_ref, wp_ref, wout_ref, u_ref, v_ref,
    ln1g_ref, ln1b_ref, ln2g_ref, ln2b_ref,
    ffw1_ref, ffb1_ref, ffw2_ref, ffb2_ref,
    g1w_ref, g1b_ref, g2w_ref, g2b_ref,
    # output
    out_ref,
    *, scale, bg, compute_dtype):
  f32 = jnp.float32
  cs, dm = x_ref.shape[1], x_ref.shape[2]
  ps = mem_ref.shape[1]
  T = cs + ps
  H, d = u_ref.shape

  def ln(t, g, b):
    mu = jnp.mean(t, axis=-1, keepdims=True)
    var = jnp.mean((t - mu) ** 2, axis=-1, keepdims=True)
    return (t - mu) * lax.rsqrt(var + EPS) * g + b

  def mm(a, w):                                     # bf16 MXU, fp32 accumulate
    return jnp.dot(a.astype(compute_dtype), w, preferred_element_type=f32)

  x = x_ref[0]                                      # (cs, dm)  fp32
  mem = mem_ref[0]                                  # (ps, dm)
  pos = pos_ref[...]                                # (T,  dm)
  masked = mask_ref[...] > 0.5                      # (cs, T)  hoisted once

  # ---- LN1 fused with Q / KV / P projections ------------------------------
  xn = ln(x, ln1g_ref[...], ln1b_ref[...])          # (cs, dm)
  xm = jnp.concatenate([mem, xn], axis=0)           # (T, dm)  (memory not normed)
  kv = mm(xm, wkv_ref[...])                         # (T, 2*H*d)
  q = mm(xn, wq_ref[...])                           # (cs, H*d)
  p = mm(pos, wp_ref[...])                          # (T, H*d)
  u_all = u_ref[...]
  v_all = v_ref[...]
  wout = wout_ref[...]                              # (H*d, dm) bf16

  neg_inf = jnp.float32(-jnp.inf)
  dn_nt = (((1,), (1,)), ((), ()))                  # contract trailing dim (A @ B.T)

  attn_out = jnp.zeros((cs, dm), f32)
  # All heads handled inside this single grid step (short unrolled loop).
  # TODO(synk): for production H/cs, batch heads with a 3-D dot_general and do
  # the rel-shift with pltpu.roll instead of the per-row unrolled slices.
  for h in range(H):
    ksl = slice(h * d, (h + 1) * d)
    vsl = slice(H * d + h * d, H * d + (h + 1) * d)
    qh, kh, vh, ph = q[:, ksl], kv[:, ksl], kv[:, vsl], p[:, ksl]
    uh = u_all[h:h + 1, :]
    vvh = v_all[h:h + 1, :]

    content = lax.dot_general((qh + uh).astype(compute_dtype),
                              kh.astype(compute_dtype), dn_nt,
                              preferred_element_type=f32)          # (cs, T)
    posraw = lax.dot_general((qh + vvh).astype(compute_dtype),
                             ph.astype(compute_dtype), dn_nt,
                             preferred_element_type=f32)           # (cs, T)

    # exact Transformer-XL rel-shift (flat-view trick) done in-register:
    # shifted row i == concat(B[i], 0, B[i+1])[cs-1-i : cs-1-i+T]
    zcol = jnp.zeros((1, 1), f32)
    zrow = jnp.zeros((1, T), f32)
    rows = []
    for i in range(cs):
      nxt = posraw[i + 1:i + 2, :] if i + 1 < cs else zrow
      ext = jnp.concatenate([posraw[i:i + 1, :], zcol, nxt], axis=-1)
      rows.append(ext[:, cs - 1 - i:cs - 1 - i + T])
    pos_sh = jnp.concatenate(rows, axis=0)                         # (cs, T)

    a = content + pos_sh
    a = jnp.where(masked, neg_inf, a)                 # mask before scale (torch)
    a = a * scale
    a = a - jnp.max(a, axis=-1, keepdims=True)
    e = jnp.exp(a)
    probs = e * pl.reciprocal(jnp.sum(e, axis=-1, keepdims=True), approx=True)

    awv = jnp.dot(probs.astype(compute_dtype), vh.astype(compute_dtype),
                  preferred_element_type=f32)                      # (cs, d)
    attn_out = attn_out + jnp.dot(awv.astype(compute_dtype), wout[ksl, :],
                                  preferred_element_type=f32)      # (cs, dm)

  # ---- GRU-style gating ----------------------------------------------------
  def gate(gw, gb, xg, yg):
    # gw: (6, dm, dm) bf16 = [Wr, Ur, Wz, Uz, Wg, Ug]
    # gb: (3, dm) f32 = [br+bur, bz+buz, bwg+bug] (pre-combined)
    xb, yb = xg.astype(compute_dtype), yg.astype(compute_dtype)
    r = jax.nn.sigmoid(jnp.dot(yb, gw[0], preferred_element_type=f32)
                       + jnp.dot(xb, gw[1], preferred_element_type=f32)
                       + gb[0:1, :])
    z = jax.nn.sigmoid(jnp.dot(yb, gw[2], preferred_element_type=f32)
                       + jnp.dot(xb, gw[3], preferred_element_type=f32)
                       + gb[1:2, :] - bg)
    hc = jnp.tanh(jnp.dot(yb, gw[4], preferred_element_type=f32)
                  + jnp.dot((r * xg).astype(compute_dtype), gw[5],
                            preferred_element_type=f32)
                  + gb[2:3, :])
    return (1.0 - z) * xg + z * hc

  src = gate(g1w_ref[...], g1b_ref[...], x, attn_out)

  # ---- LN2 + positionwise FF + gate2 --------------------------------------
  s2 = ln(src, ln2g_ref[...], ln2b_ref[...])
  h1 = jnp.maximum(mm(s2, ffw1_ref[...]) + ffb1_ref[...], 0.0)
  ffo = mm(h1, ffw2_ref[...]) + ffb2_ref[...]
  out = gate(g2w_ref[...], g2b_ref[...], src, ffo)

  out_ref[0] = out.astype(out_ref.dtype)


# ------------------------------- wrapper ------------------------------------

def stable_transformer_layer_forward(params, input_, pos_embs, u, v,
                                     mask=None, mems=None,
                                     compute_dtype=COMPUTE_DTYPE):
  cs, bs, dm = input_.shape
  ps = mems.shape[0]
  T = cs + ps
  mp = params["mha"]
  cd = compute_dtype

  # batch-major layout so each grid step owns one contiguous (cs, dm) slab
  x_b = jnp.transpose(input_, (1, 0, 2))            # (bs, cs, dm)
  mem_b = jnp.transpose(mems, (1, 0, 2))            # (bs, ps, dm)
  pos2 = pos_embs.reshape(T, dm).astype(jnp.float32)
  if mask is None:
    mask2 = jnp.zeros((cs, T), jnp.float32)
  else:
    mask2 = mask.reshape(cs, T).astype(jnp.float32)

  def pack_gate(g):
    W = jnp.stack([g["Wr"], g["Ur"], g["Wz"], g["Uz"], g["Wg"], g["Ug"]]).astype(cd)
    b = jnp.stack([g["br"] + g["bur"], g["bz"] + g["buz"], g["bwg"] + g["bug"]])
    return W, b.astype(jnp.float32)

  g1w, g1b = pack_gate(params["gate1"])
  g2w, g2b = pack_gate(params["gate2"])

  row = lambda a: a.reshape(1, -1).astype(jnp.float32)
  bcast_args = (
      pos2, mask2,
      mp["W_q"].astype(cd), mp["W_kv"].astype(cd),
      mp["W_p"].astype(cd), mp["W_out"].astype(cd),
      u.astype(jnp.float32), v.astype(jnp.float32),
      row(params["ln1_g"]), row(params["ln1_b"]),
      row(params["ln2_g"]), row(params["ln2_b"]),
      params["ff_w1"].astype(cd), row(params["ff_b1"]),
      params["ff_w2"].astype(cd), row(params["ff_b2"]),
      g1w, g1b, g2w, g2b,
  )

  def full_spec(a):
    nd = a.ndim
    return pl.BlockSpec(a.shape, lambda b: (0,) * nd)

  in_specs = [pl.BlockSpec((1, cs, dm), lambda b: (b, 0, 0)),
              pl.BlockSpec((1, ps, dm), lambda b: (b, 0, 0))]
  in_specs += [full_spec(a) for a in bcast_args]

  kernel = functools.partial(_gtrxl_layer_kernel, scale=float(mp["scale"]),
                             bg=0.1, compute_dtype=cd)

  out_b = pl.pallas_call(
      kernel,
      out_shape=jax.ShapeDtypeStruct((bs, cs, dm), jnp.float32),
      grid=(bs,),
      in_specs=in_specs,
      out_specs=pl.BlockSpec((1, cs, dm), lambda b: (b, 0, 0)),
      compiler_params=pltpu.CompilerParams(
          dimension_semantics=("parallel",),       # shards batch over v7x's 2 TCs
          vmem_limit_bytes=32 * 1024 * 1024),
  )(x_b, mem_b, *bcast_args)

  return jnp.transpose(out_b, (1, 0, 2))            # back to (cs, bs, dm)


# --------------------------- parameter construction -------------------------

def init_params(key, n_heads, d_input, d_head_inner, d_ff_inner):
  ks = iter(jax.random.split(key, 64))
  w = lambda din, dout: 0.02 * jax.random.normal(next(ks), (din, dout), jnp.float32)
  b = lambda dout: 0.02 * jax.random.normal(next(ks), (dout,), jnp.float32)

  def gate_params():
    return dict(Wr=w(d_input, d_input), Ur=w(d_input, d_input),
                Wz=w(d_input, d_input), Uz=w(d_input, d_input),
                Wg=w(d_input, d_input), Ug=w(d_input, d_input),
                br=b(d_input), bur=b(d_input), bz=b(d_input),
                buz=b(d_input), bwg=b(d_input), bug=b(d_input))

  Hd = n_heads * d_head_inner
  return dict(
      gate1=gate_params(),
      gate2=gate_params(),
      mha=dict(n_heads=n_heads, d_inner=d_head_inner,
               scale=1.0 / (d_head_inner ** 0.5),
               W_kv=w(d_input, 2 * Hd), W_q=w(d_input, Hd),
               W_p=w(d_input, Hd), W_out=w(Hd, d_input)),
      ff_w1=w(d_input, d_ff_inner), ff_b1=b(d_ff_inner),
      ff_w2=w(d_ff_inner, d_input), ff_b2=b(d_input),
      ln1_g=jnp.ones((d_input,), jnp.float32), ln1_b=jnp.zeros((d_input,), jnp.float32),
      ln2_g=jnp.ones((d_input,), jnp.float32), ln2_b=jnp.zeros((d_input,), jnp.float32),
  )


# ------------------------------ pure-JAX reference ---------------------------

def reference_forward(params, input_, pos_embs, u, v, mask=None, mems=None):
  def ln(x, g, bb):
    m = x.mean(-1, keepdims=True)
    var = ((x - m) ** 2).mean(-1, keepdims=True)
    return (x - m) / jnp.sqrt(var + EPS) * g + bb

  def gate(p, x, y, bg=0.1):
    r = jax.nn.sigmoid(y @ p["Wr"] + p["br"] + x @ p["Ur"] + p["bur"])
    z = jax.nn.sigmoid(y @ p["Wz"] + p["bz"] + x @ p["Uz"] + p["buz"] - bg)
    h = jnp.tanh(y @ p["Wg"] + p["bwg"] + (r * x) @ p["Ug"] + p["bug"])
    return (1 - z) * x + z * h

  mp = params["mha"]
  cs, bs, dm = input_.shape
  ps = mems.shape[0]
  T = cs + ps
  H, d = mp["n_heads"], mp["d_inner"]

  x2 = ln(input_, params["ln1_g"], params["ln1_b"])
  xm = jnp.concatenate([mems, x2], 0)
  kv = xm @ mp["W_kv"]
  k_, v_ = jnp.split(kv, 2, axis=-1)
  q_ = x2 @ mp["W_q"]
  content = jnp.einsum("ibhd,jbhd->ijbh", q_.reshape(cs, bs, H, d) + u,
                       k_.reshape(T, bs, H, d))
  p_ = (pos_embs @ mp["W_p"]).reshape(T, H, d)
  pos = jnp.einsum("ibhd,jhd->ijbh", q_.reshape(cs, bs, H, d) + v, p_)
  zp = jnp.zeros((cs, 1, bs, H), pos.dtype)
  pos = jnp.concatenate([zp, pos], axis=1).reshape(-1, bs, H)[cs:].reshape(cs, T, bs, H)
  attn = content + pos
  if mask is not None:
    attn = jnp.where(mask[..., None], -jnp.inf, attn)
  attn = jax.nn.softmax(attn * mp["scale"], axis=1)
  awv = jnp.einsum("ijbh,jbhd->ibhd", attn, v_.reshape(T, bs, H, d)).reshape(cs, bs, H * d)
  attn_out = awv @ mp["W_out"]
  src = gate(params["gate1"], input_, attn_out)
  ffo = jnp.maximum(ln(src, params["ln2_g"], params["ln2_b"]) @ params["ff_w1"]
                    + params["ff_b1"], 0.0) @ params["ff_w2"] + params["ff_b2"]
  return gate(params["gate2"], src, ffo)


# ----------------------------------- main ------------------------------------

if __name__ == "__main__":
  n_heads, d_input, d_head_inner, d_ff_inner = 4, 32, 8, 64
  cur_seq, prev_seq, bs = 8, 8, 2

  key = jax.random.PRNGKey(0)
  pkey, k1, k2, k3, k4, k5 = jax.random.split(key, 6)
  params = init_params(pkey, n_heads, d_input, d_head_inner, d_ff_inner)

  input_ = jax.random.normal(k1, (cur_seq, bs, d_input), jnp.float32)
  pos_embs = jax.random.normal(k2, (cur_seq + prev_seq, 1, d_input), jnp.float32)
  mems = jax.random.normal(k3, (prev_seq, bs, d_input), jnp.float32)
  u = 0.1 * jax.random.normal(k4, (n_heads, d_head_inner), jnp.float32)
  v = 0.1 * jax.random.normal(k5, (n_heads, d_head_inner), jnp.float32)

  out = stable_transformer_layer_forward(params, input_, pos_embs, u, v,
                                         mask=None, mems=mems)
  out = jax.block_until_ready(out)
  assert out.shape == (cur_seq, bs, d_input)

  ref = reference_forward(params, input_, pos_embs, u, v, mask=None, mems=mems)
  # bf16 MXU operands + approx reciprocal in the softmax -> loosened tolerance.
  np.testing.assert_allclose(np.asarray(out), np.asarray(ref), rtol=5e-2, atol=5e-2)

  print("KERNEL_OK")
</pallas_src>

<mosaic_0001>
module attributes {stable_mosaic.version = 11 : i64} {
  func.func @_gtrxl_layer_kernel(%arg0: i32, %arg1: memref<1x8x32xf32, #tpu.memory_space<vmem>>, %arg2: memref<1x8x32xf32, #tpu.memory_space<vmem>>, %arg3: memref<16x32xf32, #tpu.memory_space<vmem>>, %arg4: memref<8x16xf32, #tpu.memory_space<vmem>>, %arg5: memref<32x32xbf16, #tpu.memory_space<vmem>>, %arg6: memref<32x64xbf16, #tpu.memory_space<vmem>>, %arg7: memref<32x32xbf16, #tpu.memory_space<vmem>>, %arg8: memref<32x32xbf16, #tpu.memory_space<vmem>>, %arg9: memref<4x8xf32, #tpu.memory_space<vmem>>, %arg10: memref<4x8xf32, #tpu.memory_space<vmem>>, %arg11: memref<1x32xf32, #tpu.memory_space<vmem>>, %arg12: memref<1x32xf32, #tpu.memory_space<vmem>>, %arg13: memref<1x32xf32, #tpu.memory_space<vmem>>, %arg14: memref<1x32xf32, #tpu.memory_space<vmem>>, %arg15: memref<32x64xbf16, #tpu.memory_space<vmem>>, %arg16: memref<1x64xf32, #tpu.memory_space<vmem>>, %arg17: memref<64x32xbf16, #tpu.memory_space<vmem>>, %arg18: memref<1x32xf32, #tpu.memory_space<vmem>>, %arg19: memref<6x32x32xbf16, #tpu.memory_space<vmem>>, %arg20: memref<3x32xf32, #tpu.memory_space<vmem>>, %arg21: memref<6x32x32xbf16, #tpu.memory_space<vmem>>, %arg22: memref<3x32xf32, #tpu.memory_space<vmem>>, %arg23: memref<1x8x32xf32, #tpu.memory_space<vmem>>) attributes {dimension_semantics = [#tpu.dimension_semantics<parallel>], iteration_bounds = array<i64: 2>, scalar_prefetch = 0 : i64, scratch_operands = 0 : i64, tpu.core_type = #tpu.core_type<tc>, window_params = [{transform_indices = @transform_0, window_bounds = array<i64: 1, 8, 32>}, {transform_indices = @transform_1, window_bounds = array<i64: 1, 8, 32>}, {pipeline_mode = #tpu.pipeline_mode<synchronous>, transform_indices = @transform_2, window_bounds = array<i64: 16, 32>}, {pipeline_mode = #tpu.pipeline_mode<synchronous>, transform_indices = @transform_3, window_bounds = array<i64: 8, 16>}, {pipeline_mode = #tpu.pipeline_mode<synchronous>, transform_indices = @transform_4, window_bounds = array<i64: 32, 32>}, {pipeline_mode = #tpu.pipeline_mode<synchronous>, transform_indices = @transform_5, window_bounds = array<i64: 32, 64>}, {pipeline_mode = #tpu.pipeline_mode<synchronous>, transform_indices = @transform_6, window_bounds = array<i64: 32, 32>}, {pipeline_mode = #tpu.pipeline_mode<synchronous>, transform_indices = @transform_7, window_bounds = array<i64: 32, 32>}, {pipeline_mode = #tpu.pipeline_mode<synchronous>, transform_indices = @transform_8, window_bounds = array<i64: 4, 8>}, {pipeline_mode = #tpu.pipeline_mode<synchronous>, transform_indices = @transform_9, window_bounds = array<i64: 4, 8>}, {pipeline_mode = #tpu.pipeline_mode<synchronous>, transform_indices = @transform_10, window_bounds = array<i64: 1, 32>}, {pipeline_mode = #tpu.pipeline_mode<synchronous>, transform_indices = @transform_11, window_bounds = array<i64: 1, 32>}, {pipeline_mode = #tpu.pipeline_mode<synchronous>, transform_indices = @transform_12, window_bounds = array<i64: 1, 32>}, {pipeline_mode = #tpu.pipeline_mode<synchronous>, transform_indices = @transform_13, window_bounds = array<i64: 1, 32>}, {pipeline_mode = #tpu.pipeline_mode<synchronous>, transform_indices = @transform_14, window_bounds = array<i64: 32, 64>}, {pipeline_mode = #tpu.pipeline_mode<synchronous>, transform_indices = @transform_15, window_bounds = array<i64: 1, 64>}, {pipeline_mode = #tpu.pipeline_mode<synchronous>, transform_indices = @transform_16, window_bounds = array<i64: 64, 32>}, {pipeline_mode = #tpu.pipeline_mode<synchronous>, transform_indices = @transform_17, window_bounds = array<i64: 1, 32>}, {pipeline_mode = #tpu.pipeline_mode<synchronous>, transform_indices = @transform_18, window_bounds = array<i64: 6, 32, 32>}, {pipeline_mode = #tpu.pipeline_mode<synchronous>, transform_indices = @transform_19, window_bounds = array<i64: 3, 32>}, {pipeline_mode = #tpu.pipeline_mode<synchronous>, transform_indices = @transform_20, window_bounds = array<i64: 6, 32, 32>}, {pipeline_mode = #tpu.pipeline_mode<synchronous>, transform_indices = @transform_21, window_bounds = array<i64: 3, 32>}, {transform_indices = @transform_22, window_bounds = array<i64: 1, 8, 32>}]} {
    %c0 = arith.constant 0 : index
    %c0_0 = arith.constant 0 : index
    %c0_1 = arith.constant 0 : index
    %0 = vector.load %arg1[%c0, %c0_0, %c0_1] : memref<1x8x32xf32, #tpu.memory_space<vmem>>, vector<1x8x32xf32>
    %1 = vector.shape_cast %0 : vector<1x8x32xf32> to vector<8x32xf32>
    %c0_2 = arith.constant 0 : index
    %c0_3 = arith.constant 0 : index
    %c0_4 = arith.constant 0 : index
    %2 = vector.load %arg2[%c0_2, %c0_3, %c0_4] : memref<1x8x32xf32, #tpu.memory_space<vmem>>, vector<1x8x32xf32>
    %3 = vector.shape_cast %2 : vector<1x8x32xf32> to vector<8x32xf32>
    %c0_5 = arith.constant 0 : index
    %c0_6 = arith.constant 0 : index
    %4 = vector.load %arg3[%c0_5, %c0_6] : memref<16x32xf32, #tpu.memory_space<vmem>>, vector<16x32xf32>
    %c0_7 = arith.constant 0 : index
    %c0_8 = arith.constant 0 : index
    %5 = vector.load %arg4[%c0_7, %c0_8] : memref<8x16xf32, #tpu.memory_space<vmem>>, vector<8x16xf32>
    %cst = arith.constant 5.000000e-01 : f32
    %6 = vector.broadcast %cst : f32 to vector<8x16xf32>
    %7 = arith.cmpf ogt, %5, %6 : vector<8x16xf32>
    %c0_9 = arith.constant 0 : index
    %c0_10 = arith.constant 0 : index
    %8 = vector.load %arg11[%c0_9, %c0_10] : memref<1x32xf32, #tpu.memory_space<vmem>>, vector<1x32xf32>
    %c0_11 = arith.constant 0 : index
    %c0_12 = arith.constant 0 : index
    %9 = vector.load %arg12[%c0_11, %c0_12] : memref<1x32xf32, #tpu.memory_space<vmem>>, vector<1x32xf32>
    %cst_13 = arith.constant dense<0.000000e+00> : vector<8xf32>
    %10 = vector.multi_reduction <add>, %1, %cst_13 [1] : vector<8x32xf32> to vector<8xf32>
    %11 = vector.shape_cast %10 : vector<8xf32> to vector<8x1xf32>
    %cst_14 = arith.constant 3.200000e+01 : f32
    %12 = vector.broadcast %cst_14 : f32 to vector<8x1xf32>
    %13 = arith.divf %11, %12 : vector<8x1xf32>
    %14 = vector.broadcast %13 : vector<8x1xf32> to vector<8x32xf32>
    %15 = arith.subf %1, %14 : vector<8x32xf32>
    %16 = arith.mulf %15, %15 : vector<8x32xf32>
    %cst_15 = arith.constant dense<0.000000e+00> : vector<8xf32>
    %17 = vector.multi_reduction <add>, %16, %cst_15 [1] : vector<8x32xf32> to vector<8xf32>
    %18 = vector.shape_cast %17 : vector<8xf32> to vector<8x1xf32>
    %cst_16 = arith.constant 3.200000e+01 : f32
    %19 = vector.broadcast %cst_16 : f32 to vector<8x1xf32>
    %20 = arith.divf %18, %19 : vector<8x1xf32>
    %21 = vector.broadcast %13 : vector<8x1xf32> to vector<8x32xf32>
    %22 = arith.subf %1, %21 : vector<8x32xf32>
    %cst_17 = arith.constant 9.99999974E-6 : f32
    %23 = vector.broadcast %cst_17 : f32 to vector<8x1xf32>
    %24 = arith.addf %20, %23 : vector<8x1xf32>
    %25 = math.rsqrt %24 : vector<8x1xf32>
    %26 = vector.broadcast %25 : vector<8x1xf32> to vector<8x32xf32>
    %27 = arith.mulf %22, %26 : vector<8x32xf32>
    %28 = vector.broadcast %8 : vector<1x32xf32> to vector<8x32xf32>
    %29 = arith.mulf %27, %28 : vector<8x32xf32>
    %30 = vector.broadcast %9 : vector<1x32xf32> to vector<8x32xf32>
    %31 = arith.addf %29, %30 : vector<8x32xf32>
    %32 = tpu.concatenate %3, %31 in 0 : vector<8x32xf32>, vector<8x32xf32> -> vector<16x32xf32>
    %c0_18 = arith.constant 0 : index
    %c0_19 = arith.constant 0 : index
    %33 = vector.load %arg6[%c0_18, %c0_19] : memref<32x64xbf16, #tpu.memory_space<vmem>>, vector<32x64xbf16>
    %34 = arith.truncf %32 : vector<16x32xf32> to vector<16x32xbf16>
    %cst_20 = arith.constant dense<0.000000e+00> : vector<16x64xf32>
    %35 = tpu.matmul %34, %33, %cst_20 {dimension_numbers = #tpu.dot_dimension_numbers<[1], [0], [0], [1], [0, 0, 1, 1], [], []>} : vector<16x32xbf16>, vector<32x64xbf16>, vector<16x64xf32> -> vector<16x64xf32>
    %c0_21 = arith.constant 0 : index
    %c0_22 = arith.constant 0 : index
    %36 = vector.load %arg5[%c0_21, %c0_22] : memref<32x32xbf16, #tpu.memory_space<vmem>>, vector<32x32xbf16>
    %37 = arith.truncf %31 : vector<8x32xf32> to vector<8x32xbf16>
    %cst_23 = arith.constant dense<0.000000e+00> : vector<8x32xf32>
    %38 = tpu.matmul %37, %36, %cst_23 {dimension_numbers = #tpu.dot_dimension_numbers<[1], [0], [0], [1], [0, 0, 1, 1], [], []>} : vector<8x32xbf16>, vector<32x32xbf16>, vector<8x32xf32> -> vector<8x32xf32>
    %c0_24 = arith.constant 0 : index
    %c0_25 = arith.constant 0 : index
    %39 = vector.load %arg7[%c0_24, %c0_25] : memref<32x32xbf16, #tpu.memory_space<vmem>>, vector<32x32xbf16>
    %40 = arith.truncf %4 : vector<16x32xf32> to vector<16x32xbf16>
    %cst_26 = arith.constant dense<0.000000e+00> : vector<16x32xf32>
    %41 = tpu.matmul %40, %39, %cst_26 {dimension_numbers = #tpu.dot_dimension_numbers<[1], [0], [0], [1], [0, 0, 1, 1], [], []>} : vector<16x32xbf16>, vector<32x32xbf16>, vector<16x32xf32> -> vector<16x32xf32>
    %c0_27 = arith.constant 0 : index
    %c0_28 = arith.constant 0 : index
    %42 = vector.load %arg9[%c0_27, %c0_28] : memref<4x8xf32, #tpu.memory_space<vmem>>, vector<4x8xf32>
    %c0_29 = arith.constant 0 : index
    %c0_30 = arith.constant 0 : index
    %43 = vector.load %arg10[%c0_29, %c0_30] : memref<4x8xf32, #tpu.memory_space<vmem>>, vector<4x8xf32>
    %c0_31 = arith.constant 0 : index
    %c0_32 = arith.constant 0 : index
    %44 = vector.load %arg8[%c0_31, %c0_32] : memref<32x32xbf16, #tpu.memory_space<vmem>>, vector<32x32xbf16>
    %cst_33 = arith.constant 0.000000e+00 : f32
    %45 = vector.broadcast %cst_33 : f32 to vector<8x32xf32>
    %46 = vector.extract_strided_slice %38 {offsets = [0, 0], sizes = [8, 8], strides = [1, 1]} : vector<8x32xf32> to vector<8x8xf32>
    %47 = vector.extract_strided_slice %35 {offsets = [0, 0], sizes = [16, 8], strides = [1, 1]} : vector<16x64xf32> to vector<16x8xf32>
    %48 = vector.extract_strided_slice %35 {offsets = [0, 32], sizes = [16, 8], strides = [1, 1]} : vector<16x64xf32> to vector<16x8xf32>
    %49 = vector.extract_strided_slice %41 {offsets = [0, 0], sizes = [16, 8], strides = [1, 1]} : vector<16x32xf32> to vector<16x8xf32>
    %50 = vector.extract_strided_slice %42 {offsets = [0, 0], sizes = [1, 8], strides = [1, 1]} : vector<4x8xf32> to vector<1x8xf32>
    %51 = vector.extract_strided_slice %43 {offsets = [0, 0], sizes = [1, 8], strides = [1, 1]} : vector<4x8xf32> to vector<1x8xf32>
    %52 = vector.broadcast %50 : vector<1x8xf32> to vector<8x8xf32>
    %53 = arith.addf %46, %52 : vector<8x8xf32>
    %54 = arith.truncf %53 : vector<8x8xf32> to vector<8x8xbf16>
    %55 = arith.truncf %47 : vector<16x8xf32> to vector<16x8xbf16>
    %cst_34 = arith.constant dense<0.000000e+00> : vector<8x16xf32>
    %56 = tpu.matmul %54, %55, %cst_34 {dimension_numbers = #tpu.dot_dimension_numbers<[1], [1], [0], [0], [0, 0, 1, 0], [], []>} : vector<8x8xbf16>, vector<16x8xbf16>, vector<8x16xf32> -> vector<8x16xf32>
    %57 = vector.broadcast %51 : vector<1x8xf32> to vector<8x8xf32>
    %58 = arith.addf %46, %57 : vector<8x8xf32>
    %59 = arith.truncf %58 : vector<8x8xf32> to vector<8x8xbf16>
    %60 = arith.truncf %49 : vector<16x8xf32> to vector<16x8xbf16>
    %cst_35 = arith.constant dense<0.000000e+00> : vector<8x16xf32>
    %61 = tpu.matmul %59, %60, %cst_35 {dimension_numbers = #tpu.dot_dimension_numbers<[1], [1], [0], [0], [0, 0, 1, 0], [], []>} : vector<8x8xbf16>, vector<16x8xbf16>, vector<8x16xf32> -> vector<8x16xf32>
    %cst_36 = arith.constant 0.000000e+00 : f32
    %62 = vector.broadcast %cst_36 : f32 to vector<1x1xf32>
    %cst_37 = arith.constant 0.000000e+00 : f32
    %63 = vector.broadcast %cst_37 : f32 to vector<1x16xf32>
    %64 = vector.extract_strided_slice %61 {offsets = [1, 0], sizes = [1, 16], strides = [1, 1]} : vector<8x16xf32> to vector<1x16xf32>
    %65 = vector.extract_strided_slice %61 {offsets = [0, 0], sizes = [1, 16], strides = [1, 1]} : vector<8x16xf32> to vector<1x16xf32>
    %66 = tpu.concatenate %65, %62, %64 in 1 : vector<1x16xf32>, vector<1x1xf32>, vector<1x16xf32> -> vector<1x33xf32>
    %67 = vector.extract_strided_slice %66 {offsets = [0, 7], sizes = [1, 16], strides = [1, 1]} : vector<1x33xf32> to vector<1x16xf32>
    %68 = vector.extract_strided_slice %61 {offsets = [2, 0], sizes = [1, 16], strides = [1, 1]} : vector<8x16xf32> to vector<1x16xf32>
    %69 = vector.extract_strided_slice %61 {offsets = [1, 0], sizes = [1, 16], strides = [1, 1]} : vector<8x16xf32> to vector<1x16xf32>
    %70 = tpu.concatenate %69, %62, %68 in 1 : vector<1x16xf32>, vector<1x1xf32>, vector<1x16xf32> -> vector<1x33xf32>
    %71 = vector.extract_strided_slice %70 {offsets = [0, 6], sizes = [1, 16], strides = [1, 1]} : vector<1x33xf32> to vector<1x16xf32>
    %72 = vector.extract_strided_slice %61 {offsets = [3, 0], sizes = [1, 16], strides = [1, 1]} : vector<8x16xf32> to vector<1x16xf32>
    %73 = vector.extract_strided_slice %61 {offsets = [2, 0], sizes = [1, 16], strides = [1, 1]} : vector<8x16xf32> to vector<1x16xf32>
    %74 = tpu.concatenate %73, %62, %72 in 1 : vector<1x16xf32>, vector<1x1xf32>, vector<1x16xf32> -> vector<1x33xf32>
    %75 = vector.extract_strided_slice %74 {offsets = [0, 5], sizes = [1, 16], strides = [1, 1]} : vector<1x33xf32> to vector<1x16xf32>
    %76 = vector.extract_strided_slice %61 {offsets = [4, 0], sizes = [1, 16], strides = [1, 1]} : vector<8x16xf32> to vector<1x16xf32>
    %77 = vector.extract_strided_slice %61 {offsets = [3, 0], sizes = [1, 16], strides = [1, 1]} : vector<8x16xf32> to vector<1x16xf32>
    %78 = tpu.concatenate %77, %62, %76 in 1 : vector<1x16xf32>, vector<1x1xf32>, vector<1x16xf32> -> vector<1x33xf32>
    %79 = vector.extract_strided_slice %78 {offsets = [0, 4], sizes = [1, 16], strides = [1, 1]} : vector<1x33xf32> to vector<1x16xf32>
    %80 = vector.extract_strided_slice %61 {offsets = [5, 0], sizes = [1, 16], strides = [1, 1]} : vector<8x16xf32> to vector<1x16xf32>
    %81 = vector.extract_strided_slice %61 {offsets = [4, 0], sizes = [1, 16], strides = [1, 1]} : vector<8x16xf32> to vector<1x16xf32>
    %82 = tpu.concatenate %81, %62, %80 in 1 : vector<1x16xf32>, vector<1x1xf32>, vector<1x16xf32> -> vector<1x33xf32>
    %83 = vector.extract_strided_slice %82 {offsets = [0, 3], sizes = [1, 16], strides = [1, 1]} : vector<1x33xf32> to vector<1x16xf32>
    %84 = vector.extract_strided_slice %61 {offsets = [6, 0], sizes = [1, 16], strides = [1, 1]} : vector<8x16xf32> to vector<1x16xf32>
    %85 = vector.extract_strided_slice %61 {offsets = [5, 0], sizes = [1, 16], strides = [1, 1]} : vector<8x16xf32> to vector<1x16xf32>
    %86 = tpu.concatenate %85, %62, %84 in 1 : vector<1x16xf32>, vector<1x1xf32>, vector<1x16xf32> -> vector<1x33xf32>
    %87 = vector.extract_strided_slice %86 {offsets = [0, 2], sizes = [1, 16], strides = [1, 1]} : vector<1x33xf32> to vector<1x16xf32>
    %88 = vector.extract_strided_slice %61 {offsets = [7, 0], sizes = [1, 16], strides = [1, 1]} : vector<8x16xf32> to vector<1x16xf32>
    %89 = vector.extract_strided_slice %61 {offsets = [6, 0], sizes = [1, 16], strides = [1, 1]} : vector<8x16xf32> to vector<1x16xf32>
    %90 = tpu.concatenate %89, %62, %88 in 1 : vector<1x16xf32>, vector<1x1xf32>, vector<1x16xf32> -> vector<1x33xf32>
    %91 = vector.extract_strided_slice %90 {offsets = [0, 1], sizes = [1, 16], strides = [1, 1]} : vector<1x33xf32> to vector<1x16xf32>
    %92 = vector.extract_strided_slice %61 {offsets = [7, 0], sizes = [1, 16], strides = [1, 1]} : vector<8x16xf32> to vector<1x16xf32>
    %93 = tpu.concatenate %92, %62, %63 in 1 : vector<1x16xf32>, vector<1x1xf32>, vector<1x16xf32> -> vector<1x33xf32>
    %94 = vector.extract_strided_slice %93 {offsets = [0, 0], sizes = [1, 16], strides = [1, 1]} : vector<1x33xf32> to vector<1x16xf32>
    %95 = tpu.concatenate %67, %71, %75, %79, %83, %87, %91, %94 in 0 : vector<1x16xf32>, vector<1x16xf32>, vector<1x16xf32>, vector<1x16xf32>, vector<1x16xf32>, vector<1x16xf32>, vector<1x16xf32>, vector<1x16xf32> -> vector<8x16xf32>
    %96 = arith.addf %56, %95 : vector<8x16xf32>
    %cst_38 = arith.constant 0xFF800000 : f32
    %97 = vector.broadcast %cst_38 : f32 to vector<8x16xf32>
    %98 = arith.select %7, %97, %96 : vector<8x16xi1>, vector<8x16xf32>
    %cst_39 = arith.constant 0.353553385 : f32
    %99 = vector.broadcast %cst_39 : f32 to vector<8x16xf32>
    %100 = arith.mulf %98, %99 : vector<8x16xf32>
    %cst_40 = arith.constant dense<0xFF800000> : vector<8xf32>
    %101 = vector.multi_reduction <maximumf>, %100, %cst_40 [1] : vector<8x16xf32> to vector<8xf32>
    %102 = vector.shape_cast %101 : vector<8xf32> to vector<8x1xf32>
    %103 = vector.broadcast %102 : vector<8x1xf32> to vector<8x16xf32>
    %104 = arith.subf %100, %103 : vector<8x16xf32>
    %105 = math.exp %104 : vector<8x16xf32>
    %cst_41 = arith.constant dense<0.000000e+00> : vector<8xf32>
    %106 = vector.multi_reduction <add>, %105, %cst_41 [1] : vector<8x16xf32> to vector<8xf32>
    %107 = vector.shape_cast %106 : vector<8xf32> to vector<8x1xf32>
    %108 = tpu.reciprocal %107 {approx = true} : vector<8x1xf32> -> vector<8x1xf32>
    %109 = vector.broadcast %108 : vector<8x1xf32> to vector<8x16xf32>
    %110 = arith.mulf %105, %109 : vector<8x16xf32>
    %111 = arith.truncf %110 : vector<8x16xf32> to vector<8x16xbf16>
    %112 = arith.truncf %48 : vector<16x8xf32> to vector<16x8xbf16>
    %cst_42 = arith.constant dense<0.000000e+00> : vector<8x8xf32>
    %113 = tpu.matmul %111, %112, %cst_42 {dimension_numbers = #tpu.dot_dimension_numbers<[1], [0], [0], [1], [0, 0, 1, 1], [], []>} : vector<8x16xbf16>, vector<16x8xbf16>, vector<8x8xf32> -> vector<8x8xf32>
    %114 = arith.truncf %113 : vector<8x8xf32> to vector<8x8xbf16>
    %115 = vector.extract_strided_slice %44 {offsets = [0, 0], sizes = [8, 32], strides = [1, 1]} : vector<32x32xbf16> to vector<8x32xbf16>
    %cst_43 = arith.constant dense<0.000000e+00> : vector<8x32xf32>
    %116 = tpu.matmul %114, %115, %cst_43 {dimension_numbers = #tpu.dot_dimension_numbers<[1], [0], [0], [1], [0, 0, 1, 1], [], []>} : vector<8x8xbf16>, vector<8x32xbf16>, vector<8x32xf32> -> vector<8x32xf32>
    %117 = arith.addf %45, %116 : vector<8x32xf32>
    %118 = vector.extract_strided_slice %38 {offsets = [0, 8], sizes = [8, 8], strides = [1, 1]} : vector<8x32xf32> to vector<8x8xf32>
    %119 = vector.extract_strided_slice %35 {offsets = [0, 8], sizes = [16, 8], strides = [1, 1]} : vector<16x64xf32> to vector<16x8xf32>
    %120 = vector.extract_strided_slice %35 {offsets = [0, 40], sizes = [16, 8], strides = [1, 1]} : vector<16x64xf32> to vector<16x8xf32>
    %121 = vector.extract_strided_slice %41 {offsets = [0, 8], sizes = [16, 8], strides = [1, 1]} : vector<16x32xf32> to vector<16x8xf32>
    %122 = vector.extract_strided_slice %42 {offsets = [1, 0], sizes = [1, 8], strides = [1, 1]} : vector<4x8xf32> to vector<1x8xf32>
    %123 = vector.extract_strided_slice %43 {offsets = [1, 0], sizes = [1, 8], strides = [1, 1]} : vector<4x8xf32> to vector<1x8xf32>
    %124 = vector.broadcast %122 : vector<1x8xf32> to vector<8x8xf32>
    %125 = arith.addf %118, %124 : vector<8x8xf32>
    %126 = arith.truncf %125 : vector<8x8xf32> to vector<8x8xbf16>
    %127 = arith.truncf %119 : vector<16x8xf32> to vector<16x8xbf16>
    %cst_44 = arith.constant dense<0.000000e+00> : vector<8x16xf32>
    %128 = tpu.matmul %126, %127, %cst_44 {dimension_numbers = #tpu.dot_dimension_numbers<[1], [1], [0], [0], [0, 0, 1, 0], [], []>} : vector<8x8xbf16>, vector<16x8xbf16>, vector<8x16xf32> -> vector<8x16xf32>
    %129 = vector.broadcast %123 : vector<1x8xf32> to vector<8x8xf32>
    %130 = arith.addf %118, %129 : vector<8x8xf32>
    %131 = arith.truncf %130 : vector<8x8xf32> to vector<8x8xbf16>
    %132 = arith.truncf %121 : vector<16x8xf32> to vector<16x8xbf16>
    %cst_45 = arith.constant dense<0.000000e+00> : vector<8x16xf32>
    %133 = tpu.matmul %131, %132, %cst_45 {dimension_numbers = #tpu.dot_dimension_numbers<[1], [1], [0], [0], [0, 0, 1, 0], [], []>} : vector<8x8xbf16>, vector<16x8xbf16>, vector<8x16xf32> -> vector<8x16xf32>
    %cst_46 = arith.constant 0.000000e+00 : f32
    %134 = vector.broadcast %cst_46 : f32 to vector<1x1xf32>
    %cst_47 = arith.constant 0.000000e+00 : f32
    %135 = vector.broadcast %cst_47 : f32 to vector<1x16xf32>
    %136 = vector.extract_strided_slice %133 {offsets = [1, 0], sizes = [1, 16], strides = [1, 1]} : vector<8x16xf32> to vector<1x16xf32>
    %137 = vector.extract_strided_slice %133 {offsets = [0, 0], sizes = [1, 16], strides = [1, 1]} : vector<8x16xf32> to vector<1x16xf32>
    %138 = tpu.concatenate %137, %134, %136 in 1 : vector<1x16xf32>, vector<1x1xf32>, vector<1x16xf32> -> vector<1x33xf32>
    %139 = vector.extract_strided_slice %138 {offsets = [0, 7], sizes = [1, 16], strides = [1, 1]} : vector<1x33xf32> to vector<1x16xf32>
    %140 = vector.extract_strided_slice %133 {offsets = [2, 0], sizes = [1, 16], strides = [1, 1]} : vector<8x16xf32> to vector<1x16xf32>
    %141 = vector.extract_strided_slice %133 {offsets = [1, 0], sizes = [1, 16], strides = [1, 1]} : vector<8x16xf32> to vector<1x16xf32>
    %142 = tpu.concatenate %141, %134, %140 in 1 : vector<1x16xf32>, vector<1x1xf32>, vector<1x16xf32> -> vector<1x33xf32>
    %143 = vector.extract_strided_slice %142 {offsets = [0, 6], sizes = [1, 16], strides = [1, 1]} : vector<1x33xf32> to vector<1x16xf32>
    %144 = vector.extract_strided_slice %133 {offsets = [3, 0], sizes = [1, 16], strides = [1, 1]} : vector<8x16xf32> to vector<1x16xf32>
    %145 = vector.extract_strided_slice %133 {offsets = [2, 0], sizes = [1, 16], strides = [1, 1]} : vector<8x16xf32> to vector<1x16xf32>
    %146 = tpu.concatenate %145, %134, %144 in 1 : vector<1x16xf32>, vector<1x1xf32>, vector<1x16xf32> -> vector<1x33xf32>
    %147 = vector.extract_strided_slice %146 {offsets = [0, 5], sizes = [1, 16], strides = [1, 1]} : vector<1x33xf32> to vector<1x16xf32>
    %148 = vector.extract_strided_slice %133 {offsets = [4, 0], sizes = [1, 16], strides = [1, 1]} : vector<8x16xf32> to vector<1x16xf32>
    %149 = vector.extract_strided_slice %133 {offsets = [3, 0], sizes = [1, 16], strides = [1, 1]} : vector<8x16xf32> to vector<1x16xf32>
    %150 = tpu.concatenate %149, %134, %148 in 1 : vector<1x16xf32>, vector<1x1xf32>, vector<1x16xf32> -> vector<1x33xf32>
    %151 = vector.extract_strided_slice %150 {offsets = [0, 4], sizes = [1, 16], strides = [1, 1]} : vector<1x33xf32> to vector<1x16xf32>
    %152 = vector.extract_strided_slice %133 {offsets = [5, 0], sizes = [1, 16], strides = [1, 1]} : vector<8x16xf32> to vector<1x16xf32>
    %153 = vector.extract_strided_slice %133 {offsets = [4, 0], sizes = [1, 16], strides = [1, 1]} : vector<8x16xf32> to vector<1x16xf32>
    %154 = tpu.concatenate %153, %134, %152 in 1 : vector<1x16xf32>, vector<1x1xf32>, vector<1x16xf32> -> vector<1x33xf32>
    %155 = vector.extract_strided_slice %154 {offsets = [0, 3], sizes = [1, 16], strides = [1, 1]} : vector<1x33xf32> to vector<1x16xf32>
    %156 = vector.extract_strided_slice %133 {offsets = [6, 0], sizes = [1, 16], strides = [1, 1]} : vector<8x16xf32> to vector<1x16xf32>
    %157 = vector.extract_strided_slice %133 {offsets = [5, 0], sizes = [1, 16], strides = [1, 1]} : vector<8x16xf32> to vector<1x16xf32>
    %158 = tpu.concatenate %157, %134, %156 in 1 : vector<1x16xf32>, vector<1x1xf32>, vector<1x16xf32> -> vector<1x33xf32>
    %159 = vector.extract_strided_slice %158 {offsets = [0, 2], sizes = [1, 16], strides = [1, 1]} : vector<1x33xf32> to vector<1x16xf32>
    %160 = vector.extract_strided_slice %133 {offsets = [7, 0], sizes = [1, 16], strides = [1, 1]} : vector<8x16xf32> to vector<1x16xf32>
    %161 = vector.extract_strided_slice %133 {offsets = [6, 0], sizes = [1, 16], strides = [1, 1]} : vector<8x16xf32> to vector<1x16xf32>
    %162 = tpu.concatenate %161, %134, %160 in 1 : vector<1x16xf32>, vector<1x1xf32>, vector<1x16xf32> -> vector<1x33xf32>
    %163 = vector.extract_strided_slice %162 {offsets = [0, 1], sizes = [1, 16], strides = [1, 1]} : vector<1x33xf32> to vector<1x16xf32>
    %164 = vector.extract_strided_slice %133 {offsets = [7, 0], sizes = [1, 16], strides = [1, 1]} : vector<8x16xf32> to vector<1x16xf32>
    %165 = tpu.concatenate %164, %134, %135 in 1 : vector<1x16xf32>, vector<1x1xf32>, vector<1x16xf32> -> vector<1x33xf32>
    %166 = vector.extract_strided_slice %165 {offsets = [0, 0], sizes = [1, 16], strides = [1, 1]} : vector<1x33xf32> to vector<1x16xf32>
    %167 = tpu.concatenate %139, %143, %147, %151, %155, %159, %163, %166 in 0 : vector<1x16xf32>, vector<1x16xf32>, vector<1x16xf32>, vector<1x16xf32>, vector<1x16xf32>, vector<1x16xf32>, vector<1x16xf32>, vector<1x16xf32> -> vector<8x16xf32>
    %168 = arith.addf %128, %167 : vector<8x16xf32>
    %cst_48 = arith.constant 0xFF800000 : f32
    %169 = vector.broadcast %cst_48 : f32 to vector<8x16xf32>
    %170 = arith.select %7, %169, %168 : vector<8x16xi1>, vector<8x16xf32>
    %cst_49 = arith.constant 0.353553385 : f32
    %171 = vector.broadcast %cst_49 : f32 to vector<8x16xf32>
    %172 = arith.mulf %170, %171 : vector<8x16xf32>
    %cst_50 = arith.constant dense<0xFF800000> : vector<8xf32>
    %173 = vector.multi_reduction <maximumf>, %172, %cst_50 [1] : vector<8x16xf32> to vector<8xf32>
    %174 = vector.shape_cast %173 : vector<8xf32> to vector<8x1xf32>
    %175 = vector.broadcast %174 : vector<8x1xf32> to vector<8x16xf32>
    %176 = arith.subf %172, %175 : vector<8x16xf32>
    %177 = math.exp %176 : vector<8x16xf32>
    %cst_51 = arith.constant dense<0.000000e+00> : vector<8xf32>
    %178 = vector.multi_reduction <add>, %177, %cst_51 [1] : vector<8x16xf32> to vector<8xf32>
    %179 = vector.shape_cast %178 : vector<8xf32> to vector<8x1xf32>
    %180 = tpu.reciprocal %179 {approx = true} : vector<8x1xf32> -> vector<8x1xf32>
    %181 = vector.broadcast %180 : vector<8x1xf32> to vector<8x16xf32>
    %182 = arith.mulf %177, %181 : vector<8x16xf32>
    %183 = arith.truncf %182 : vector<8x16xf32> to vector<8x16xbf16>
    %184 = arith.truncf %120 : vector<16x8xf32> to vector<16x8xbf16>
    %cst_52 = arith.constant dense<0.000000e+00> : vector<8x8xf32>
    %185 = tpu.matmul %183, %184, %cst_52 {dimension_numbers = #tpu.dot_dimension_numbers<[1], [0], [0], [1], [0, 0, 1, 1], [], []>} : vector<8x16xbf16>, vector<16x8xbf16>, vector<8x8xf32> -> vector<8x8xf32>
    %186 = arith.truncf %185 : vector<8x8xf32> to vector<8x8xbf16>
    %187 = vector.extract_strided_slice %44 {offsets = [8, 0], sizes = [8, 32], strides = [1, 1]} : vector<32x32xbf16> to vector<8x32xbf16>
    %cst_53 = arith.constant dense<0.000000e+00> : vector<8x32xf32>
    %188 = tpu.matmul %186, %187, %cst_53 {dimension_numbers = #tpu.dot_dimension_numbers<[1], [0], [0], [1], [0, 0, 1, 1], [], []>} : vector<8x8xbf16>, vector<8x32xbf16>, vector<8x32xf32> -> vector<8x32xf32>
    %189 = arith.addf %117, %188 : vector<8x32xf32>
    %190 = vector.extract_strided_slice %38 {offsets = [0, 16], sizes = [8, 8], strides = [1, 1]} : vector<8x32xf32> to vector<8x8xf32>
    %191 = vector.extract_strided_slice %35 {offsets = [0, 16], sizes = [16, 8], strides = [1, 1]} : vector<16x64xf32> to vector<16x8xf32>
    %192 = vector.extract_strided_slice %35 {offsets = [0, 48], sizes = [16, 8], strides = [1, 1]} : vector<16x64xf32> to vector<16x8xf32>
    %193 = vector.extract_strided_slice %41 {offsets = [0, 16], sizes = [16, 8], strides = [1, 1]} : vector<16x32xf32> to vector<16x8xf32>
    %194 = vector.extract_strided_slice %42 {offsets = [2, 0], sizes = [1, 8], strides = [1, 1]} : vector<4x8xf32> to vector<1x8xf32>
    %195 = vector.extract_strided_slice %43 {offsets = [2, 0], sizes = [1, 8], strides = [1, 1]} : vector<4x8xf32> to vector<1x8xf32>
    %196 = vector.broadcast %194 : vector<1x8xf32> to vector<8x8xf32>
    %197 = arith.addf %190, %196 : vector<8x8xf32>
    %198 = arith.truncf %197 : vector<8x8xf32> to vector<8x8xbf16>
    %199 = arith.truncf %191 : vector<16x8xf32> to vector<16x8xbf16>
    %cst_54 = arith.constant dense<0.000000e+00> : vector<8x16xf32>
    %200 = tpu.matmul %198, %199, %cst_54 {dimension_numbers = #tpu.dot_dimension_numbers<[1], [1], [0], [0], [0, 0, 1, 0], [], []>} : vector<8x8xbf16>, vector<16x8xbf16>, vector<8x16xf32> -> vector<8x16xf32>
    %201 = vector.broadcast %195 : vector<1x8xf32> to vector<8x8xf32>
    %202 = arith.addf %190, %201 : vector<8x8xf32>
    %203 = arith.truncf %202 : vector<8x8xf32> to vector<8x8xbf16>
    %204 = arith.truncf %193 : vector<16x8xf32> to vector<16x8xbf16>
    %cst_55 = arith.constant dense<0.000000e+00> : vector<8x16xf32>
    %205 = tpu.matmul %203, %204, %cst_55 {dimension_numbers = #tpu.dot_dimension_numbers<[1], [1], [0], [0], [0, 0, 1, 0], [], []>} : vector<8x8xbf16>, vector<16x8xbf16>, vector<8x16xf32> -> vector<8x16xf32>
    %cst_56 = arith.constant 0.000000e+00 : f32
    %206 = vector.broadcast %cst_56 : f32 to vector<1x1xf32>
    %cst_57 = arith.constant 0.000000e+00 : f32
    %207 = vector.broadcast %cst_57 : f32 to vector<1x16xf32>
    %208 = vector.extract_strided_slice %205 {offsets = [1, 0], sizes = [1, 16], strides = [1, 1]} : vector<8x16xf32> to vector<1x16xf32>
    %209 = vector.extract_strided_slice %205 {offsets = [0, 0], sizes = [1, 16], strides = [1, 1]} : vector<8x16xf32> to vector<1x16xf32>
    %210 = tpu.concatenate %209, %206, %208 in 1 : vector<1x16xf32>, vector<1x1xf32>, vector<1x16xf32> -> vector<1x33xf32>
    %211 = vector.extract_strided_slice %210 {offsets = [0, 7], sizes = [1, 16], strides = [1, 1]} : vector<1x33xf32> to vector<1x16xf32>
    %212 = vector.extract_strided_slice %205 {offsets = [2, 0], sizes = [1, 16], strides = [1, 1]} : vector<8x16xf32> to vector<1x16xf32>
    %213 = vector.extract_strided_slice %205 {offsets = [1, 0], sizes = [1, 16], strides = [1, 1]} : vector<8x16xf32> to vector<1x16xf32>
    %214 = tpu.concatenate %213, %206, %212 in 1 : vector<1x16xf32>, vector<1x1xf32>, vector<1x16xf32> -> vector<1x33xf32>
    %215 = vector.extract_strided_slice %214 {offsets = [0, 6], sizes = [1, 16], strides = [1, 1]} : vector<1x33xf32> to vector<1x16xf32>
    %216 = vector.extract_strided_slice %205 {offsets = [3, 0], sizes = [1, 16], strides = [1, 1]} : vector<8x16xf32> to vector<1x16xf32>
    %217 = vector.extract_strided_slice %205 {offsets = [2, 0], sizes = [1, 16], strides = [1, 1]} : vector<8x16xf32> to vector<1x16xf32>
    %218 = tpu.concatenate %217, %206, %216 in 1 : vector<1x16xf32>, vector<1x1xf32>, vector<1x16xf32> -> vector<1x33xf32>
    %219 = vector.extract_strided_slice %218 {offsets = [0, 5], sizes = [1, 16], strides = [1, 1]} : vector<1x33xf32> to vector<1x16xf32>
    %220 = vector.extract_strided_slice %205 {offsets = [4, 0], sizes = [1, 16], strides = [1, 1]} : vector<8x16xf32> to vector<1x16xf32>
    %221 = vector.extract_strided_slice %205 {offsets = [3, 0], sizes = [1, 16], strides = [1, 1]} : vector<8x16xf32> to vector<1x16xf32>
    %222 = tpu.concatenate %221, %206, %220 in 1 : vector<1x16xf32>, vector<1x1xf32>, vector<1x16xf32> -> vector<1x33xf32>
    %223 = vector.extract_strided_slice %222 {offsets = [0, 4], sizes = [1, 16], strides = [1, 1]} : vector<1x33xf32> to vector<1x16xf32>
    %224 = vector.extract_strided_slice %205 {offsets = [5, 0], sizes = [1, 16], strides = [1, 1]} : vector<8x16xf32> to vector<1x16xf32>
    %225 = vector.extract_strided_slice %205 {offsets = [4, 0], sizes = [1, 16], strides = [1, 1]} : vector<8x16xf32> to vector<1x16xf32>
    %226 = tpu.concatenate %225, %206, %224 in 1 : vector<1x16xf32>, vector<1x1xf32>, vector<1x16xf32> -> vector<1x33xf32>
    %227 = vector.extract_strided_slice %226 {offsets = [0, 3], sizes = [1, 16], strides = [1, 1]} : vector<1x33xf32> to vector<1x16xf32>
    %228 = vector.extract_strided_slice %205 {offsets = [6, 0], sizes = [1, 16], strides = [1, 1]} : vector<8x16xf32> to vector<1x16xf32>
    %229 = vector.extract_strided_slice %205 {offsets = [5, 0], sizes = [1, 16], strides = [1, 1]} : vector<8x16xf32> to vector<1x16xf32>
    %230 = tpu.concatenate %229, %206, %228 in 1 : vector<1x16xf32>, vector<1x1xf32>, vector<1x16xf32> -> vector<1x33xf32>
    %231 = vector.extract_strided_slice %230 {offsets = [0, 2], sizes = [1, 16], strides = [1, 1]} : vector<1x33xf32> to vector<1x16xf32>
    %232 = vector.extract_strided_slice %205 {offsets = [7, 0], sizes = [1, 16], strides = [1, 1]} : vector<8x16xf32> to vector<1x16xf32>
    %233 = vector.extract_strided_slice %205 {offsets = [6, 0], sizes = [1, 16], strides = [1, 1]} : vector<8x16xf32> to vector<1x16xf32>
    %234 = tpu.concatenate %233, %206, %232 in 1 : vector<1x16xf32>, vector<1x1xf32>, vector<1x16xf32> -> vector<1x33xf32>
    %235 = vector.extract_strided_slice %234 {offsets = [0, 1], sizes = [1, 16], strides = [1, 1]} : vector<1x33xf32> to vector<1x16xf32>
    %236 = vector.extract_strided_slice %205 {offsets = [7, 0], sizes = [1, 16], strides = [1, 1]} : vector<8x16xf32> to vector<1x16xf32>
    %237 = tpu.concatenate %236, %206, %207 in 1 : vector<1x16xf32>, vector<1x1xf32>, vector<1x16xf32> -> vector<1x33xf32>
    %238 = vector.extract_strided_slice %237 {offsets = [0, 0], sizes = [1, 16], strides = [1, 1]} : vector<1x33xf32> to vector<1x16xf32>
    %239 = tpu.concatenate %211, %215, %219, %223, %227, %231, %235, %238 in 0 : vector<1x16xf32>, vector<1x16xf32>, vector<1x16xf32>, vector<1x16xf32>, vector<1x16xf32>, vector<1x16xf32>, vector<1x16xf32>, vector<1x16xf32> -> vector<8x16xf32>
    %240 = arith.addf %200, %239 : vector<8x16xf32>
    %cst_58 = arith.constant 0xFF800000 : f32
    %241 = vector.broadcast %cst_58 : f32 to vector<8x16xf32>
    %242 = arith.select %7, %241, %240 : vector<8x16xi1>, vector<8x16xf32>
    %cst_59 = arith.constant 0.353553385 : f32
    %243 = vector.broadcast %cst_59 : f32 to vector<8x16xf32>
    %244 = arith.mulf %242, %243 : vector<8x16xf32>
    %cst_60 = arith.constant dense<0xFF800000> : vector<8xf32>
    %245 = vector.multi_reduction <maximumf>, %244, %cst_60 [1] : vector<8x16xf32> to vector<8xf32>
    %246 = vector.shape_cast %245 : vector<8xf32> to vector<8x1xf32>
    %247 = vector.broadcast %246 : vector<8x1xf32> to vector<8x16xf32>
    %248 = arith.subf %244, %247 : vector<8x16xf32>
    %249 = math.exp %248 : vector<8x16xf32>
    %cst_61 = arith.constant dense<0.000000e+00> : vector<8xf32>
    %250 = vector.multi_reduction <add>, %249, %cst_61 [1] : vector<8x16xf32> to vector<8xf32>
    %251 = vector.shape_cast %250 : vector<8xf32> to vector<8x1xf32>
    %252 = tpu.reciprocal %251 {approx = true} : vector<8x1xf32> -> vector<8x1xf32>
    %253 = vector.broadcast %252 : vector<8x1xf32> to vector<8x16xf32>
    %254 = arith.mulf %249, %253 : vector<8x16xf32>
    %255 = arith.truncf %254 : vector<8x16xf32> to vector<8x16xbf16>
    %256 = arith.truncf %192 : vector<16x8xf32> to vector<16x8xbf16>
    %cst_62 = arith.constant dense<0.000000e+00> : vector<8x8xf32>
    %257 = tpu.matmul %255, %256, %cst_62 {dimension_numbers = #tpu.dot_dimension_numbers<[1], [0], [0], [1], [0, 0, 1, 1], [], []>} : vector<8x16xbf16>, vector<16x8xbf16>, vector<8x8xf32> -> vector<8x8xf32>
    %258 = arith.truncf %257 : vector<8x8xf32> to vector<8x8xbf16>
    %259 = vector.extract_strided_slice %44 {offsets = [16, 0], sizes = [8, 32], strides = [1, 1]} : vector<32x32xbf16> to vector<8x32xbf16>
    %cst_63 = arith.constant dense<0.000000e+00> : vector<8x32xf32>
    %260 = tpu.matmul %258, %259, %cst_63 {dimension_numbers = #tpu.dot_dimension_numbers<[1], [0], [0], [1], [0, 0, 1, 1], [], []>} : vector<8x8xbf16>, vector<8x32xbf16>, vector<8x32xf32> -> vector<8x32xf32>
    %261 = arith.addf %189, %260 : vector<8x32xf32>
    %262 = vector.extract_strided_slice %38 {offsets = [0, 24], sizes = [8, 8], strides = [1, 1]} : vector<8x32xf32> to vector<8x8xf32>
    %263 = vector.extract_strided_slice %35 {offsets = [0, 24], sizes = [16, 8], strides = [1, 1]} : vector<16x64xf32> to vector<16x8xf32>
    %264 = vector.extract_strided_slice %35 {offsets = [0, 56], sizes = [16, 8], strides = [1, 1]} : vector<16x64xf32> to vector<16x8xf32>
    %265 = vector.extract_strided_slice %41 {offsets = [0, 24], sizes = [16, 8], strides = [1, 1]} : vector<16x32xf32> to vector<16x8xf32>
    %266 = vector.extract_strided_slice %42 {offsets = [3, 0], sizes = [1, 8], strides = [1, 1]} : vector<4x8xf32> to vector<1x8xf32>
    %267 = vector.extract_strided_slice %43 {offsets = [3, 0], sizes = [1, 8], strides = [1, 1]} : vector<4x8xf32> to vector<1x8xf32>
    %268 = vector.broadcast %266 : vector<1x8xf32> to vector<8x8xf32>
    %269 = arith.addf %262, %268 : vector<8x8xf32>
    %270 = arith.truncf %269 : vector<8x8xf32> to vector<8x8xbf16>
    %271 = arith.truncf %263 : vector<16x8xf32> to vector<16x8xbf16>
    %cst_64 = arith.constant dense<0.000000e+00> : vector<8x16xf32>
    %272 = tpu.matmul %270, %271, %cst_64 {dimension_numbers = #tpu.dot_dimension_numbers<[1], [1], [0], [0], [0, 0, 1, 0], [], []>} : vector<8x8xbf16>, vector<16x8xbf16>, vector<8x16xf32> -> vector<8x16xf32>
    %273 = vector.broadcast %267 : vector<1x8xf32> to vector<8x8xf32>
    %274 = arith.addf %262, %273 : vector<8x8xf32>
    %275 = arith.truncf %274 : vector<8x8xf32> to vector<8x8xbf16>
    %276 = arith.truncf %265 : vector<16x8xf32> to vector<16x8xbf16>
    %cst_65 = arith.constant dense<0.000000e+00> : vector<8x16xf32>
    %277 = tpu.matmul %275, %276, %cst_65 {dimension_numbers = #tpu.dot_dimension_numbers<[1], [1], [0], [0], [0, 0, 1, 0], [], []>} : vector<8x8xbf16>, vector<16x8xbf16>, vector<8x16xf32> -> vector<8x16xf32>
    %cst_66 = arith.constant 0.000000e+00 : f32
    %278 = vector.broadcast %cst_66 : f32 to vector<1x1xf32>
    %cst_67 = arith.constant 0.000000e+00 : f32
    %279 = vector.broadcast %cst_67 : f32 to vector<1x16xf32>
    %280 = vector.extract_strided_slice %277 {offsets = [1, 0], sizes = [1, 16], strides = [1, 1]} : vector<8x16xf32> to vector<1x16xf32>
    %281 = vector.extract_strided_slice %277 {offsets = [0, 0], sizes = [1, 16], strides = [1, 1]} : vector<8x16xf32> to vector<1x16xf32>
    %282 = tpu.concatenate %281, %278, %280 in 1 : vector<1x16xf32>, vector<1x1xf32>, vector<1x16xf32> -> vector<1x33xf32>
    %283 = vector.extract_strided_slice %282 {offsets = [0, 7], sizes = [1, 16], strides = [1, 1]} : vector<1x33xf32> to vector<1x16xf32>
    %284 = vector.extract_strided_slice %277 {offsets = [2, 0], sizes = [1, 16], strides = [1, 1]} : vector<8x16xf32> to vector<1x16xf32>
    %285 = vector.extract_strided_slice %277 {offsets = [1, 0], sizes = [1, 16], strides = [1, 1]} : vector<8x16xf32> to vector<1x16xf32>
    %286 = tpu.concatenate %285, %278, %284 in 1 : vector<1x16xf32>, vector<1x1xf32>, vector<1x16xf32> -> vector<1x33xf32>
    %287 = vector.extract_strided_slice %286 {offsets = [0, 6], sizes = [1, 16], strides = [1, 1]} : vector<1x33xf32> to vector<1x16xf32>
    %288 = vector.extract_strided_slice %277 {offsets = [3, 0], sizes = [1, 16], strides = [1, 1]} : vector<8x16xf32> to vector<1x16xf32>
    %289 = vector.extract_strided_slice %277 {offsets = [2, 0], sizes = [1, 16], strides = [1, 1]} : vector<8x16xf32> to vector<1x16xf32>
    %290 = tpu.concatenate %289, %278, %288 in 1 : vector<1x16xf32>, vector<1x1xf32>, vector<1x16xf32> -> vector<1x33xf32>
    %291 = vector.extract_strided_slice %290 {offsets = [0, 5], sizes = [1, 16], strides = [1, 1]} : vector<1x33xf32> to vector<1x16xf32>
    %292 = vector.extract_strided_slice %277 {offsets = [4, 0], sizes = [1, 16], strides = [1, 1]} : vector<8x16xf32> to vector<1x16xf32>
    %293 = vector.extract_strided_slice %277 {offsets = [3, 0], sizes = [1, 16], strides = [1, 1]} : vector<8x16xf32> to vector<1x16xf32>
    %294 = tpu.concatenate %293, %278, %292 in 1 : vector<1x16xf32>, vector<1x1xf32>, vector<1x16xf32> -> vector<1x33xf32>
    %295 = vector.extract_strided_slice %294 {offsets = [0, 4], sizes = [1, 16], strides = [1, 1]} : vector<1x33xf32> to vector<1x16xf32>
    %296 = vector.extract_strided_slice %277 {offsets = [5, 0], sizes = [1, 16], strides = [1, 1]} : vector<8x16xf32> to vector<1x16xf32>
    %297 = vector.extract_strided_slice %277 {offsets = [4, 0], sizes = [1, 16], strides = [1, 1]} : vector<8x16xf32> to vector<1x16xf32>
    %298 = tpu.concatenate %297, %278, %296 in 1 : vector<1x16xf32>, vector<1x1xf32>, vector<1x16xf32> -> vector<1x33xf32>
    %299 = vector.extract_strided_slice %298 {offsets = [0, 3], sizes = [1, 16], strides = [1, 1]} : vector<1x33xf32> to vector<1x16xf32>
    %300 = vector.extract_strided_slice %277 {offsets = [6, 0], sizes = [1, 16], strides = [1, 1]} : vector<8x16xf32> to vector<1x16xf32>
    %301 = vector.extract_strided_slice %277 {offsets = [5, 0], sizes = [1, 16], strides = [1, 1]} : vector<8x16xf32> to vector<1x16xf32>
    %302 = tpu.concatenate %301, %278, %300 in 1 : vector<1x16xf32>, vector<1x1xf32>, vector<1x16xf32> -> vector<1x33xf32>
    %303 = vector.extract_strided_slice %302 {offsets = [0, 2], sizes = [1, 16], strides = [1, 1]} : vector<1x33xf32> to vector<1x16xf32>
    %304 = vector.extract_strided_slice %277 {offsets = [7, 0], sizes = [1, 16], strides = [1, 1]} : vector<8x16xf32> to vector<1x16xf32>
    %305 = vector.extract_strided_slice %277 {offsets = [6, 0], sizes = [1, 16], strides = [1, 1]} : vector<8x16xf32> to vector<1x16xf32>
    %306 = tpu.concatenate %305, %278, %304 in 1 : vector<1x16xf32>, vector<1x1xf32>, vector<1x16xf32> -> vector<1x33xf32>
    %307 = vector.extract_strided_slice %306 {offsets = [0, 1], sizes = [1, 16], strides = [1, 1]} : vector<1x33xf32> to vector<1x16xf32>
    %308 = vector.extract_strided_slice %277 {offsets = [7, 0], sizes = [1, 16], strides = [1, 1]} : vector<8x16xf32> to vector<1x16xf32>
    %309 = tpu.concatenate %308, %278, %279 in 1 : vector<1x16xf32>, vector<1x1xf32>, vector<1x16xf32> -> vector<1x33xf32>
    %310 = vector.extract_strided_slice %309 {offsets = [0, 0], sizes = [1, 16], strides = [1, 1]} : vector<1x33xf32> to vector<1x16xf32>
    %311 = tpu.concatenate %283, %287, %291, %295, %299, %303, %307, %310 in 0 : vector<1x16xf32>, vector<1x16xf32>, vector<1x16xf32>, vector<1x16xf32>, vector<1x16xf32>, vector<1x16xf32>, vector<1x16xf32>, vector<1x16xf32> -> vector<8x16xf32>
    %312 = arith.addf %272, %311 : vector<8x16xf32>
    %cst_68 = arith.constant 0xFF800000 : f32
    %313 = vector.broadcast %cst_68 : f32 to vector<8x16xf32>
    %314 = arith.select %7, %313, %312 : vector<8x16xi1>, vector<8x16xf32>
    %cst_69 = arith.constant 0.353553385 : f32
    %315 = vector.broadcast %cst_69 : f32 to vector<8x16xf32>
    %316 = arith.mulf %314, %315 : vector<8x16xf32>
    %cst_70 = arith.constant dense<0xFF800000> : vector<8xf32>
    %317 = vector.multi_reduction <maximumf>, %316, %cst_70 [1] : vector<8x16xf32> to vector<8xf32>
    %318 = vector.shape_cast %317 : vector<8xf32> to vector<8x1xf32>
    %319 = vector.broadcast %318 : vector<8x1xf32> to vector<8x16xf32>
    %320 = arith.subf %316, %319 : vector<8x16xf32>
    %321 = math.exp %320 : vector<8x16xf32>
    %cst_71 = arith.constant dense<0.000000e+00> : vector<8xf32>
    %322 = vector.multi_reduction <add>, %321, %cst_71 [1] : vector<8x16xf32> to vector<8xf32>
    %323 = vector.shape_cast %322 : vector<8xf32> to vector<8x1xf32>
    %324 = tpu.reciprocal %323 {approx = true} : vector<8x1xf32> -> vector<8x1xf32>
    %325 = vector.broadcast %324 : vector<8x1xf32> to vector<8x16xf32>
    %326 = arith.mulf %321, %325 : vector<8x16xf32>
    %327 = arith.truncf %326 : vector<8x16xf32> to vector<8x16xbf16>
    %328 = arith.truncf %264 : vector<16x8xf32> to vector<16x8xbf16>
    %cst_72 = arith.constant dense<0.000000e+00> : vector<8x8xf32>
    %329 = tpu.matmul %327, %328, %cst_72 {dimension_numbers = #tpu.dot_dimension_numbers<[1], [0], [0], [1], [0, 0, 1, 1], [], []>} : vector<8x16xbf16>, vector<16x8xbf16>, vector<8x8xf32> -> vector<8x8xf32>
    %330 = arith.truncf %329 : vector<8x8xf32> to vector<8x8xbf16>
    %331 = vector.extract_strided_slice %44 {offsets = [24, 0], sizes = [8, 32], strides = [1, 1]} : vector<32x32xbf16> to vector<8x32xbf16>
    %cst_73 = arith.constant dense<0.000000e+00> : vector<8x32xf32>
    %332 = tpu.matmul %330, %331, %cst_73 {dimension_numbers = #tpu.dot_dimension_numbers<[1], [0], [0], [1], [0, 0, 1, 1], [], []>} : vector<8x8xbf16>, vector<8x32xbf16>, vector<8x32xf32> -> vector<8x32xf32>
    %333 = arith.addf %261, %332 : vector<8x32xf32>
    %c0_74 = arith.constant 0 : index
    %c0_75 = arith.constant 0 : index
    %c0_76 = arith.constant 0 : index
    %334 = vector.load %arg19[%c0_74, %c0_75, %c0_76] : memref<6x32x32xbf16, #tpu.memory_space<vmem>>, vector<6x32x32xbf16>
    %c0_77 = arith.constant 0 : index
    %c0_78 = arith.constant 0 : index
    %335 = vector.load %arg20[%c0_77, %c0_78] : memref<3x32xf32, #tpu.memory_space<vmem>>, vector<3x32xf32>
    %336 = arith.truncf %1 : vector<8x32xf32> to vector<8x32xbf16>
    %337 = arith.truncf %333 : vector<8x32xf32> to vector<8x32xbf16>
    %338 = vector.extract_strided_slice %334 {offsets = [0, 0, 0], sizes = [1, 32, 32], strides = [1, 1, 1]} : vector<6x32x32xbf16> to vector<1x32x32xbf16>
    %339 = vector.shape_cast %338 : vector<1x32x32xbf16> to vector<32x32xbf16>
    %cst_79 = arith.constant dense<0.000000e+00> : vector<8x32xf32>
    %340 = tpu.matmul %337, %339, %cst_79 {dimension_numbers = #tpu.dot_dimension_numbers<[1], [0], [0], [1], [0, 0, 1, 1], [], []>} : vector<8x32xbf16>, vector<32x32xbf16>, vector<8x32xf32> -> vector<8x32xf32>
    %341 = vector.extract_strided_slice %334 {offsets = [1, 0, 0], sizes = [1, 32, 32], strides = [1, 1, 1]} : vector<6x32x32xbf16> to vector<1x32x32xbf16>
    %342 = vector.shape_cast %341 : vector<1x32x32xbf16> to vector<32x32xbf16>
    %cst_80 = arith.constant dense<0.000000e+00> : vector<8x32xf32>
    %343 = tpu.matmul %336, %342, %cst_80 {dimension_numbers = #tpu.dot_dimension_numbers<[1], [0], [0], [1], [0, 0, 1, 1], [], []>} : vector<8x32xbf16>, vector<32x32xbf16>, vector<8x32xf32> -> vector<8x32xf32>
    %344 = arith.addf %340, %343 : vector<8x32xf32>
    %345 = vector.extract_strided_slice %335 {offsets = [0, 0], sizes = [1, 32], strides = [1, 1]} : vector<3x32xf32> to vector<1x32xf32>
    %346 = vector.broadcast %345 : vector<1x32xf32> to vector<8x32xf32>
    %347 = arith.addf %344, %346 : vector<8x32xf32>
    %348 = arith.negf %347 : vector<8x32xf32>
    %349 = math.exp %348 : vector<8x32xf32>
    %cst_81 = arith.constant 1.000000e+00 : f32
    %350 = vector.broadcast %cst_81 : f32 to vector<8x32xf32>
    %351 = arith.addf %350, %349 : vector<8x32xf32>
    %352 = arith.divf %350, %351 : vector<8x32xf32>
    %353 = vector.extract_strided_slice %334 {offsets = [2, 0, 0], sizes = [1, 32, 32], strides = [1, 1, 1]} : vector<6x32x32xbf16> to vector<1x32x32xbf16>
    %354 = vector.shape_cast %353 : vector<1x32x32xbf16> to vector<32x32xbf16>
    %cst_82 = arith.constant dense<0.000000e+00> : vector<8x32xf32>
    %355 = tpu.matmul %337, %354, %cst_82 {dimension_numbers = #tpu.dot_dimension_numbers<[1], [0], [0], [1], [0, 0, 1, 1], [], []>} : vector<8x32xbf16>, vector<32x32xbf16>, vector<8x32xf32> -> vector<8x32xf32>
    %356 = vector.extract_strided_slice %334 {offsets = [3, 0, 0], sizes = [1, 32, 32], strides = [1, 1, 1]} : vector<6x32x32xbf16> to vector<1x32x32xbf16>
    %357 = vector.shape_cast %356 : vector<1x32x32xbf16> to vector<32x32xbf16>
    %cst_83 = arith.constant dense<0.000000e+00> : vector<8x32xf32>
    %358 = tpu.matmul %336, %357, %cst_83 {dimension_numbers = #tpu.dot_dimension_numbers<[1], [0], [0], [1], [0, 0, 1, 1], [], []>} : vector<8x32xbf16>, vector<32x32xbf16>, vector<8x32xf32> -> vector<8x32xf32>
    %359 = arith.addf %355, %358 : vector<8x32xf32>
    %360 = vector.extract_strided_slice %335 {offsets = [1, 0], sizes = [1, 32], strides = [1, 1]} : vector<3x32xf32> to vector<1x32xf32>
    %361 = vector.broadcast %360 : vector<1x32xf32> to vector<8x32xf32>
    %362 = arith.addf %359, %361 : vector<8x32xf32>
    %cst_84 = arith.constant 1.000000e-01 : f32
    %363 = vector.broadcast %cst_84 : f32 to vector<8x32xf32>
    %364 = arith.subf %362, %363 : vector<8x32xf32>
    %365 = arith.negf %364 : vector<8x32xf32>
    %366 = math.exp %365 : vector<8x32xf32>
    %cst_85 = arith.constant 1.000000e+00 : f32
    %367 = vector.broadcast %cst_85 : f32 to vector<8x32xf32>
    %368 = arith.addf %367, %366 : vector<8x32xf32>
    %369 = arith.divf %367, %368 : vector<8x32xf32>
    %370 = vector.extract_strided_slice %334 {offsets = [4, 0, 0], sizes = [1, 32, 32], strides = [1, 1, 1]} : vector<6x32x32xbf16> to vector<1x32x32xbf16>
    %371 = vector.shape_cast %370 : vector<1x32x32xbf16> to vector<32x32xbf16>
    %cst_86 = arith.constant dense<0.000000e+00> : vector<8x32xf32>
    %372 = tpu.matmul %337, %371, %cst_86 {dimension_numbers = #tpu.dot_dimension_numbers<[1], [0], [0], [1], [0, 0, 1, 1], [], []>} : vector<8x32xbf16>, vector<32x32xbf16>, vector<8x32xf32> -> vector<8x32xf32>
    %373 = arith.mulf %352, %1 : vector<8x32xf32>
    %374 = arith.truncf %373 : vector<8x32xf32> to vector<8x32xbf16>
    %375 = vector.extract_strided_slice %334 {offsets = [5, 0, 0], sizes = [1, 32, 32], strides = [1, 1, 1]} : vector<6x32x32xbf16> to vector<1x32x32xbf16>
    %376 = vector.shape_cast %375 : vector<1x32x32xbf16> to vector<32x32xbf16>
    %cst_87 = arith.constant dense<0.000000e+00> : vector<8x32xf32>
    %377 = tpu.matmul %374, %376, %cst_87 {dimension_numbers = #tpu.dot_dimension_numbers<[1], [0], [0], [1], [0, 0, 1, 1], [], []>} : vector<8x32xbf16>, vector<32x32xbf16>, vector<8x32xf32> -> vector<8x32xf32>
    %378 = arith.addf %372, %377 : vector<8x32xf32>
    %379 = vector.extract_strided_slice %335 {offsets = [2, 0], sizes = [1, 32], strides = [1, 1]} : vector<3x32xf32> to vector<1x32xf32>
    %380 = vector.broadcast %379 : vector<1x32xf32> to vector<8x32xf32>
    %381 = arith.addf %378, %380 : vector<8x32xf32>
    %382 = math.tanh %381 : vector<8x32xf32>
    %cst_88 = arith.constant 1.000000e+00 : f32
    %383 = vector.broadcast %cst_88 : f32 to vector<8x32xf32>
    %384 = arith.subf %383, %369 : vector<8x32xf32>
    %385 = arith.mulf %384, %1 : vector<8x32xf32>
    %386 = arith.mulf %369, %382 : vector<8x32xf32>
    %387 = arith.addf %385, %386 : vector<8x32xf32>
    %c0_89 = arith.constant 0 : index
    %c0_90 = arith.constant 0 : index
    %388 = vector.load %arg13[%c0_89, %c0_90] : memref<1x32xf32, #tpu.memory_space<vmem>>, vector<1x32xf32>
    %c0_91 = arith.constant 0 : index
    %c0_92 = arith.constant 0 : index
    %389 = vector.load %arg14[%c0_91, %c0_92] : memref<1x32xf32, #tpu.memory_space<vmem>>, vector<1x32xf32>
    %cst_93 = arith.constant dense<0.000000e+00> : vector<8xf32>
    %390 = vector.multi_reduction <add>, %387, %cst_93 [1] : vector<8x32xf32> to vector<8xf32>
    %391 = vector.shape_cast %390 : vector<8xf32> to vector<8x1xf32>
    %cst_94 = arith.constant 3.200000e+01 : f32
    %392 = vector.broadcast %cst_94 : f32 to vector<8x1xf32>
    %393 = arith.divf %391, %392 : vector<8x1xf32>
    %394 = vector.broadcast %393 : vector<8x1xf32> to vector<8x32xf32>
    %395 = arith.subf %387, %394 : vector<8x32xf32>
    %396 = arith.mulf %395, %395 : vector<8x32xf32>
    %cst_95 = arith.constant dense<0.000000e+00> : vector<8xf32>
    %397 = vector.multi_reduction <add>, %396, %cst_95 [1] : vector<8x32xf32> to vector<8xf32>
    %398 = vector.shape_cast %397 : vector<8xf32> to vector<8x1xf32>
    %cst_96 = arith.constant 3.200000e+01 : f32
    %399 = vector.broadcast %cst_96 : f32 to vector<8x1xf32>
    %400 = arith.divf %398, %399 : vector<8x1xf32>
    %401 = vector.broadcast %393 : vector<8x1xf32> to vector<8x32xf32>
    %402 = arith.subf %387, %401 : vector<8x32xf32>
    %cst_97 = arith.constant 9.99999974E-6 : f32
    %403 = vector.broadcast %cst_97 : f32 to vector<8x1xf32>
    %404 = arith.addf %400, %403 : vector<8x1xf32>
    %405 = math.rsqrt %404 : vector<8x1xf32>
    %406 = vector.broadcast %405 : vector<8x1xf32> to vector<8x32xf32>
    %407 = arith.mulf %402, %406 : vector<8x32xf32>
    %408 = vector.broadcast %388 : vector<1x32xf32> to vector<8x32xf32>
    %409 = arith.mulf %407, %408 : vector<8x32xf32>
    %410 = vector.broadcast %389 : vector<1x32xf32> to vector<8x32xf32>
    %411 = arith.addf %409, %410 : vector<8x32xf32>
    %c0_98 = arith.constant 0 : index
    %c0_99 = arith.constant 0 : index
    %412 = vector.load %arg15[%c0_98, %c0_99] : memref<32x64xbf16, #tpu.memory_space<vmem>>, vector<32x64xbf16>
    %413 = arith.truncf %411 : vector<8x32xf32> to vector<8x32xbf16>
    %cst_100 = arith.constant dense<0.000000e+00> : vector<8x64xf32>
    %414 = tpu.matmul %413, %412, %cst_100 {dimension_numbers = #tpu.dot_dimension_numbers<[1], [0], [0], [1], [0, 0, 1, 1], [], []>} : vector<8x32xbf16>, vector<32x64xbf16>, vector<8x64xf32> -> vector<8x64xf32>
    %c0_101 = arith.constant 0 : index
    %c0_102 = arith.constant 0 : index
    %415 = vector.load %arg16[%c0_101, %c0_102] : memref<1x64xf32, #tpu.memory_space<vmem>>, vector<1x64xf32>
    %416 = vector.broadcast %415 : vector<1x64xf32> to vector<8x64xf32>
    %417 = arith.addf %414, %416 : vector<8x64xf32>
    %cst_103 = arith.constant 0.000000e+00 : f32
    %418 = vector.broadcast %cst_103 : f32 to vector<8x64xf32>
    %419 = arith.maximumf %417, %418 : vector<8x64xf32>
    %c0_104 = arith.constant 0 : index
    %c0_105 = arith.constant 0 : index
    %420 = vector.load %arg17[%c0_104, %c0_105] : memref<64x32xbf16, #tpu.memory_space<vmem>>, vector<64x32xbf16>
    %421 = arith.truncf %419 : vector<8x64xf32> to vector<8x64xbf16>
    %cst_106 = arith.constant dense<0.000000e+00> : vector<8x32xf32>
    %422 = tpu.matmul %421, %420, %cst_106 {dimension_numbers = #tpu.dot_dimension_numbers<[1], [0], [0], [1], [0, 0, 1, 1], [], []>} : vector<8x64xbf16>, vector<64x32xbf16>, vector<8x32xf32> -> vector<8x32xf32>
    %c0_107 = arith.constant 0 : index
    %c0_108 = arith.constant 0 : index
    %423 = vector.load %arg18[%c0_107, %c0_108] : memref<1x32xf32, #tpu.memory_space<vmem>>, vector<1x32xf32>
    %424 = vector.broadcast %423 : vector<1x32xf32> to vector<8x32xf32>
    %425 = arith.addf %422, %424 : vector<8x32xf32>
    %c0_109 = arith.constant 0 : index
    %c0_110 = arith.constant 0 : index
    %c0_111 = arith.constant 0 : index
    %426 = vector.load %arg21[%c0_109, %c0_110, %c0_111] : memref<6x32x32xbf16, #tpu.memory_space<vmem>>, vector<6x32x32xbf16>
    %c0_112 = arith.constant 0 : index
    %c0_113 = arith.constant 0 : index
    %427 = vector.load %arg22[%c0_112, %c0_113] : memref<3x32xf32, #tpu.memory_space<vmem>>, vector<3x32xf32>
    %428 = arith.truncf %387 : vector<8x32xf32> to vector<8x32xbf16>
    %429 = arith.truncf %425 : vector<8x32xf32> to vector<8x32xbf16>
    %430 = vector.extract_strided_slice %426 {offsets = [0, 0, 0], sizes = [1, 32, 32], strides = [1, 1, 1]} : vector<6x32x32xbf16> to vector<1x32x32xbf16>
    %431 = vector.shape_cast %430 : vector<1x32x32xbf16> to vector<32x32xbf16>
    %cst_114 = arith.constant dense<0.000000e+00> : vector<8x32xf32>
    %432 = tpu.matmul %429, %431, %cst_114 {dimension_numbers = #tpu.dot_dimension_numbers<[1], [0], [0], [1], [0, 0, 1, 1], [], []>} : vector<8x32xbf16>, vector<32x32xbf16>, vector<8x32xf32> -> vector<8x32xf32>
    %433 = vector.extract_strided_slice %426 {offsets = [1, 0, 0], sizes = [1, 32, 32], strides = [1, 1, 1]} : vector<6x32x32xbf16> to vector<1x32x32xbf16>
    %434 = vector.shape_cast %433 : vector<1x32x32xbf16> to vector<32x32xbf16>
    %cst_115 = arith.constant dense<0.000000e+00> : vector<8x32xf32>
    %435 = tpu.matmul %428, %434, %cst_115 {dimension_numbers = #tpu.dot_dimension_numbers<[1], [0], [0], [1], [0, 0, 1, 1], [], []>} : vector<8x32xbf16>, vector<32x32xbf16>, vector<8x32xf32> -> vector<8x32xf32>
    %436 = arith.addf %432, %435 : vector<8x32xf32>
    %437 = vector.extract_strided_slice %427 {offsets = [0, 0], sizes = [1, 32], strides = [1, 1]} : vector<3x32xf32> to vector<1x32xf32>
    %438 = vector.broadcast %437 : vector<1x32xf32> to vector<8x32xf32>
    %439 = arith.addf %436, %438 : vector<8x32xf32>
    %440 = arith.negf %439 : vector<8x32xf32>
    %441 = math.exp %440 : vector<8x32xf32>
    %cst_116 = arith.constant 1.000000e+00 : f32
    %442 = vector.broadcast %cst_116 : f32 to vector<8x32xf32>
    %443 = arith.addf %442, %441 : vector<8x32xf32>
    %444 = arith.divf %442, %443 : vector<8x32xf32>
    %445 = vector.extract_strided_slice %426 {offsets = [2, 0, 0], sizes = [1, 32, 32], strides = [1, 1, 1]} : vector<6x32x32xbf16> to vector<1x32x32xbf16>
    %446 = vector.shape_cast %445 : vector<1x32x32xbf16> to vector<32x32xbf16>
    %cst_117 = arith.constant dense<0.000000e+00> : vector<8x32xf32>
    %447 = tpu.matmul %429, %446, %cst_117 {dimension_numbers = #tpu.dot_dimension_numbers<[1], [0], [0], [1], [0, 0, 1, 1], [], []>} : vector<8x32xbf16>, vector<32x32xbf16>, vector<8x32xf32> -> vector<8x32xf32>
    %448 = vector.extract_strided_slice %426 {offsets = [3, 0, 0], sizes = [1, 32, 32], strides = [1, 1, 1]} : vector<6x32x32xbf16> to vector<1x32x32xbf16>
    %449 = vector.shape_cast %448 : vector<1x32x32xbf16> to vector<32x32xbf16>
    %cst_118 = arith.constant dense<0.000000e+00> : vector<8x32xf32>
    %450 = tpu.matmul %428, %449, %cst_118 {dimension_numbers = #tpu.dot_dimension_numbers<[1], [0], [0], [1], [0, 0, 1, 1], [], []>} : vector<8x32xbf16>, vector<32x32xbf16>, vector<8x32xf32> -> vector<8x32xf32>
    %451 = arith.addf %447, %450 : vector<8x32xf32>
    %452 = vector.extract_strided_slice %427 {offsets = [1, 0], sizes = [1, 32], strides = [1, 1]} : vector<3x32xf32> to vector<1x32xf32>
    %453 = vector.broadcast %452 : vector<1x32xf32> to vector<8x32xf32>
    %454 = arith.addf %451, %453 : vector<8x32xf32>
    %cst_119 = arith.constant 1.000000e-01 : f32
    %455 = vector.broadcast %cst_119 : f32 to vector<8x32xf32>
    %456 = arith.subf %454, %455 : vector<8x32xf32>
    %457 = arith.negf %456 : vector<8x32xf32>
    %458 = math.exp %457 : vector<8x32xf32>
    %cst_120 = arith.constant 1.000000e+00 : f32
    %459 = vector.broadcast %cst_120 : f32 to vector<8x32xf32>
    %460 = arith.addf %459, %458 : vector<8x32xf32>
    %461 = arith.divf %459, %460 : vector<8x32xf32>
    %462 = vector.extract_strided_slice %426 {offsets = [4, 0, 0], sizes = [1, 32, 32], strides = [1, 1, 1]} : vector<6x32x32xbf16> to vector<1x32x32xbf16>
    %463 = vector.shape_cast %462 : vector<1x32x32xbf16> to vector<32x32xbf16>
    %cst_121 = arith.constant dense<0.000000e+00> : vector<8x32xf32>
    %464 = tpu.matmul %429, %463, %cst_121 {dimension_numbers = #tpu.dot_dimension_numbers<[1], [0], [0], [1], [0, 0, 1, 1], [], []>} : vector<8x32xbf16>, vector<32x32xbf16>, vector<8x32xf32> -> vector<8x32xf32>
    %465 = arith.mulf %444, %387 : vector<8x32xf32>
    %466 = arith.truncf %465 : vector<8x32xf32> to vector<8x32xbf16>
    %467 = vector.extract_strided_slice %426 {offsets = [5, 0, 0], sizes = [1, 32, 32], strides = [1, 1, 1]} : vector<6x32x32xbf16> to vector<1x32x32xbf16>
    %468 = vector.shape_cast %467 : vector<1x32x32xbf16> to vector<32x32xbf16>
    %cst_122 = arith.constant dense<0.000000e+00> : vector<8x32xf32>
    %469 = tpu.matmul %466, %468, %cst_122 {dimension_numbers = #tpu.dot_dimension_numbers<[1], [0], [0], [1], [0, 0, 1, 1], [], []>} : vector<8x32xbf16>, vector<32x32xbf16>, vector<8x32xf32> -> vector<8x32xf32>
    %470 = arith.addf %464, %469 : vector<8x32xf32>
    %471 = vector.extract_strided_slice %427 {offsets = [2, 0], sizes = [1, 32], strides = [1, 1]} : vector<3x32xf32> to vector<1x32xf32>
    %472 = vector.broadcast %471 : vector<1x32xf32> to vector<8x32xf32>
    %473 = arith.addf %470, %472 : vector<8x32xf32>
    %474 = math.tanh %473 : vector<8x32xf32>
    %cst_123 = arith.constant 1.000000e+00 : f32
    %475 = vector.broadcast %cst_123 : f32 to vector<8x32xf32>
    %476 = arith.subf %475, %461 : vector<8x32xf32>
    %477 = arith.mulf %476, %387 : vector<8x32xf32>
    %478 = arith.mulf %461, %474 : vector<8x32xf32>
    %479 = arith.addf %477, %478 : vector<8x32xf32>
    %c0_124 = arith.constant 0 : index
    %c0_125 = arith.constant 0 : index
    %c0_126 = arith.constant 0 : index
    %480 = vector.load %arg23[%c0_124, %c0_125, %c0_126] : memref<1x8x32xf32, #tpu.memory_space<vmem>>, vector<1x8x32xf32>
    %481 = vector.shape_cast %480 : vector<1x8x32xf32> to vector<8x32xf32>
    %482 = vector.shape_cast %479 : vector<8x32xf32> to vector<1x8x32xf32>
    tpu.vector_store %arg23[%c0_124, %c0_125, %c0_126], %482 {strides = array<i32>} : memref<1x8x32xf32, #tpu.memory_space<vmem>>, vector<1x8x32xf32>,
    return
  }
  func.func @transform_0(%arg0: i32) -> (i32, i32, i32) {
    %c0_i32 = arith.constant 0 : i32
    %c0_i32_0 = arith.constant 0 : i32
    %c0_i32_1 = arith.constant 0 : i32
    return %arg0, %c0_i32, %c0_i32_0 : i32, i32, i32
  }
  func.func @transform_1(%arg0: i32) -> (i32, i32, i32) {
    %c0_i32 = arith.constant 0 : i32
    %c0_i32_0 = arith.constant 0 : i32
    %c0_i32_1 = arith.constant 0 : i32
    return %arg0, %c0_i32, %c0_i32_0 : i32, i32, i32
  }
  func.func @transform_2(%arg0: i32) -> (i32, i32) {
    %c0_i32 = arith.constant 0 : i32
    %c0_i32_0 = arith.constant 0 : i32
    %c0_i32_1 = arith.constant 0 : i32
    return %c0_i32, %c0_i32_0 : i32, i32
  }
  func.func @transform_3(%arg0: i32) -> (i32, i32) {
    %c0_i32 = arith.constant 0 : i32
    %c0_i32_0 = arith.constant 0 : i32
    %c0_i32_1 = arith.constant 0 : i32
    return %c0_i32, %c0_i32_0 : i32, i32
  }
  func.func @transform_4(%arg0: i32) -> (i32, i32) {
    %c0_i32 = arith.constant 0 : i32
    %c0_i32_0 = arith.constant 0 : i32
    %c0_i32_1 = arith.constant 0 : i32
    return %c0_i32, %c0_i32_0 : i32, i32
  }
  func.func @transform_5(%arg0: i32) -> (i32, i32) {
    %c0_i32 = arith.constant 0 : i32
    %c0_i32_0 = arith.constant 0 : i32
    %c0_i32_1 = arith.constant 0 : i32
    return %c0_i32, %c0_i32_0 : i32, i32
  }
  func.func @transform_6(%arg0: i32) -> (i32, i32) {
    %c0_i32 = arith.constant 0 : i32
    %c0_i32_0 = arith.constant 0 : i32
    %c0_i32_1 = arith.constant 0 : i32
    return %c0_i32, %c0_i32_0 : i32, i32
  }
  func.func @transform_7(%arg0: i32) -> (i32, i32) {
    %c0_i32 = arith.constant 0 : i32
    %c0_i32_0 = arith.constant 0 : i32
    %c0_i32_1 = arith.constant 0 : i32
    return %c0_i32, %c0_i32_0 : i32, i32
  }
  func.func @transform_8(%arg0: i32) -> (i32, i32) {
    %c0_i32 = arith.constant 0 : i32
    %c0_i32_0 = arith.constant 0 : i32
    %c0_i32_1 = arith.constant 0 : i32
    return %c0_i32, %c0_i32_0 : i32, i32
  }
  func.func @transform_9(%arg0: i32) -> (i32, i32) {
    %c0_i32 = arith.constant 0 : i32
    %c0_i32_0 = arith.constant 0 : i32
    %c0_i32_1 = arith.constant 0 : i32
    return %c0_i32, %c0_i32_0 : i32, i32
  }
  func.func @transform_10(%arg0: i32) -> (i32, i32) {
    %c0_i32 = arith.constant 0 : i32
    %c0_i32_0 = arith.constant 0 : i32
    %c0_i32_1 = arith.constant 0 : i32
    return %c0_i32, %c0_i32_0 : i32, i32
  }
  func.func @transform_11(%arg0: i32) -> (i32, i32) {
    %c0_i32 = arith.constant 0 : i32
    %c0_i32_0 = arith.constant 0 : i32
    %c0_i32_1 = arith.constant 0 : i32
    return %c0_i32, %c0_i32_0 : i32, i32
  }
  func.func @transform_12(%arg0: i32) -> (i32, i32) {
    %c0_i32 = arith.constant 0 : i32
    %c0_i32_0 = arith.constant 0 : i32
    %c0_i32_1 = arith.constant 0 : i32
    return %c0_i32, %c0_i32_0 : i32, i32
  }
  func.func @transform_13(%arg0: i32) -> (i32, i32) {
    %c0_i32 = arith.constant 0 : i32
    %c0_i32_0 = arith.constant 0 : i32
    %c0_i32_1 = arith.constant 0 : i32
    return %c0_i32, %c0_i32_0 : i32, i32
  }
  func.func @transform_14(%arg0: i32) -> (i32, i32) {
    %c0_i32 = arith.constant 0 : i32
    %c0_i32_0 = arith.constant 0 : i32
    %c0_i32_1 = arith.constant 0 : i32
    return %c0_i32, %c0_i32_0 : i32, i32
  }
  func.func @transform_15(%arg0: i32) -> (i32, i32) {
    %c0_i32 = arith.constant 0 : i32
    %c0_i32_0 = arith.constant 0 : i32
    %c0_i32_1 = arith.constant 0 : i32
    return %c0_i32, %c0_i32_0 : i32, i32
  }
  func.func @transform_16(%arg0: i32) -> (i32, i32) {
    %c0_i32 = arith.constant 0 : i32
    %c0_i32_0 = arith.constant 0 : i32
    %c0_i32_1 = arith.constant 0 : i32
    return %c0_i32, %c0_i32_0 : i32, i32
  }
  func.func @transform_17(%arg0: i32) -> (i32, i32) {
    %c0_i32 = arith.constant 0 : i32
    %c0_i32_0 = arith.constant 0 : i32
    %c0_i32_1 = arith.constant 0 : i32
    return %c0_i32, %c0_i32_0 : i32, i32
  }
  func.func @transform_18(%arg0: i32) -> (i32, i32, i32) {
    %c0_i32 = arith.constant 0 : i32
    %c0_i32_0 = arith.constant 0 : i32
    %c0_i32_1 = arith.constant 0 : i32
    %c0_i32_2 = arith.constant 0 : i32
    return %c0_i32, %c0_i32_0, %c0_i32_1 : i32, i32, i32
  }
  func.func @transform_19(%arg0: i32) -> (i32, i32) {
    %c0_i32 = arith.constant 0 : i32
    %c0_i32_0 = arith.constant 0 : i32
    %c0_i32_1 = arith.constant 0 : i32
    return %c0_i32, %c0_i32_0 : i32, i32
  }
  func.func @transform_20(%arg0: i32) -> (i32, i32, i32) {
    %c0_i32 = arith.constant 0 : i32
    %c0_i32_0 = arith.constant 0 : i32
    %c0_i32_1 = arith.constant 0 : i32
    %c0_i32_2 = arith.constant 0 : i32
    return %c0_i32, %c0_i32_0, %c0_i32_1 : i32, i32, i32
  }
  func.func @transform_21(%arg0: i32) -> (i32, i32) {
    %c0_i32 = arith.constant 0 : i32
    %c0_i32_0 = arith.constant 0 : i32
    %c0_i32_1 = arith.constant 0 : i32
    return %c0_i32, %c0_i32_0 : i32, i32
  }
  func.func @transform_22(%arg0: i32) -> (i32, i32, i32) {
    %c0_i32 = arith.constant 0 : i32
    %c0_i32_0 = arith.constant 0 : i32
    %c0_i32_1 = arith.constant 0 : i32
    return %arg0, %c0_i32, %c0_i32_0 : i32, i32, i32
  }
}

</mosaic_0001>

<llo_original>
// kernel: tpu_custom_call.1
$region0: #{tpu_custom_call.1}
  #allocation0 [shape = 'u32[]', space=smem, size = 0x4, offset = 0x4, fixed_abs, tag = 'smem constant byte address 0x4 - core index']
  #allocation1 [shape = 'u32[144,128]{1,0:T(1,128)}', space=vmem, size = 0x12000, scoped, tag = 'internal scratch']
  %s0 = inlined_call_operand.vmem [shape: f32[2,8,32], index: 0, kind: input, shape index: {}]
  %s1 = inlined_call_operand.hbm [shape: f32[2,8,32], index: 1, kind: input, shape index: {}]
  %s2 = inlined_call_operand.hbm [shape: f32[16,32], index: 2, kind: input, shape index: {}]
  %s3 = inlined_call_operand.hbm [shape: f32[8,16], index: 3, kind: input, shape index: {}]
  %s4 = inlined_call_operand.hbm [shape: bf16[32,32], index: 4, kind: input, shape index: {}]
  %s5 = inlined_call_operand.hbm [shape: bf16[32,64], index: 5, kind: input, shape index: {}]
  %s6 = inlined_call_operand.hbm [shape: bf16[32,32], index: 6, kind: input, shape index: {}]
  %s7 = inlined_call_operand.hbm [shape: bf16[32,32], index: 7, kind: input, shape index: {}]
  %s8 = inlined_call_operand.vmem [shape: f32[4,8], index: 8, kind: input, shape index: {}]
  %s9 = inlined_call_operand.hbm [shape: f32[4,8], index: 9, kind: input, shape index: {}]
  %s10 = inlined_call_operand.hbm [shape: f32[1,32], index: 10, kind: input, shape index: {}]
  %s11 = inlined_call_operand.hbm [shape: f32[1,32], index: 11, kind: input, shape index: {}]
  %s12 = inlined_call_operand.hbm [shape: f32[1,32], index: 12, kind: input, shape index: {}]
  %s13 = inlined_call_operand.hbm [shape: f32[1,32], index: 13, kind: input, shape index: {}]
  %s14 = inlined_call_operand.hbm [shape: bf16[32,64], index: 14, kind: input, shape index: {}]
  %s15 = inlined_call_operand.hbm [shape: f32[1,64], index: 15, kind: input, shape index: {}]
  %s16 = inlined_call_operand.vmem [shape: bf16[64,32], index: 16, kind: input, shape index: {}]
  %s17 = inlined_call_operand.hbm [shape: f32[1,32], index: 17, kind: input, shape index: {}]
  %s18 = inlined_call_operand.vmem [shape: bf16[6,32,32], index: 18, kind: input, shape index: {}]
  %s19 = inlined_call_operand.hbm [shape: f32[3,32], index: 19, kind: input, shape index: {}]
  %s20 = inlined_call_operand.hbm [shape: bf16[6,32,32], index: 20, kind: input, shape index: {}]
  %s21 = inlined_call_operand.vmem [shape: f32[3,32], index: 21, kind: input, shape index: {}]
  %s22 = inlined_call_operand.hbm [shape: f32[2,8,32], index: 22, kind: output, shape index: {}]
  %s23 = sld [smem:[#allocation0]]
  $region189: #{tpu_custom_call.1} parent=0
    _
  %s25 = ssub.s32 1, %s23
  %s26 = scalar_select 0, %s25, %s23
  $region1: #{tpu_custom_call.1} parent=0
    #allocation2 [shape = 'u8[8192]{0}', space=vmem, size = 0x2000, scoped, tag = 'input window, operand 1']
    #allocation3 [shape = 's32[2]{0}', space=sflag, size = 0x8, scoped, tag = 'scoped memory for tpu_custom_call.1']
    #allocation4 [shape = 's32[2]{0}', space=sflag, size = 0x8, scoped, tag = 'scoped memory for tpu_custom_call.1']
    #allocation5 [shape = 'u8[8192]{0}', space=vmem, size = 0x2000, scoped, tag = 'input window, operand 2, single buffered']
    #allocation6 [shape = 's32[1]{0}', space=sflag, size = 0x4, scoped, tag = 'scoped memory for tpu_custom_call.1']
    #allocation7 [shape = 'u8[4096]{0}', space=vmem, size = 0x1000, scoped, tag = 'input window, operand 3, single buffered']
    #allocation8 [shape = 'u8[8192]{0}', space=vmem, size = 0x2000, scoped, tag = 'input window, operand 4, single buffered']
    #allocation9 [shape = 's32[1]{0}', space=sflag, size = 0x4, scoped, tag = 'scoped memory for tpu_custom_call.1']
    #allocation10 [shape = 'u8[8192]{0}', space=vmem, size = 0x2000, scoped, tag = 'input window, operand 5, single buffered']
    #allocation11 [shape = 'u8[8192]{0}', space=vmem, size = 0x2000, scoped, tag = 'input window, operand 6, single buffered']
    #allocation12 [shape = 's32[1]{0}', space=sflag, size = 0x4, scoped, tag = 'scoped memory for tpu_custom_call.1']
    #allocation13 [shape = 'u8[8192]{0}', space=vmem, size = 0x2000, scoped, tag = 'input window, operand 7, single buffered']
    #allocation14 [shape = 'u8[2048]{0}', space=vmem, size = 0x800, scoped, tag = 'input window, operand 9, single buffered']
    #allocation15 [shape = 's32[1]{0}', space=sflag, size = 0x4, scoped, tag = 'scoped memory for tpu_custom_call.1']
    #allocation16 [shape = 'u8[512]{0}', space=vmem, size = 0x400, scoped, tag = 'input window, operand 10, single buffered']
    #allocation17 [shape = 'u8[512]{0}', space=vmem, size = 0x400, scoped, tag = 'input window, operand 11, single buffered']
    #allocation18 [shape = 's32[1]{0}', space=sflag, size = 0x4, scoped, tag = 'scoped memory for tpu_custom_call.1']
    #allocation19 [shape = 'u8[512]{0}', space=vmem, size = 0x400, scoped, tag = 'input window, operand 12, single buffered']
    #allocation20 [shape = 'u8[512]{0}', space=vmem, size = 0x400, scoped, tag = 'input window, operand 13, single buffered']
    #allocation21 [shape = 's32[1]{0}', space=sflag, size = 0x4, scoped, tag = 'scoped memory for tpu_custom_call.1']
    #allocation22 [shape = 'u8[8192]{0}', space=vmem, size = 0x2000, scoped, tag = 'input window, operand 14, single buffered']
    #allocation23 [shape = 'u8[512]{0}', space=vmem, size = 0x400, scoped, tag = 'input window, operand 15, single buffered']
    #allocation24 [shape = 's32[1]{0}', space=sflag, size = 0x4, scoped, tag = 'scoped memory for tpu_custom_call.1']
    #allocation25 [shape = 'u8[512]{0}', space=vmem, size = 0x400, scoped, tag = 'input window, operand 17, single buffered']
    #allocation26 [shape = 'u8[2048]{0}', space=vmem, size = 0x800, scoped, tag = 'input window, operand 19, single buffered']
    #allocation27 [shape = 's32[1]{0}', space=sflag, size = 0x4, scoped, tag = 'scoped memory for tpu_custom_call.1']
    #allocation28 [shape = 'u8[49152]{0}', space=vmem, size = 0xc000, scoped, tag = 'input window, operand 20, single buffered']
    #allocation29 [shape = 'u8[8192]{0}', space=vmem, size = 0x2000, scoped, tag = 'output window, operand 0']
    %27 = vsyncpa [#allocation3], 0
    %s28 = scalar_lea.sflag [#allocation3], 1
    %29 = vsyncpa %s28, 0
    %30 = vsyncpa [#allocation6], 0
    %31 = vsyncpa [#allocation9], 0
    %32 = vsyncpa [#allocation12], 0
    %33 = vsyncpa [#allocation15], 0
    %34 = vsyncpa [#allocation18], 0
    %35 = vsyncpa [#allocation21], 0
    %36 = vsyncpa [#allocation24], 0
    %37 = vsyncpa [#allocation27], 0
    %38 = vsyncpa [#allocation4], 0
    %s39 = scalar_lea.sflag [#allocation4], 1
    %40 = vsyncpa %s39, 0
    loop: start=0, step=1, limit=4
    $region2: #{tpu_custom_call.1} parent=1 // loop_pre_header
      _
    $region3: #{tpu_custom_call.1} parent=1 // loop_header
      %s42 = sphi 0, %s46
      %p43 = scmp.ge.s32.totalorder %s42, 4
      %s52 = sphi 0, %s54
      %s55 = sphi 0, %s52
      %s56 = sphi 0, %s55
      %s72 = sphi 0, %s56
      %s78 = sphi 0, %s80
      %s81 = sphi 0, %s78
      %s82 = sphi 0, %s81
      %s98 = sphi 0, %s82
      %s102 = sphi 0, %s102
      %s104 = sphi 0, %s102
      %s105 = sphi 0, %s104
      %s119 = sphi 0, %s105
      %s123 = sphi 0, %s123
      %s125 = sphi 0, %s123
      %s126 = sphi 0, %s125
      %s140 = sphi 0, %s126
      %s144 = sphi 0, %s144
      %s146 = sphi 0, %s144
      %s147 = sphi 0, %s146
      %s161 = sphi 0, %s147
      %s165 = sphi 0, %s165
      %s167 = sphi 0, %s165
      %s168 = sphi 0, %s167
      %s182 = sphi 0, %s168
      %s186 = sphi 0, %s186
      %s188 = sphi 0, %s186
      %s189 = sphi 0, %s188
      %s203 = sphi 0, %s189
      %s207 = sphi 0, %s207
      %s209 = sphi 0, %s207
      %s210 = sphi 0, %s209
      %s224 = sphi 0, %s210
      %s228 = sphi 0, %s228
      %s230 = sphi 0, %s228
      %s231 = sphi 0, %s230
      %s245 = sphi 0, %s231
      %s249 = sphi 0, %s249
      %s251 = sphi 0, %s249
      %s252 = sphi 0, %s251
      %s266 = sphi 0, %s252
      %s270 = sphi 0, %s270
      %s272 = sphi 0, %s270
      %s273 = sphi 0, %s272
      %s287 = sphi 0, %s273
      %s291 = sphi 0, %s291
      %s293 = sphi 0, %s291
      %s294 = sphi 0, %s293
      %s308 = sphi 0, %s294
      %s312 = sphi 0, %s312
      %s314 = sphi 0, %s312
      %s315 = sphi 0, %s314
      %s329 = sphi 0, %s315
      %s333 = sphi 0, %s333
      %s335 = sphi 0, %s333
      %s336 = sphi 0, %s335
      %s350 = sphi 0, %s336
      %s354 = sphi 0, %s354
      %s356 = sphi 0, %s354
      %s357 = sphi 0, %s356
      %s371 = sphi 0, %s357
      %s375 = sphi 0, %s375
      %s377 = sphi 0, %s375
      %s378 = sphi 0, %s377
      %s392 = sphi 0, %s378
      %s396 = sphi 0, %s396
      %s398 = sphi 0, %s396
      %s399 = sphi 0, %s398
      %s413 = sphi 0, %s399
      %s417 = sphi 0, %s417
      %s419 = sphi 0, %s417
      %s420 = sphi 0, %s419
      %s434 = sphi 0, %s420
      %s438 = sphi 0, %s438
      %s440 = sphi 0, %s438
      %s441 = sphi 0, %s440
      %s455 = sphi 0, %s441
      %s459 = sphi 0, %s459
      %s461 = sphi 0, %s459
      %s462 = sphi 0, %s461
      %s476 = sphi 0, %s462
      %s480 = sphi 0, %s480
      %s482 = sphi 0, %s480
      %s483 = sphi 0, %s482
      %s497 = sphi 0, %s483
      %s501 = sphi 0, %s501
      %s503 = sphi 0, %s501
      %s504 = sphi 0, %s503
      %s518 = sphi 0, %s504
      %s524 = sphi 0, %s526
      %s527 = sphi 0, %s524
      %s528 = sphi 0, %s527
      %s544 = sphi 0, %s528
    $region4: #{tpu_custom_call.1} parent=1 // loop_header_branch
      %45 = sbr.rel (%p43) target = $region8
    $region5: #{tpu_custom_call.1} parent=1 // loop_body
      %s47 = ssub.s32 %s42, 1
      %s48 = ssub.s32 %s42, 2
      %s49 = sadd.s32 %s42, 1
      %s50 = ssub.s32 %s42, %s49
      %p51 = scmp.eq.s32.totalorder %s50, 0
      %s53 = sadd.s32 %s52, 1
      %s54 = scalar_select %p51, %s52, %s53
      %p57 = pneg %p51
      %p58 = scmp.eq.s32.totalorder %s42, 1
      %p59 = por %p57, %p58
      %p60 = scmp.ne.s32.totalorder %s52, %s55
      %p61 = scmp.eq.s32.totalorder %s42, 0
      %p62 = por %p60, %p61
      %p63 = scmp.ne.s32.totalorder %s52, %s55
      %p64 = scmp.eq.s32.totalorder %s47, 1
      %p65 = por %p63, %p64
      %p66 = scmp.ne.s32.totalorder %s55, %s56
      %p67 = scmp.eq.s32.totalorder %s47, 0
      %p68 = por %p66, %p67
      %p69 = scmp.ne.s32.totalorder %s55, %s56
      %p70 = scmp.eq.s32.totalorder %s48, 1
      %p71 = por %p69, %p70
      %p73 = scmp.ne.s32.totalorder %s56, %s72
      %p74 = scmp.eq.s32.totalorder %s48, 0
      %p75 = por %p73, %p74
      %s76 = ssub.s32 %s42, %s49
      %p77 = scmp.eq.s32.totalorder %s76, 0
      %s79 = sadd.s32 %s78, 1
      %s80 = scalar_select %p77, %s78, %s79
      %p83 = pneg %p77
      %p84 = scmp.eq.s32.totalorder %s42, 1
      %p85 = por %p83, %p84
      %p86 = scmp.ne.s32.totalorder %s78, %s81
      %p87 = scmp.eq.s32.totalorder %s42, 0
      %p88 = por %p86, %p87
      %p89 = scmp.ne.s32.totalorder %s78, %s81
      %p90 = scmp.eq.s32.totalorder %s47, 1
      %p91 = por %p89, %p90
      %p92 = scmp.ne.s32.totalorder %s81, %s82
      %p93 = scmp.eq.s32.totalorder %s47, 0
      %p94 = por %p92, %p93
      %p95 = scmp.ne.s32.totalorder %s81, %s82
      %p96 = scmp.eq.s32.totalorder %s48, 1
      %p97 = por %p95, %p96
      %p99 = scmp.ne.s32.totalorder %s82, %s98
      %p100 = scmp.eq.s32.totalorder %s48, 0
      %p101 = por %p99, %p100
      %s103 = sadd.s32 %s102, 1
      %p106 = scmp.eq.s32.totalorder %s42, 1
      %p107 = scmp.ne.s32.totalorder %s102, %s104
      %p108 = scmp.eq.s32.totalorder %s42, 0
      %p109 = por %p107, %p108
      %p110 = scmp.ne.s32.totalorder %s102, %s104
      %p111 = scmp.eq.s32.totalorder %s47, 1
      %p112 = por %p110, %p111
      %p113 = scmp.ne.s32.totalorder %s104, %s105
      %p114 = scmp.eq.s32.totalorder %s47, 0
      %p115 = por %p113, %p114
      %p116 = scmp.ne.s32.totalorder %s104, %s105
      %p117 = scmp.eq.s32.totalorder %s48, 1
      %p118 = por %p116, %p117
      %p120 = scmp.ne.s32.totalorder %s105, %s119
      %p121 = scmp.eq.s32.totalorder %s48, 0
      %p122 = por %p120, %p121
      %s124 = sadd.s32 %s123, 1
      %p127 = scmp.eq.s32.totalorder %s42, 1
      %p128 = scmp.ne.s32.totalorder %s123, %s125
      %p129 = scmp.eq.s32.totalorder %s42, 0
      %p130 = por %p128, %p129
      %p131 = scmp.ne.s32.totalorder %s123, %s125
      %p132 = scmp.eq.s32.totalorder %s47, 1
      %p133 = por %p131, %p132
      %p134 = scmp.ne.s32.totalorder %s125, %s126
      %p135 = scmp.eq.s32.totalorder %s47, 0
      %p136 = por %p134, %p135
      %p137 = scmp.ne.s32.totalorder %s125, %s126
      %p138 = scmp.eq.s32.totalorder %s48, 1
      %p139 = por %p137, %p138
      %p141 = scmp.ne.s32.totalorder %s126, %s140
      %p142 = scmp.eq.s32.totalorder %s48, 0
      %p143 = por %p141, %p142
      %s145 = sadd.s32 %s144, 1
      %p148 = scmp.eq.s32.totalorder %s42, 1
      %p149 = scmp.ne.s32.totalorder %s144, %s146
      %p150 = scmp.eq.s32.totalorder %s42, 0
      %p151 = por %p149, %p150
      %p152 = scmp.ne.s32.totalorder %s144, %s146
      %p153 = scmp.eq.s32.totalorder %s47, 1
      %p154 = por %p152, %p153
      %p155 = scmp.ne.s32.totalorder %s146, %s147
      %p156 = scmp.eq.s32.totalorder %s47, 0
      %p157 = por %p155, %p156
      %p158 = scmp.ne.s32.totalorder %s146, %s147
      %p159 = scmp.eq.s32.totalorder %s48, 1
      %p160 = por %p158, %p159
      %p162 = scmp.ne.s32.totalorder %s147, %s161
      %p163 = scmp.eq.s32.totalorder %s48, 0
      %p164 = por %p162, %p163
      %s166 = sadd.s32 %s165, 1
      %p169 = scmp.eq.s32.totalorder %s42, 1
      %p170 = scmp.ne.s32.totalorder %s165, %s167
      %p171 = scmp.eq.s32.totalorder %s42, 0
      %p172 = por %p170, %p171
      %p173 = scmp.ne.s32.totalorder %s165, %s167
      %p174 = scmp.eq.s32.totalorder %s47, 1
      %p175 = por %p173, %p174
      %p176 = scmp.ne.s32.totalorder %s167, %s168
      %p177 = scmp.eq.s32.totalorder %s47, 0
      %p178 = por %p176, %p177
      %p179 = scmp.ne.s32.totalorder %s167, %s168
      %p180 = scmp.eq.s32.totalorder %s48, 1
      %p181 = por %p179, %p180
      %p183 = scmp.ne.s32.totalorder %s168, %s182
      %p184 = scmp.eq.s32.totalorder %s48, 0
      %p185 = por %p183, %p184
      %s187 = sadd.s32 %s186, 1
      %p190 = scmp.eq.s32.totalorder %s42, 1
      %p191 = scmp.ne.s32.totalorder %s186, %s188
      %p192 = scmp.eq.s32.totalorder %s42, 0
      %p193 = por %p191, %p192
      %p194 = scmp.ne.s32.totalorder %s186, %s188
      %p195 = scmp.eq.s32.totalorder %s47, 1
      %p196 = por %p194, %p195
      %p197 = scmp.ne.s32.totalorder %s188, %s189
      %p198 = scmp.eq.s32.totalorder %s47, 0
      %p199 = por %p197, %p198
      %p200 = scmp.ne.s32.totalorder %s188, %s189
      %p201 = scmp.eq.s32.totalorder %s48, 1
      %p202 = por %p200, %p201
      %p204 = scmp.ne.s32.totalorder %s189, %s203
      %p205 = scmp.eq.s32.totalorder %s48, 0
      %p206 = por %p204, %p205
      %s208 = sadd.s32 %s207, 1
      %p211 = scmp.eq.s32.totalorder %s42, 1
      %p212 = scmp.ne.s32.totalorder %s207, %s209
      %p213 = scmp.eq.s32.totalorder %s42, 0
      %p214 = por %p212, %p213
      %p215 = scmp.ne.s32.totalorder %s207, %s209
      %p216 = scmp.eq.s32.totalorder %s47, 1
      %p217 = por %p215, %p216
      %p218 = scmp.ne.s32.totalorder %s209, %s210
      %p219 = scmp.eq.s32.totalorder %s47, 0
      %p220 = por %p218, %p219
      %p221 = scmp.ne.s32.totalorder %s209, %s210
      %p222 = scmp.eq.s32.totalorder %s48, 1
      %p223 = por %p221, %p222
      %p225 = scmp.ne.s32.totalorder %s210, %s224
      %p226 = scmp.eq.s32.totalorder %s48, 0
      %p227 = por %p225, %p226
      %s229 = sadd.s32 %s228, 1
      %p232 = scmp.eq.s32.totalorder %s42, 1
      %p233 = scmp.ne.s32.totalorder %s228, %s230
      %p234 = scmp.eq.s32.totalorder %s42, 0
      %p235 = por %p233, %p234
      %p236 = scmp.ne.s32.totalorder %s228, %s230
      %p237 = scmp.eq.s32.totalorder %s47, 1
      %p238 = por %p236, %p237
      %p239 = scmp.ne.s32.totalorder %s230, %s231
      %p240 = scmp.eq.s32.totalorder %s47, 0
      %p241 = por %p239, %p240
      %p242 = scmp.ne.s32.totalorder %s230, %s231
      %p243 = scmp.eq.s32.totalorder %s48, 1
      %p244 = por %p242, %p243
      %p246 = scmp.ne.s32.totalorder %s231, %s245
      %p247 = scmp.eq.s32.totalorder %s48, 0
      %p248 = por %p246, %p247
      %s250 = sadd.s32 %s249, 1
      %p253 = scmp.eq.s32.totalorder %s42, 1
      %p254 = scmp.ne.s32.totalorder %s249, %s251
      %p255 = scmp.eq.s32.totalorder %s42, 0
      %p256 = por %p254, %p255
      %p257 = scmp.ne.s32.totalorder %s249, %s251
      %p258 = scmp.eq.s32.totalorder %s47, 1
      %p259 = por %p257, %p258
      %p260 = scmp.ne.s32.totalorder %s251, %s252
      %p261 = scmp.eq.s32.totalorder %s47, 0
      %p262 = por %p260, %p261
      %p263 = scmp.ne.s32.totalorder %s251, %s252
      %p264 = scmp.eq.s32.totalorder %s48, 1
      %p265 = por %p263, %p264
      %p267 = scmp.ne.s32.totalorder %s252, %s266
      %p268 = scmp.eq.s32.totalorder %s48, 0
      %p269 = por %p267, %p268
      %s271 = sadd.s32 %s270, 1
      %p274 = scmp.eq.s32.totalorder %s42, 1
      %p275 = scmp.ne.s32.totalorder %s270, %s272
      %p276 = scmp.eq.s32.totalorder %s42, 0
      %p277 = por %p275, %p276
      %p278 = scmp.ne.s32.totalorder %s270, %s272
      %p279 = scmp.eq.s32.totalorder %s47, 1
      %p280 = por %p278, %p279
      %p281 = scmp.ne.s32.totalorder %s272, %s273
      %p282 = scmp.eq.s32.totalorder %s47, 0
      %p283 = por %p281, %p282
      %p284 = scmp.ne.s32.totalorder %s272, %s273
      %p285 = scmp.eq.s32.totalorder %s48, 1
      %p286 = por %p284, %p285
      %p288 = scmp.ne.s32.totalorder %s273, %s287
      %p289 = scmp.eq.s32.totalorder %s48, 0
      %p290 = por %p288, %p289
      %s292 = sadd.s32 %s291, 1
      %p295 = scmp.eq.s32.totalorder %s42, 1
      %p296 = scmp.ne.s32.totalorder %s291, %s293
      %p297 = scmp.eq.s32.totalorder %s42, 0
      %p298 = por %p296, %p297
      %p299 = scmp.ne.s32.totalorder %s291, %s293
      %p300 = scmp.eq.s32.totalorder %s47, 1
      %p301 = por %p299, %p300
      %p302 = scmp.ne.s32.totalorder %s293, %s294
      %p303 = scmp.eq.s32.totalorder %s47, 0
      %p304 = por %p302, %p303
      %p305 = scmp.ne.s32.totalorder %s293, %s294
      %p306 = scmp.eq.s32.totalorder %s48, 1
      %p307 = por %p305, %p306
      %p309 = scmp.ne.s32.totalorder %s294, %s308
      %p310 = scmp.eq.s32.totalorder %s48, 0
      %p311 = por %p309, %p310
      %s313 = sadd.s32 %s312, 1
      %p316 = scmp.eq.s32.totalorder %s42, 1
      %p317 = scmp.ne.s32.totalorder %s312, %s314
      %p318 = scmp.eq.s32.totalorder %s42, 0
      %p319 = por %p317, %p318
      %p320 = scmp.ne.s32.totalorder %s312, %s314
      %p321 = scmp.eq.s32.totalorder %s47, 1
      %p322 = por %p320, %p321
      %p323 = scmp.ne.s32.totalorder %s314, %s315
      %p324 = scmp.eq.s32.totalorder %s47, 0
      %p325 = por %p323, %p324
      %p326 = scmp.ne.s32.totalorder %s314, %s315
      %p327 = scmp.eq.s32.totalorder %s48, 1
      %p328 = por %p326, %p327
      %p330 = scmp.ne.s32.totalorder %s315, %s329
      %p331 = scmp.eq.s32.totalorder %s48, 0
      %p332 = por %p330, %p331
      %s334 = sadd.s32 %s333, 1
      %p337 = scmp.eq.s32.totalorder %s42, 1
      %p338 = scmp.ne.s32.totalorder %s333, %s335
      %p339 = scmp.eq.s32.totalorder %s42, 0
      %p340 = por %p338, %p339
      %p341 = scmp.ne.s32.totalorder %s333, %s335
      %p342 = scmp.eq.s32.totalorder %s47, 1
      %p343 = por %p341, %p342
      %p344 = scmp.ne.s32.totalorder %s335, %s336
      %p345 = scmp.eq.s32.totalorder %s47, 0
      %p346 = por %p344, %p345
      %p347 = scmp.ne.s32.totalorder %s335, %s336
      %p348 = scmp.eq.s32.totalorder %s48, 1
      %p349 = por %p347, %p348
      %p351 = scmp.ne.s32.totalorder %s336, %s350
      %p352 = scmp.eq.s32.totalorder %s48, 0
      %p353 = por %p351, %p352
      %s355 = sadd.s32 %s354, 1
      %p358 = scmp.eq.s32.totalorder %s42, 1
      %p359 = scmp.ne.s32.totalorder %s354, %s356
      %p360 = scmp.eq.s32.totalorder %s42, 0
      %p361 = por %p359, %p360
      %p362 = scmp.ne.s32.totalorder %s354, %s356
      %p363 = scmp.eq.s32.totalorder %s47, 1
      %p364 = por %p362, %p363
      %p365 = scmp.ne.s32.totalorder %s356, %s357
      %p366 = scmp.eq.s32.totalorder %s47, 0
      %p367 = por %p365, %p366
      %p368 = scmp.ne.s32.totalorder %s356, %s357
      %p369 = scmp.eq.s32.totalorder %s48, 1
      %p370 = por %p368, %p369
      %p372 = scmp.ne.s32.totalorder %s357, %s371
      %p373 = scmp.eq.s32.totalorder %s48, 0
      %p374 = por %p372, %p373
      %s376 = sadd.s32 %s375, 1
      %p379 = scmp.eq.s32.totalorder %s42, 1
      %p380 = scmp.ne.s32.totalorder %s375, %s377
      %p381 = scmp.eq.s32.totalorder %s42, 0
      %p382 = por %p380, %p381
      %p383 = scmp.ne.s32.totalorder %s375, %s377
      %p384 = scmp.eq.s32.totalorder %s47, 1
      %p385 = por %p383, %p384
      %p386 = scmp.ne.s32.totalorder %s377, %s378
      %p387 = scmp.eq.s32.totalorder %s47, 0
      %p388 = por %p386, %p387
      %p389 = scmp.ne.s32.totalorder %s377, %s378
      %p390 = scmp.eq.s32.totalorder %s48, 1
      %p391 = por %p389, %p390
      %p393 = scmp.ne.s32.totalorder %s378, %s392
      %p394 = scmp.eq.s32.totalorder %s48, 0
      %p395 = por %p393, %p394
      %s397 = sadd.s32 %s396, 1
      %p400 = scmp.eq.s32.totalorder %s42, 1
      %p401 = scmp.ne.s32.totalorder %s396, %s398
      %p402 = scmp.eq.s32.totalorder %s42, 0
      %p403 = por %p401, %p402
      %p404 = scmp.ne.s32.totalorder %s396, %s398
      %p405 = scmp.eq.s32.totalorder %s47, 1
      %p406 = por %p404, %p405
      %p407 = scmp.ne.s32.totalorder %s398, %s399
      %p408 = scmp.eq.s32.totalorder %s47, 0
      %p409 = por %p407, %p408
      %p410 = scmp.ne.s32.totalorder %s398, %s399
      %p411 = scmp.eq.s32.totalorder %s48, 1
      %p412 = por %p410, %p411
      %p414 = scmp.ne.s32.totalorder %s399, %s413
      %p415 = scmp.eq.s32.totalorder %s48, 0
      %p416 = por %p414, %p415
      %s418 = sadd.s32 %s417, 1
      %p421 = scmp.eq.s32.totalorder %s42, 1
      %p422 = scmp.ne.s32.totalorder %s417, %s419
      %p423 = scmp.eq.s32.totalorder %s42, 0
      %p424 = por %p422, %p423
      %p425 = scmp.ne.s32.totalorder %s417, %s419
      %p426 = scmp.eq.s32.totalorder %s47, 1
      %p427 = por %p425, %p426
      %p428 = scmp.ne.s32.totalorder %s419, %s420
      %p429 = scmp.eq.s32.totalorder %s47, 0
      %p430 = por %p428, %p429
      %p431 = scmp.ne.s32.totalorder %s419, %s420
      %p432 = scmp.eq.s32.totalorder %s48, 1
      %p433 = por %p431, %p432
      %p435 = scmp.ne.s32.totalorder %s420, %s434
      %p436 = scmp.eq.s32.totalorder %s48, 0
      %p437 = por %p435, %p436
      %s439 = sadd.s32 %s438, 1
      %p442 = scmp.eq.s32.totalorder %s42, 1
      %p443 = scmp.ne.s32.totalorder %s438, %s440
      %p444 = scmp.eq.s32.totalorder %s42, 0
      %p445 = por %p443, %p444
      %p446 = scmp.ne.s32.totalorder %s438, %s440
      %p447 = scmp.eq.s32.totalorder %s47, 1
      %p448 = por %p446, %p447
      %p449 = scmp.ne.s32.totalorder %s440, %s441
      %p450 = scmp.eq.s32.totalorder %s47, 0
      %p451 = por %p449, %p450
      %p452 = scmp.ne.s32.totalorder %s440, %s441
      %p453 = scmp.eq.s32.totalorder %s48, 1
      %p454 = por %p452, %p453
      %p456 = scmp.ne.s32.totalorder %s441, %s455
      %p457 = scmp.eq.s32.totalorder %s48, 0
      %p458 = por %p456, %p457
      %s460 = sadd.s32 %s459, 1
      %p463 = scmp.eq.s32.totalorder %s42, 1
      %p464 = scmp.ne.s32.totalorder %s459, %s461
      %p465 = scmp.eq.s32.totalorder %s42, 0
      %p466 = por %p464, %p465
      %p467 = scmp.ne.s32.totalorder %s459, %s461
      %p468 = scmp.eq.s32.totalorder %s47, 1
      %p469 = por %p467, %p468
      %p470 = scmp.ne.s32.totalorder %s461, %s462
      %p471 = scmp.eq.s32.totalorder %s47, 0
      %p472 = por %p470, %p471
      %p473 = scmp.ne.s32.totalorder %s461, %s462
      %p474 = scmp.eq.s32.totalorder %s48, 1
      %p475 = por %p473, %p474
      %p477 = scmp.ne.s32.totalorder %s462, %s476
      %p478 = scmp.eq.s32.totalorder %s48, 0
      %p479 = por %p477, %p478
      %s481 = sadd.s32 %s480, 1
      %p484 = scmp.eq.s32.totalorder %s42, 1
      %p485 = scmp.ne.s32.totalorder %s480, %s482
      %p486 = scmp.eq.s32.totalorder %s42, 0
      %p487 = por %p485, %p486
      %p488 = scmp.ne.s32.totalorder %s480, %s482
      %p489 = scmp.eq.s32.totalorder %s47, 1
      %p490 = por %p488, %p489
      %p491 = scmp.ne.s32.totalorder %s482, %s483
      %p492 = scmp.eq.s32.totalorder %s47, 0
      %p493 = por %p491, %p492
      %p494 = scmp.ne.s32.totalorder %s482, %s483
      %p495 = scmp.eq.s32.totalorder %s48, 1
      %p496 = por %p494, %p495
      %p498 = scmp.ne.s32.totalorder %s483, %s497
      %p499 = scmp.eq.s32.totalorder %s48, 0
      %p500 = por %p498, %p499
      %s502 = sadd.s32 %s501, 1
      %p505 = scmp.eq.s32.totalorder %s42, 1
      %p506 = scmp.ne.s32.totalorder %s501, %s503
      %p507 = scmp.eq.s32.totalorder %s42, 0
      %p508 = por %p506, %p507
      %p509 = scmp.ne.s32.totalorder %s501, %s503
      %p510 = scmp.eq.s32.totalorder %s47, 1
      %p511 = por %p509, %p510
      %p512 = scmp.ne.s32.totalorder %s503, %s504
      %p513 = scmp.eq.s32.totalorder %s47, 0
      %p514 = por %p512, %p513
      %p515 = scmp.ne.s32.totalorder %s503, %s504
      %p516 = scmp.eq.s32.totalorder %s48, 1
      %p517 = por %p515, %p516
      %p519 = scmp.ne.s32.totalorder %s504, %s518
      %p520 = scmp.eq.s32.totalorder %s48, 0
      %p521 = por %p519, %p520
      %s522 = ssub.s32 %s42, %s49
      %p523 = scmp.eq.s32.totalorder %s522, 0
      %s525 = sadd.s32 %s524, 1
      %s526 = scalar_select %p523, %s524, %s525
      %p529 = pneg %p523
      %p530 = scmp.eq.s32.totalorder %s42, 1
      %p531 = por %p529, %p530
      %p532 = scmp.ne.s32.totalorder %s524, %s527
      %p533 = scmp.eq.s32.totalorder %s42, 0
      %p534 = por %p532, %p533
      %p535 = scmp.ne.s32.totalorder %s524, %s527
      %p536 = scmp.eq.s32.totalorder %s47, 1
      %p537 = por %p535, %p536
      %p538 = scmp.ne.s32.totalorder %s527, %s528
      %p539 = scmp.eq.s32.totalorder %s47, 0
      %p540 = por %p538, %p539
      %p541 = scmp.ne.s32.totalorder %s527, %s528
      %p542 = scmp.eq.s32.totalorder %s48, 1
      %p543 = por %p541, %p542
      %p545 = scmp.ne.s32.totalorder %s528, %s544
      %p546 = scmp.eq.s32.totalorder %s48, 0
      %p547 = por %p545, %p546
      %p548 = scmp.le.s32.totalorder 1, %s42
      %p549 = scmp.lt.s32.totalorder %s42, 3
      %p550 = pnand %p548, %p549
      %p551 = pneg %p550
      // Predicated region
      $region9: #{tpu_custom_call.1} parent=5 // pred_check
        _
      $region10: #{tpu_custom_call.1} parent=5 // pred_check_branch
        %553 = sbr.rel (%p550) target = $region12
      $region11: #{tpu_custom_call.1} parent=5 // pred_region
        %s554 = ssub.s32 %s42, 1
        // Predicated region
        $region13: #{tpu_custom_call.1} parent=11 // pred_check
          %p555 = pneg %p115
        $region14: #{tpu_custom_call.1} parent=11 // pred_check_branch
          %557 = sbr.rel (%p555) target = $region16
        $region15: #{tpu_custom_call.1} parent=11 // pred_region
          %s559 = ssub.s32 256, 256
          %560 = vsyncadd [#allocation6], %s559
          %s561 = sshll.u32 [#allocation5], 4
          %s562 = int_to_ptr.vmem [resolvable:$true] %s561
          %567 = dma.hbm_to_vmem [thread:$0]  %s2, 256, %s562, [#allocation6], 128, 128, 8
        $region16: #{tpu_custom_call.1} parent=11 // pred_fallthru
          _
        // Predicated region
        $region17: #{tpu_custom_call.1} parent=11 // pred_check
          %p568 = pneg %p136
        $region18: #{tpu_custom_call.1} parent=11 // pred_check_branch
          %570 = sbr.rel (%p568) target = $region20
        $region19: #{tpu_custom_call.1} parent=11 // pred_region
          %s572 = ssub.s32 128, 128
          %573 = vsyncadd [#allocation6], %s572
          %s575 = sshll.u32 [#allocation7], 4
          %s576 = int_to_ptr.vmem [resolvable:$true] %s575
          %578 = dma.hbm_to_vmem [thread:$0]  %s3, 128, %s576, [#allocation6]
        $region20: #{tpu_custom_call.1} parent=11 // pred_fallthru
          _
        // Predicated region
        $region21: #{tpu_custom_call.1} parent=11 // pred_check
          %p579 = pneg %p157
        $region22: #{tpu_custom_call.1} parent=11 // pred_check_branch
          %581 = sbr.rel (%p579) target = $region24
        $region23: #{tpu_custom_call.1} parent=11 // pred_region
          %s583 = ssub.s32 256, 256
          %584 = vsyncadd [#allocation9], %s583
          %s585 = sshll.u32 [#allocation8], 4
          %s586 = int_to_ptr.vmem [resolvable:$true] %s585
          %591 = dma.hbm_to_vmem [thread:$0]  %s4, 256, %s586, [#allocation9], 64, 64, 4
        $region24: #{tpu_custom_call.1} parent=11 // pred_fallthru
          _
        // Predicated region
        $region25: #{tpu_custom_call.1} parent=11 // pred_check
          %p592 = pneg %p178
        $region26: #{tpu_custom_call.1} parent=11 // pred_check_branch
          %594 = sbr.rel (%p592) target = $region28
        $region27: #{tpu_custom_call.1} parent=11 // pred_region
          %s596 = ssub.s32 256, 256
          %597 = vsyncadd [#allocation9], %s596
          %s598 = sshll.u32 [#allocation10], 4
          %s599 = int_to_ptr.vmem [resolvable:$true] %s598
          %604 = dma.hbm_to_vmem [thread:$0]  %s5, 256, %s599, [#allocation9], 64, 64, 4
        $region28: #{tpu_custom_call.1} parent=11 // pred_fallthru
          _
        // Predicated region
        $region29: #{tpu_custom_call.1} parent=11 // pred_check
          %p605 = pneg %p199
        $region30: #{tpu_custom_call.1} parent=11 // pred_check_branch
          %607 = sbr.rel (%p605) target = $region32
        $region31: #{tpu_custom_call.1} parent=11 // pred_region
          %s609 = ssub.s32 256, 256
          %610 = vsyncadd [#allocation12], %s609
          %s611 = sshll.u32 [#allocation11], 4
          %s612 = int_to_ptr.vmem [resolvable:$true] %s611
          %617 = dma.hbm_to_vmem [thread:$0]  %s6, 256, %s612, [#allocation12], 64, 64, 4
        $region32: #{tpu_custom_call.1} parent=11 // pred_fallthru
          _
        // Predicated region
        $region33: #{tpu_custom_call.1} parent=11 // pred_check
          %p618 = pneg %p220
        $region34: #{tpu_custom_call.1} parent=11 // pred_check_branch
          %620 = sbr.rel (%p618) target = $region36
        $region35: #{tpu_custom_call.1} parent=11 // pred_region
          %s622 = ssub.s32 256, 256
          %623 = vsyncadd [#allocation12], %s622
          %s624 = sshll.u32 [#allocation13], 4
          %s625 = int_to_ptr.vmem [resolvable:$true] %s624
          %630 = dma.hbm_to_vmem [thread:$0]  %s7, 256, %s625, [#allocation12], 64, 64, 4
        $region36: #{tpu_custom_call.1} parent=11 // pred_fallthru
          _
        // Predicated region
        $region37: #{tpu_custom_call.1} parent=11 // pred_check
          %p631 = pneg %p241
        $region38: #{tpu_custom_call.1} parent=11 // pred_check_branch
          %633 = sbr.rel (%p631) target = $region40
        $region39: #{tpu_custom_call.1} parent=11 // pred_region
          _
        $region40: #{tpu_custom_call.1} parent=11 // pred_fallthru
          _
        // Predicated region
        $region41: #{tpu_custom_call.1} parent=11 // pred_check
          %p634 = pneg %p262
        $region42: #{tpu_custom_call.1} parent=11 // pred_check_branch
          %636 = sbr.rel (%p634) target = $region44
        $region43: #{tpu_custom_call.1} parent=11 // pred_region
          %s638 = ssub.s32 64, 64
          %639 = vsyncadd [#allocation15], %s638
          %s641 = sshll.u32 [#allocation14], 4
          %s642 = int_to_ptr.vmem [resolvable:$true] %s641
          %644 = dma.hbm_to_vmem [thread:$0]  %s9, 64, %s642, [#allocation15]
        $region44: #{tpu_custom_call.1} parent=11 // pred_fallthru
          _
        // Predicated region
        $region45: #{tpu_custom_call.1} parent=11 // pred_check
          %p645 = pneg %p283
        $region46: #{tpu_custom_call.1} parent=11 // pred_check_branch
          %647 = sbr.rel (%p645) target = $region48
        $region47: #{tpu_custom_call.1} parent=11 // pred_region
          %s649 = ssub.s32 16, 16
          %650 = vsyncadd [#allocation15], %s649
          %s652 = sshll.u32 [#allocation16], 4
          %s653 = int_to_ptr.vmem [resolvable:$true] %s652
          %655 = dma.hbm_to_vmem [thread:$0]  %s10, 16, %s653, [#allocation15]
        $region48: #{tpu_custom_call.1} parent=11 // pred_fallthru
          _
        // Predicated region
        $region49: #{tpu_custom_call.1} parent=11 // pred_check
          %p656 = pneg %p304
        $region50: #{tpu_custom_call.1} parent=11 // pred_check_branch
          %658 = sbr.rel (%p656) target = $region52
        $region51: #{tpu_custom_call.1} parent=11 // pred_region
          %s660 = ssub.s32 16, 16
          %661 = vsyncadd [#allocation18], %s660
          %s663 = sshll.u32 [#allocation17], 4
          %s664 = int_to_ptr.vmem [resolvable:$true] %s663
          %666 = dma.hbm_to_vmem [thread:$0]  %s11, 16, %s664, [#allocation18]
        $region52: #{tpu_custom_call.1} parent=11 // pred_fallthru
          _
        // Predicated region
        $region53: #{tpu_custom_call.1} parent=11 // pred_check
          %p667 = pneg %p325
        $region54: #{tpu_custom_call.1} parent=11 // pred_check_branch
          %669 = sbr.rel (%p667) target = $region56
        $region55: #{tpu_custom_call.1} parent=11 // pred_region
          %s671 = ssub.s32 16, 16
          %672 = vsyncadd [#allocation18], %s671
          %s674 = sshll.u32 [#allocation19], 4
          %s675 = int_to_ptr.vmem [resolvable:$true] %s674
          %677 = dma.hbm_to_vmem [thread:$0]  %s12, 16, %s675, [#allocation18]
        $region56: #{tpu_custom_call.1} parent=11 // pred_fallthru
          _
        // Predicated region
        $region57: #{tpu_custom_call.1} parent=11 // pred_check
          %p678 = pneg %p346
        $region58: #{tpu_custom_call.1} parent=11 // pred_check_branch
          %680 = sbr.rel (%p678) target = $region60
        $region59: #{tpu_custom_call.1} parent=11 // pred_region
          %s682 = ssub.s32 16, 16
          %683 = vsyncadd [#allocation21], %s682
          %s685 = sshll.u32 [#allocation20], 4
          %s686 = int_to_ptr.vmem [resolvable:$true] %s685
          %688 = dma.hbm_to_vmem [thread:$0]  %s13, 16, %s686, [#allocation21]
        $region60: #{tpu_custom_call.1} parent=11 // pred_fallthru
          _
        // Predicated region
        $region61: #{tpu_custom_call.1} parent=11 // pred_check
          %p689 = pneg %p367
        $region62: #{tpu_custom_call.1} parent=11 // pred_check_branch
          %691 = sbr.rel (%p689) target = $region64
        $region63: #{tpu_custom_call.1} parent=11 // pred_region
          %s693 = ssub.s32 256, 256
          %694 = vsyncadd [#allocation21], %s693
          %s695 = sshll.u32 [#allocation22], 4
          %s696 = int_to_ptr.vmem [resolvable:$true] %s695
          %701 = dma.hbm_to_vmem [thread:$0]  %s14, 256, %s696, [#allocation21], 64, 64, 4
        $region64: #{tpu_custom_call.1} parent=11 // pred_fallthru
          _
        // Predicated region
        $region65: #{tpu_custom_call.1} parent=11 // pred_check
          %p702 = pneg %p388
        $region66: #{tpu_custom_call.1} parent=11 // pred_check_branch
          %704 = sbr.rel (%p702) target = $region68
        $region67: #{tpu_custom_call.1} parent=11 // pred_region
          %s706 = ssub.s32 16, 16
          %707 = vsyncadd [#allocation24], %s706
          %s709 = sshll.u32 [#allocation23], 4
          %s710 = int_to_ptr.vmem [resolvable:$true] %s709
          %712 = dma.hbm_to_vmem [thread:$0]  %s15, 16, %s710, [#allocation24]
        $region68: #{tpu_custom_call.1} parent=11 // pred_fallthru
          _
        // Predicated region
        $region69: #{tpu_custom_call.1} parent=11 // pred_check
          %p713 = pneg %p409
        $region70: #{tpu_custom_call.1} parent=11 // pred_check_branch
          %715 = sbr.rel (%p713) target = $region72
        $region71: #{tpu_custom_call.1} parent=11 // pred_region
          _
        $region72: #{tpu_custom_call.1} parent=11 // pred_fallthru
          _
        // Predicated region
        $region73: #{tpu_custom_call.1} parent=11 // pred_check
          %p716 = pneg %p430
        $region74: #{tpu_custom_call.1} parent=11 // pred_check_branch
          %718 = sbr.rel (%p716) target = $region76
        $region75: #{tpu_custom_call.1} parent=11 // pred_region
          %s720 = ssub.s32 16, 16
          %721 = vsyncadd [#allocation24], %s720
          %s723 = sshll.u32 [#allocation25], 4
          %s724 = int_to_ptr.vmem [resolvable:$true] %s723
          %726 = dma.hbm_to_vmem [thread:$0]  %s17, 16, %s724, [#allocation24]
        $region76: #{tpu_custom_call.1} parent=11 // pred_fallthru
          _
        // Predicated region
        $region77: #{tpu_custom_call.1} parent=11 // pred_check
          %p727 = pneg %p451
        $region78: #{tpu_custom_call.1} parent=11 // pred_check_branch
          %729 = sbr.rel (%p727) target = $region80
        $region79: #{tpu_custom_call.1} parent=11 // pred_region
          _
        $region80: #{tpu_custom_call.1} parent=11 // pred_fallthru
          _
        // Predicated region
        $region81: #{tpu_custom_call.1} parent=11 // pred_check
          %p730 = pneg %p472
        $region82: #{tpu_custom_call.1} parent=11 // pred_check_branch
          %732 = sbr.rel (%p730) target = $region84
        $region83: #{tpu_custom_call.1} parent=11 // pred_region
          %s734 = ssub.s32 64, 64
          %735 = vsyncadd [#allocation27], %s734
          %s737 = sshll.u32 [#allocation26], 4
          %s738 = int_to_ptr.vmem [resolvable:$true] %s737
          %740 = dma.hbm_to_vmem [thread:$0]  %s19, 64, %s738, [#allocation27]
        $region84: #{tpu_custom_call.1} parent=11 // pred_fallthru
          _
        // Predicated region
        $region85: #{tpu_custom_call.1} parent=11 // pred_check
          %p741 = pneg %p493
        $region86: #{tpu_custom_call.1} parent=11 // pred_check_branch
          %743 = sbr.rel (%p741) target = $region88
        $region87: #{tpu_custom_call.1} parent=11 // pred_region
          %s745 = ssub.s32 1536, 1536
          %746 = vsyncadd [#allocation27], %s745
          %s747 = sshll.u32 [#allocation28], 4
          %s748 = int_to_ptr.vmem [resolvable:$true] %s747
          %753 = dma.hbm_to_vmem [thread:$0]  %s20, 1536, %s748, [#allocation27], 64, 64, 4
        $region88: #{tpu_custom_call.1} parent=11 // pred_fallthru
          _
        // Predicated region
        $region89: #{tpu_custom_call.1} parent=11 // pred_check
          %p754 = pneg %p514
        $region90: #{tpu_custom_call.1} parent=11 // pred_check_branch
          %756 = sbr.rel (%p754) target = $region92
        $region91: #{tpu_custom_call.1} parent=11 // pred_region
          _
        $region92: #{tpu_custom_call.1} parent=11 // pred_fallthru
          _
      $region12: #{tpu_custom_call.1} parent=5 // pred_fallthru
        _
      %p757 = scmp.lt.s32.totalorder %s42, 2
      // Predicated region
      $region93: #{tpu_custom_call.1} parent=5 // pred_check
        %p758 = pneg %p757
      $region94: #{tpu_custom_call.1} parent=5 // pred_check_branch
        %760 = sbr.rel (%p758) target = $region96
      $region95: #{tpu_custom_call.1} parent=5 // pred_region
        // Predicated region
        $region97: #{tpu_custom_call.1} parent=95 // pred_check
          %p761 = pneg %p62
        $region98: #{tpu_custom_call.1} parent=95 // pred_check_branch
          %763 = sbr.rel (%p761) target = $region100
        $region99: #{tpu_custom_call.1} parent=95 // pred_region
          %p764 = scmp.lt.s32.totalorder %s42, 1
          %s765 = scalar_select %p764, %s42, 1
          %s766 = smul.addr %s765, 8
          %s767 = scalar_lea.vmem %s0, %s766
        $region100: #{tpu_custom_call.1} parent=95 // pred_fallthru
          _
        // Predicated region
        $region101: #{tpu_custom_call.1} parent=95 // pred_check
          %p768 = pneg %p88
        $region102: #{tpu_custom_call.1} parent=95 // pred_check_branch
          %770 = sbr.rel (%p768) target = $region104
        $region103: #{tpu_custom_call.1} parent=95 // pred_region
          %s771 = sand.u32 %s78, 1
          %s772 = scalar_lea.sflag [#allocation3], %s771
          %s773 = sand.u32 %s78, 1
          %s774 = smul.addr %s773, 8
          %s775 = scalar_lea.vmem [#allocation2], %s774
          %s777 = ssub.s32 128, 128
          %778 = vsyncadd %s772, %s777
          %s779 = smul.addr %s42, 128
          %s780 = scalar_lea.hbm %s1, %s779
          %s782 = sshll.u32 %s775, 4
          %s783 = int_to_ptr.vmem [resolvable:$true] %s782
          %785 = dma.hbm_to_vmem [thread:$0]  %s780, 128, %s783, %s772
        $region104: #{tpu_custom_call.1} parent=95 // pred_fallthru
          _
      $region96: #{tpu_custom_call.1} parent=5 // pred_fallthru
        _
      %p786 = scmp.le.s32.totalorder 1, %s42
      %p787 = scmp.lt.s32.totalorder %s42, 3
      %p788 = pnand %p786, %p787
      %p789 = pneg %p788
      // Predicated region
      $region105: #{tpu_custom_call.1} parent=5 // pred_check
        _
      $region106: #{tpu_custom_call.1} parent=5 // pred_check_branch
        %791 = sbr.rel (%p788) target = $region108
      $region107: #{tpu_custom_call.1} parent=5 // pred_region
        %s792 = ssub.s32 %s42, 1
        %s793 = sand.u32 %s81, 1
        %s794 = scalar_lea.sflag [#allocation3], %s793
        %s795 = sand.u32 %s81, 1
        %s796 = smul.addr %s795, 8
        %s797 = scalar_lea.vmem [#allocation2], %s796
        // Predicated region
        $region109: #{tpu_custom_call.1} parent=107 // pred_check
          %p798 = pneg %p94
        $region110: #{tpu_custom_call.1} parent=107 // pred_check_branch
          %800 = sbr.rel (%p798) target = $region112
        $region111: #{tpu_custom_call.1} parent=107 // pred_region
          %801 = dma.done %s794, 128
        $region112: #{tpu_custom_call.1} parent=107 // pred_fallthru
          _
        // Predicated region
        $region113: #{tpu_custom_call.1} parent=107 // pred_check
          %p802 = pneg %p115
        $region114: #{tpu_custom_call.1} parent=107 // pred_check_branch
          %804 = sbr.rel (%p802) target = $region116
        $region115: #{tpu_custom_call.1} parent=107 // pred_region
          %805 = dma.done [#allocation6], 256
        $region116: #{tpu_custom_call.1} parent=107 // pred_fallthru
          _
        // Predicated region
        $region117: #{tpu_custom_call.1} parent=107 // pred_check
          %p806 = pneg %p136
        $region118: #{tpu_custom_call.1} parent=107 // pred_check_branch
          %808 = sbr.rel (%p806) target = $region120
        $region119: #{tpu_custom_call.1} parent=107 // pred_region
          %809 = dma.done [#allocation6], 128
        $region120: #{tpu_custom_call.1} parent=107 // pred_fallthru
          _
        // Predicated region
        $region121: #{tpu_custom_call.1} parent=107 // pred_check
          %p810 = pneg %p157
        $region122: #{tpu_custom_call.1} parent=107 // pred_check_branch
          %812 = sbr.rel (%p810) target = $region124
        $region123: #{tpu_custom_call.1} parent=107 // pred_region
          %813 = dma.done [#allocation9], 256
        $region124: #{tpu_custom_call.1} parent=107 // pred_fallthru
          _
        // Predicated region
        $region125: #{tpu_custom_call.1} parent=107 // pred_check
          %p814 = pneg %p178
        $region126: #{tpu_custom_call.1} parent=107 // pred_check_branch
          %816 = sbr.rel (%p814) target = $region128
        $region127: #{tpu_custom_call.1} parent=107 // pred_region
          %817 = dma.done [#allocation9], 256
        $region128: #{tpu_custom_call.1} parent=107 // pred_fallthru
          _
        // Predicated region
        $region129: #{tpu_custom_call.1} parent=107 // pred_check
          %p818 = pneg %p199
        $region130: #{tpu_custom_call.1} parent=107 // pred_check_branch
          %820 = sbr.rel (%p818) target = $region132
        $region131: #{tpu_custom_call.1} parent=107 // pred_region
          %821 = dma.done [#allocation12], 256
        $region132: #{tpu_custom_call.1} parent=107 // pred_fallthru
          _
        // Predicated region
        $region133: #{tpu_custom_call.1} parent=107 // pred_check
          %p822 = pneg %p220
        $region134: #{tpu_custom_call.1} parent=107 // pred_check_branch
          %824 = sbr.rel (%p822) target = $region136
        $region135: #{tpu_custom_call.1} parent=107 // pred_region
          %825 = dma.done [#allocation12], 256
        $region136: #{tpu_custom_call.1} parent=107 // pred_fallthru
          _
        // Predicated region
        $region137: #{tpu_custom_call.1} parent=107 // pred_check
          %p826 = pneg %p262
        $region138: #{tpu_custom_call.1} parent=107 // pred_check_branch
          %828 = sbr.rel (%p826) target = $region140
        $region139: #{tpu_custom_call.1} parent=107 // pred_region
          %829 = dma.done [#allocation15], 64
        $region140: #{tpu_custom_call.1} parent=107 // pred_fallthru
          _
        // Predicated region
        $region141: #{tpu_custom_call.1} parent=107 // pred_check
          %p830 = pneg %p283
        $region142: #{tpu_custom_call.1} parent=107 // pred_check_branch
          %832 = sbr.rel (%p830) target = $region144
        $region143: #{tpu_custom_call.1} parent=107 // pred_region
          %833 = dma.done [#allocation15], 16
        $region144: #{tpu_custom_call.1} parent=107 // pred_fallthru
          _
        // Predicated region
        $region145: #{tpu_custom_call.1} parent=107 // pred_check
          %p834 = pneg %p304
        $region146: #{tpu_custom_call.1} parent=107 // pred_check_branch
          %836 = sbr.rel (%p834) target = $region148
        $region147: #{tpu_custom_call.1} parent=107 // pred_region
          %837 = dma.done [#allocation18], 16
        $region148: #{tpu_custom_call.1} parent=107 // pred_fallthru
          _
        // Predicated region
        $region149: #{tpu_custom_call.1} parent=107 // pred_check
          %p838 = pneg %p325
        $region150: #{tpu_custom_call.1} parent=107 // pred_check_branch
          %840 = sbr.rel (%p838) target = $region152
        $region151: #{tpu_custom_call.1} parent=107 // pred_region
          %841 = dma.done [#allocation18], 16
        $region152: #{tpu_custom_call.1} parent=107 // pred_fallthru
          _
        // Predicated region
        $region153: #{tpu_custom_call.1} parent=107 // pred_check
          %p842 = pneg %p346
        $region154: #{tpu_custom_call.1} parent=107 // pred_check_branch
          %844 = sbr.rel (%p842) target = $region156
        $region155: #{tpu_custom_call.1} parent=107 // pred_region
          %845 = dma.done [#allocation21], 16
        $region156: #{tpu_custom_call.1} parent=107 // pred_fallthru
          _
        // Predicated region
        $region157: #{tpu_custom_call.1} parent=107 // pred_check
          %p846 = pneg %p367
        $region158: #{tpu_custom_call.1} parent=107 // pred_check_branch
          %848 = sbr.rel (%p846) target = $region160
        $region159: #{tpu_custom_call.1} parent=107 // pred_region
          %849 = dma.done [#allocation21], 256
        $region160: #{tpu_custom_call.1} parent=107 // pred_fallthru
          _
        // Predicated region
        $region161: #{tpu_custom_call.1} parent=107 // pred_check
          %p850 = pneg %p388
        $region162: #{tpu_custom_call.1} parent=107 // pred_check_branch
          %852 = sbr.rel (%p850) target = $region164
        $region163: #{tpu_custom_call.1} parent=107 // pred_region
          %853 = dma.done [#allocation24], 16
        $region164: #{tpu_custom_call.1} parent=107 // pred_fallthru
          _
        // Predicated region
        $region165: #{tpu_custom_call.1} parent=107 // pred_check
          %p854 = pneg %p430
        $region166: #{tpu_custom_call.1} parent=107 // pred_check_branch
          %856 = sbr.rel (%p854) target = $region168
        $region167: #{tpu_custom_call.1} parent=107 // pred_region
          %857 = dma.done [#allocation24], 16
        $region168: #{tpu_custom_call.1} parent=107 // pred_fallthru
          _
        // Predicated region
        $region169: #{tpu_custom_call.1} parent=107 // pred_check
          %p858 = pneg %p472
        $region170: #{tpu_custom_call.1} parent=107 // pred_check_branch
          %860 = sbr.rel (%p858) target = $region172
        $region171: #{tpu_custom_call.1} parent=107 // pred_region
          %861 = dma.done [#allocation27], 64
        $region172: #{tpu_custom_call.1} parent=107 // pred_fallthru
          _
        // Predicated region
        $region173: #{tpu_custom_call.1} parent=107 // pred_check
          %p862 = pneg %p493
        $region174: #{tpu_custom_call.1} parent=107 // pred_check_branch
          %864 = sbr.rel (%p862) target = $region176
        $region175: #{tpu_custom_call.1} parent=107 // pred_region
          %865 = dma.done [#allocation27], 1536
        $region176: #{tpu_custom_call.1} parent=107 // pred_fallthru
          _
        %p866 = scmp.lt.s32.totalorder %s47, 1
        %s867 = scalar_select %p866, %s47, 1
        %s868 = smul.addr %s867, 8
        %s869 = scalar_lea.vmem %s0, %s868
        %p870 = pneg %p68
        %p871 = pneg %p65
        %s872 = sand.u32 %s81, 1
        %s873 = scalar_lea.sflag [#allocation3], %s872
        %s874 = sand.u32 %s81, 1
        %s875 = smul.addr %s874, 8
        %s876 = scalar_lea.vmem [#allocation2], %s875
        %p877 = pneg %p94
        %p878 = pneg %p91
        %p879 = pneg %p115
        %p880 = pneg %p112
        %p881 = pneg %p136
        %p882 = pneg %p133
        %p883 = pneg %p157
        %p884 = pneg %p154
        %p885 = pneg %p178
        %p886 = pneg %p175
        %p887 = pneg %p199
        %p888 = pneg %p196
        %p889 = pneg %p220
        %p890 = pneg %p217
        %p891 = pneg %p241
        %p892 = pneg %p238
        %p893 = pneg %p262
        %p894 = pneg %p259
        %p895 = pneg %p283
        %p896 = pneg %p280
        %p897 = pneg %p304
        %p898 = pneg %p301
        %p899 = pneg %p325
        %p900 = pneg %p322
        %p901 = pneg %p346
        %p902 = pneg %p343
        %p903 = pneg %p367
        %p904 = pneg %p364
        %p905 = pneg %p388
        %p906 = pneg %p385
        %p907 = pneg %p409
        %p908 = pneg %p406
        %p909 = pneg %p430
        %p910 = pneg %p427
        %p911 = pneg %p451
        %p912 = pneg %p448
        %p913 = pneg %p472
        %p914 = pneg %p469
        %p915 = pneg %p493
        %p916 = pneg %p490
        %p917 = pneg %p514
        %p918 = pneg %p511
        %p919 = pneg %p540
        %p920 = pneg %p537
        %s921 = sand.u32 %s527, 1
        %s922 = scalar_lea.sflag [#allocation4], %s921
        %s923 = sand.u32 %s527, 1
        %s924 = smul.addr %s923, 8
        %s925 = scalar_lea.vmem [#allocation29], %s924
        %p926 = scmp.lt.s32.totalorder %s47, 1
        %s927 = scalar_select %p926, %s47, 1
        %s928 = smul.addr %s927, 8
        %s929 = scalar_lea.vmem %s0, %s928
        %v931 = vld [vmem:[%s929] sm:$0xff]
        %v932 = vld [vmem:[%s797] sm:$0xff]
        %v933 = vld [vmem:[#allocation5] sm:$0xff]
        %v934 = vld [vmem:[#allocation5 + $0x8] sm:$0xff]
        %v935 = vld [vmem:[#allocation7] sm:$0xff]
        %vm936 = vcmp.gt.f32.partialorder %v935, 0.5
        %v937 = vld [vmem:[#allocation16] sm:$0x1]
        %v938 = vld [vmem:[#allocation17] sm:$0x1]
        %vm939 = vcmask 261120
        %v940 = vsel %vm939, %v931, 0.0
        %941 = vadd.xlane.f32.xlu0 %v940
        %v942 = vpop.xlane.xlu0 %941
        %v943 = vrcp.pop 32.0
        %v944 = vmul.f32 %v942, %v943
        %v945 = vsub.f32 %v931, %v944
        %v946 = vmul.f32 %v945, %v945
        %v947 = vsel %vm939, %v946, 0.0
        %948 = vadd.xlane.f32.xlu0 %v947
        %v949 = vpop.xlane.xlu0 %948
        %v950 = vmul.f32 %v949, %v943
        %v951 = vadd.f32 %v950, 1e-05
        %v952 = vrsqrt.pop %v951
        %v953 = vmul.f32 %v945, %v952
        %v955 = vlaneseq
        %v956 = vshrl.u32 %v955, 7
        %v957 = vsub.s32 0, %v956
        %v958 = vrot.slane %v937, %v957
        %v960 = vmul.f32 %v953, %v958
        %v962 = vlaneseq
        %v963 = vshrl.u32 %v962, 7
        %v964 = vsub.s32 0, %v963
        %v965 = vrot.slane %v938, %v964
        %v967 = vadd.f32 %v960, %v965
        %v968 = vld [vmem:[#allocation10] sm:$0xf]
        %v969 = vld [vmem:[#allocation10 + $0x4] sm:$0xf]
        %v970 = vld [vmem:[#allocation10 + $0x8] sm:$0xf]
        %v971 = vld [vmem:[#allocation10 + $0xc] sm:$0xf]
        %v972 = vpack.c.bf16 %v967, %v932
        %v977 = vunpack.c.l.b16 %v968
        %v978 = vunpack.c.l.b16 %v969
        %v979 = vunpack.c.l.b16 %v970
        %v980 = vunpack.c.l.b16 %v971
        %v981 = vpack.c.b16 %v978, %v977
        %v982 = vpack.c.b16 %v980, %v979
        %v986 = vsel %vm939, %v972, 0
        %988 = vmatprep.subr.bf16.mxu0 0
        %989 = vmatpush1.bf16.msra.mxu0 %v981
        %990 = vmatprep.subr.bf16.mxu0 0
        %991 = vmatpush1.bf16.msra.mxu0 %v982
        %992 = vmatprep.subr.bf16.mxu0 0
        %993 = vmatpush1.bf16.msra.mxu0 0
        %994 = vmatprep.subr.bf16.mxu0 0
        %995 = vmatpush1.bf16.msra.mxu0 0
        %996 = vmatprep.subr.bf16.mxu0 0
        %997 = vmatpush1.bf16.msra.mxu0 0
        %998 = vmatprep.subr.bf16.mxu0 0
        %999 = vmatpush1.bf16.msra.mxu0 0
        %1000 = vmatprep.subr.bf16.mxu0 0
        %1001 = vmatpush1.bf16.msra.mxu0 0
        %1002 = vmatprep.subr.bf16.mxu0 0
        %1003 = vmatpush1.bf16.msra.mxu0 0
        %1004 = vmatprep.subr.bf16.mxu0 0
        %1005 = vmatpush1.bf16.msra.mxu0 0
        %1006 = vmatprep.subr.bf16.mxu0 0
        %1007 = vmatpush1.bf16.msra.mxu0 0
        %1008 = vmatprep.subr.bf16.mxu0 0
        %1009 = vmatpush1.bf16.msra.mxu0 0
        %1010 = vmatprep.subr.bf16.mxu0 0
        %1011 = vmatpush1.bf16.msra.mxu0 0
        %1012 = vmatprep.subr.bf16.mxu0 0
        %1013 = vmatpush1.bf16.msra.mxu0 0
        %1014 = vmatprep.subr.bf16.mxu0 0
        %1015 = vmatpush1.bf16.msra.mxu0 0
        %1016 = vmatprep.subr.bf16.mxu0 0
        %1017 = vmatpush1.bf16.msra.mxu0 0
        %1018 = vmatprep.subr.bf16.mxu0 0
        %1019 = vmatpush1.bf16.msra.mxu0 0
        %1020 = vmatprep.mubr.bf16.mxu0 0
        %1021 = vmatmul.mubr.bf16.gmra.mrb[0].mxu0 %v986
        %v1022 = vpop.f32.mrb[0].mxu0
        %v1023 = vadd.f32 0.0, %v1022
        %v1024 = vpop.f32.mrb[0].mxu0
        %v1025 = vpop.f32.mrb[0].mxu0
        %v1026 = vadd.f32 0.0, %v1025
        %v1027 = vpop.f32.mrb[0].mxu0
        %1028 = vdwg.mxu0
        %v1029 = vld [vmem:[#allocation8] sm:$0xf]
        %v1030 = vld [vmem:[#allocation8 + $0x4] sm:$0xf]
        %v1031 = vld [vmem:[#allocation8 + $0x8] sm:$0xf]
        %v1032 = vld [vmem:[#allocation8 + $0xc] sm:$0xf]
        %v1033 = vpack.c.bf16 %v967, %v967
        %v1038 = vunpack.c.l.b16 %v1029
        %v1039 = vunpack.c.l.b16 %v1030
        %v1040 = vunpack.c.l.b16 %v1031
        %v1041 = vunpack.c.l.b16 %v1032
        %v1042 = vpack.c.b16 %v1039, %v1038
        %v1043 = vpack.c.b16 %v1041, %v1040
        %v1047 = vsel %vm939, %v1033, 0
        %1049 = vmatprep.subr.bf16.mxu0 0
        %1050 = vmatpush1.bf16.msra.mxu0 %v1042
        %1051 = vmatprep.subr.bf16.mxu0 0
        %1052 = vmatpush1.bf16.msra.mxu0 %v1043
        %1053 = vmatprep.subr.bf16.mxu0 0
        %1054 = vmatpush1.bf16.msra.mxu0 0
        %1055 = vmatprep.subr.bf16.mxu0 0
        %1056 = vmatpush1.bf16.msra.mxu0 0
        %1057 = vmatprep.subr.bf16.mxu0 0
        %1058 = vmatpush1.bf16.msra.mxu0 0
        %1059 = vmatprep.subr.bf16.mxu0 0
        %1060 = vmatpush1.bf16.msra.mxu0 0
        %1061 = vmatprep.subr.bf16.mxu0 0
        %1062 = vmatpush1.bf16.msra.mxu0 0
        %1063 = vmatprep.subr.bf16.mxu0 0
        %1064 = vmatpush1.bf16.msra.mxu0 0
        %1065 = vmatprep.subr.bf16.mxu0 0
        %1066 = vmatpush1.bf16.msra.mxu0 0
        %1067 = vmatprep.subr.bf16.mxu0 0
        %1068 = vmatpush1.bf16.msra.mxu0 0
        %1069 = vmatprep.subr.bf16.mxu0 0
        %1070 = vmatpush1.bf16.msra.mxu0 0
        %1071 = vmatprep.subr.bf16.mxu0 0
        %1072 = vmatpush1.bf16.msra.mxu0 0
        %1073 = vmatprep.subr.bf16.mxu0 0
        %1074 = vmatpush1.bf16.msra.mxu0 0
        %1075 = vmatprep.subr.bf16.mxu0 0
        %1076 = vmatpush1.bf16.msra.mxu0 0
        %1077 = vmatprep.subr.bf16.mxu0 0
        %1078 = vmatpush1.bf16.msra.mxu0 0
        %1079 = vmatprep.subr.bf16.mxu0 0
        %1080 = vmatpush1.bf16.msra.mxu0 0
        %1081 = vmatprep.mubr.bf16.mxu0 0
        %1082 = vmatmul.mubr.bf16.gmra.mrb[0].mxu0 %v1047
        %v1083 = vpop.f32.mrb[0].mxu0
        %v1084 = vadd.f32 0.0, %v1083
        %v1085 = vpop.f32.mrb[0].mxu0
        %v1086 = vpop.f32.mrb[0].mxu0
        %v1087 = vpop.f32.mrb[0].mxu0
        %1088 = vdwg.mxu0
        %v1089 = vld [vmem:[#allocation11] sm:$0xf]
        %v1090 = vld [vmem:[#allocation11 + $0x4] sm:$0xf]
        %v1091 = vld [vmem:[#allocation11 + $0x8] sm:$0xf]
        %v1092 = vld [vmem:[#allocation11 + $0xc] sm:$0xf]
        %v1093 = vpack.c.bf16 %v934, %v933
        %v1098 = vunpack.c.l.b16 %v1089
        %v1099 = vunpack.c.l.b16 %v1090
        %v1100 = vunpack.c.l.b16 %v1091
        %v1101 = vunpack.c.l.b16 %v1092
        %v1102 = vpack.c.b16 %v1099, %v1098
        %v1103 = vpack.c.b16 %v1101, %v1100
        %v1107 = vsel %vm939, %v1093, 0
        %1109 = vmatprep.subr.bf16.mxu0 0
        %1110 = vmatpush1.bf16.msra.mxu0 %v1102
        %1111 = vmatprep.subr.bf16.mxu0 0
        %1112 = vmatpush1.bf16.msra.mxu0 %v1103
        %1113 = vmatprep.subr.bf16.mxu0 0
        %1114 = vmatpush1.bf16.msra.mxu0 0
        %1115 = vmatprep.subr.bf16.mxu0 0
        %1116 = vmatpush1.bf16.msra.mxu0 0
        %1117 = vmatprep.subr.bf16.mxu0 0
        %1118 = vmatpush1.bf16.msra.mxu0 0
        %1119 = vmatprep.subr.bf16.mxu0 0
        %1120 = vmatpush1.bf16.msra.mxu0 0
        %1121 = vmatprep.subr.bf16.mxu0 0
        %1122 = vmatpush1.bf16.msra.mxu0 0
        %1123 = vmatprep.subr.bf16.mxu0 0
        %1124 = vmatpush1.bf16.msra.mxu0 0
        %1125 = vmatprep.subr.bf16.mxu0 0
        %1126 = vmatpush1.bf16.msra.mxu0 0
        %1127 = vmatprep.subr.bf16.mxu0 0
        %1128 = vmatpush1.bf16.msra.mxu0 0
        %1129 = vmatprep.subr.bf16.mxu0 0
        %1130 = vmatpush1.bf16.msra.mxu0 0
        %1131 = vmatprep.subr.bf16.mxu0 0
        %1132 = vmatpush1.bf16.msra.mxu0 0
        %1133 = vmatprep.subr.bf16.mxu0 0
        %1134 = vmatpush1.bf16.msra.mxu0 0
        %1135 = vmatprep.subr.bf16.mxu0 0
        %1136 = vmatpush1.bf16.msra.mxu0 0
        %1137 = vmatprep.subr.bf16.mxu0 0
        %1138 = vmatpush1.bf16.msra.mxu0 0
        %1139 = vmatprep.subr.bf16.mxu0 0
        %1140 = vmatpush1.bf16.msra.mxu0 0
        %1141 = vmatprep.mubr.bf16.mxu0 0
        %1142 = vmatmul.mubr.bf16.gmra.mrb[0].mxu0 %v1107
        %v1143 = vpop.f32.mrb[0].mxu0
        %v1144 = vadd.f32 0.0, %v1143
        %v1145 = vpop.f32.mrb[0].mxu0
        %v1146 = vpop.f32.mrb[0].mxu0
        %v1147 = vadd.f32 0.0, %v1146
        %v1148 = vpop.f32.mrb[0].mxu0
        %1149 = vdwg.mxu0
        %v1150 = vld [vmem:[%s8] sm:$0xf]
        %v1151 = vld [vmem:[#allocation14] sm:$0xf]
        %v1152 = vld [vmem:[#allocation13] sm:$0xf]
        %v1153 = vld [vmem:[#allocation13 + $0x4] sm:$0xf]
        %v1154 = vld [vmem:[#allocation13 + $0x8] sm:$0xf]
        %v1155 = vld [vmem:[#allocation13 + $0xc] sm:$0xf]
        %v1156 = vlaneseq
        %v1157 = vshrl.u32 %v1156, 7
        %v1158 = vsub.s32 0, %v1157
        %v1159 = vrot.slane %v1150, %v1158
        %v1160 = vadd.f32 %v1084, %v1159
        %v1161 = vpack.c.bf16 %v1160, %v1160
        %v1162 = vpack.c.bf16 %v1026, %v1023
        %v1163 = vlaneseq
        %v1164 = vshrl.u32 %v1163, 7
        %v1165 = vsub.s32 0, %v1164
        %v1166 = vrot.slane %v1151, %v1165
        %v1167 = vadd.f32 %v1084, %v1166
        %v1168 = vpack.c.bf16 %v1167, %v1167
        %v1169 = vpack.c.bf16 %v1147, %v1144
        %vm1170 = vcmask 64512
        %v1172 = vsel %vm1170, %v1168, 0
        %v1175 = vsel %vm1170, %v1169, 0
        %1177 = vmatprep.subr.bf16.mxu0 0
        %1178 = vmatpush1.bf16.xpose.msra.mxu0 %v1175
        %1179 = vmatprep.subr.bf16.mxu0 0
        %1180 = vmatpush1.bf16.xpose.msra.mxu0 0
        %1181 = vmatprep.subr.bf16.mxu0 0
        %1182 = vmatpush1.bf16.xpose.msra.mxu0 0
        %1183 = vmatprep.subr.bf16.mxu0 0
        %1184 = vmatpush1.bf16.xpose.msra.mxu0 0
        %1185 = vmatprep.subr.bf16.mxu0 0
        %1186 = vmatpush1.bf16.xpose.msra.mxu0 0
        %1187 = vmatprep.subr.bf16.mxu0 0
        %1188 = vmatpush1.bf16.xpose.msra.mxu0 0
        %1189 = vmatprep.subr.bf16.mxu0 0
        %1190 = vmatpush1.bf16.xpose.msra.mxu0 0
        %1191 = vmatprep.subr.bf16.mxu0 0
        %1192 = vmatpush1.bf16.xpose.msra.mxu0 0
        %1193 = vmatprep.subr.bf16.mxu0 0
        %1194 = vmatpush1.bf16.xpose.msra.mxu0 0
        %1195 = vmatprep.subr.bf16.mxu0 0
        %1196 = vmatpush1.bf16.xpose.msra.mxu0 0
        %1197 = vmatprep.subr.bf16.mxu0 0
        %1198 = vmatpush1.bf16.xpose.msra.mxu0 0
        %1199 = vmatprep.subr.bf16.mxu0 0
        %1200 = vmatpush1.bf16.xpose.msra.mxu0 0
        %1201 = vmatprep.subr.bf16.mxu0 0
        %1202 = vmatpush1.bf16.xpose.msra.mxu0 0
        %1203 = vmatprep.subr.bf16.mxu0 0
        %1204 = vmatpush1.bf16.xpose.msra.mxu0 0
        %1205 = vmatprep.subr.bf16.mxu0 0
        %1206 = vmatpush1.bf16.xpose.msra.mxu0 0
        %1207 = vmatprep.subr.bf16.mxu0 0
        %1208 = vmatpush1.bf16.xpose.msra.mxu0 0
        %1209 = vmatprep.mubr.bf16.mxu0 0
        %1210 = vmatmul.mubr.bf16.gmra.mrb[0].mxu0 %v1172
        %v1211 = vpop.f32.mrb[0].mxu0
        %v1212 = vadd.f32 0.0, %v1211
        %v1213 = vpop.f32.mrb[0].mxu0
        %v1214 = vpop.f32.mrb[0].mxu0
        %v1215 = vpop.f32.mrb[0].mxu0
        %1216 = vdwg.mxu0
        %v1218 = vrot.slane %v1212, 1
        %1219 = vrot.lane.b32.xlu0 %v1218, 17
        %v1220 = vpop.permute.xlu0 %1219
        %vm1222 = vcmask 130048
        %v1223 = vsel %vm1222, %v1212, 0.0
        %vm1224 = vcmask 138240
        %v1225 = vsel %vm1224, %v1223, %v1220
        %v1226 = vsel %vm1224, %v1223, 0.0
        %1228 = vrot.lane.b32.xlu0 %v1225, 1
        %v1229 = vpop.permute.xlu0 %1228
        %1231 = vrot.lane.b32.xlu0 %v1225, 2
        %v1232 = vpop.permute.xlu0 %1231
        %1234 = vrot.lane.b32.xlu0 %v1225, 3
        %v1235 = vpop.permute.xlu0 %1234
        %1237 = vrot.lane.b32.xlu0 %v1225, 4
        %v1238 = vpop.permute.xlu0 %1237
        %1240 = vrot.lane.b32.xlu0 %v1225, 5
        %v1241 = vpop.permute.xlu0 %1240
        %1243 = vrot.lane.b32.xlu0 %v1225, 6
        %v1244 = vpop.permute.xlu0 %1243
        %1247 = vrot.lane.b32.xlu0 %v1226, 7
        %v1248 = vpop.permute.xlu0 %1247
        %vm1250 = vcmask 1040384
        %v1251 = vsel %vm1250, %v1225, %v1229
        %vm1252 = vcmask 1041408
        %v1253 = vsel %vm1252, %v1251, %v1232
        %vm1254 = vcmask 1042432
        %v1255 = vsel %vm1254, %v1253, %v1235
        %vm1256 = vcmask 1043456
        %v1257 = vsel %vm1256, %v1255, %v1238
        %vm1258 = vcmask 1044480
        %v1259 = vsel %vm1258, %v1257, %v1241
        %vm1260 = vcmask 1045504
        %v1261 = vsel %vm1260, %v1259, %v1244
        %vm1262 = vcmask 1046528
        %v1263 = vsel %vm1262, %v1261, %v1248
        %1265 = vrot.lane.b32.xlu0 %v1263, 121
        %v1266 = vpop.permute.xlu0 %1265
        %v1269 = vsel %vm1170, %v1161, 0
        %v1272 = vsel %vm1170, %v1162, 0
        %1274 = vmatprep.subr.bf16.mxu0 0
        %1275 = vmatpush1.bf16.xpose.msra.mxu0 %v1272
        %1276 = vmatprep.subr.bf16.mxu0 0
        %1277 = vmatpush1.bf16.xpose.msra.mxu0 0
        %1278 = vmatprep.subr.bf16.mxu0 0
        %1279 = vmatpush1.bf16.xpose.msra.mxu0 0
        %1280 = vmatprep.subr.bf16.mxu0 0
        %1281 = vmatpush1.bf16.xpose.msra.mxu0 0
        %1282 = vmatprep.subr.bf16.mxu0 0
        %1283 = vmatpush1.bf16.xpose.msra.mxu0 0
        %1284 = vmatprep.subr.bf16.mxu0 0
        %1285 = vmatpush1.bf16.xpose.msra.mxu0 0
        %1286 = vmatprep.subr.bf16.mxu0 0
        %1287 = vmatpush1.bf16.xpose.msra.mxu0 0
        %1288 = vmatprep.subr.bf16.mxu0 0
        %1289 = vmatpush1.bf16.xpose.msra.mxu0 0
        %1290 = vmatprep.subr.bf16.mxu0 0
        %1291 = vmatpush1.bf16.xpose.msra.mxu0 0
        %1292 = vmatprep.subr.bf16.mxu0 0
        %1293 = vmatpush1.bf16.xpose.msra.mxu0 0
        %1294 = vmatprep.subr.bf16.mxu0 0
        %1295 = vmatpush1.bf16.xpose.msra.mxu0 0
        %1296 = vmatprep.subr.bf16.mxu0 0
        %1297 = vmatpush1.bf16.xpose.msra.mxu0 0
        %1298 = vmatprep.subr.bf16.mxu0 0
        %1299 = vmatpush1.bf16.xpose.msra.mxu0 0
        %1300 = vmatprep.subr.bf16.mxu0 0
        %1301 = vmatpush1.bf16.xpose.msra.mxu0 0
        %1302 = vmatprep.subr.bf16.mxu0 0
        %1303 = vmatpush1.bf16.xpose.msra.mxu0 0
        %1304 = vmatprep.subr.bf16.mxu0 0
        %1305 = vmatpush1.bf16.xpose.msra.mxu0 0
        %1306 = vmatprep.mubr.bf16.mxu0 0
        %1307 = vmatmul.mubr.bf16.gmra.mrb[0].mxu0 %v1269
        %v1308 = vpop.f32.mrb[0].mxu0
        %v1309 = vadd.f32 %v1266, %v1308
        %v1310 = vpop.f32.mrb[0].mxu0
        %v1311 = vpop.f32.mrb[0].mxu0
        %v1312 = vpop.f32.mrb[0].mxu0
        %1313 = vdwg.mxu0
        %v1314 = vsel %vm936, -inf, %v1309
        %v1315 = vmul.f32 %v1314, 0.35355338
        %v1316 = vsel %vm1222, %v1315, -inf
        %1317 = vmax.xlane.f32.xlu0 %v1316
        %v1318 = vpop.xlane.xlu0 %1317
        %v1319 = vsub.f32 %v1315, %v1318
        %v1320 = vmul.f32 %v1319, 1.442695
        %v1321 = vpow.pop %v1320
        %v1322 = vsel %vm1222, %v1321, 0.0
        %1323 = vadd.xlane.f32.xlu0 %v1322
        %v1324 = vpop.xlane.xlu0 %1323
        %v1325 = vrcp.pop %v1324
        %v1326 = vmul.f32 %v1321, %v1325
        %v1327 = vpack.c.bf16 %v1326, %v1326
        %1329 = vrot.lane.b32.xlu0 %v1162, 96
        %v1330 = vpop.permute.xlu0 %1329
        %v1333 = vsel %vm1222, %v1327, 0
        %1335 = vmatprep.subr.bf16.mxu0 0
        %1336 = vmatpush1.bf16.msra.mxu0 %v1330
        %1337 = vmatprep.subr.bf16.mxu0 0
        %1338 = vmatpush1.bf16.msra.mxu0 0
        %1339 = vmatprep.subr.bf16.mxu0 0
        %1340 = vmatpush1.bf16.msra.mxu0 0
        %1341 = vmatprep.subr.bf16.mxu0 0
        %1342 = vmatpush1.bf16.msra.mxu0 0
        %1343 = vmatprep.subr.bf16.mxu0 0
        %1344 = vmatpush1.bf16.msra.mxu0 0
        %1345 = vmatprep.subr.bf16.mxu0 0
        %1346 = vmatpush1.bf16.msra.mxu0 0
        %1347 = vmatprep.subr.bf16.mxu0 0
        %1348 = vmatpush1.bf16.msra.mxu0 0
        %1349 = vmatprep.subr.bf16.mxu0 0
        %1350 = vmatpush1.bf16.msra.mxu0 0
        %1351 = vmatprep.subr.bf16.mxu0 0
        %1352 = vmatpush1.bf16.msra.mxu0 0
        %1353 = vmatprep.subr.bf16.mxu0 0
        %1354 = vmatpush1.bf16.msra.mxu0 0
        %1355 = vmatprep.subr.bf16.mxu0 0
        %1356 = vmatpush1.bf16.msra.mxu0 0
        %1357 = vmatprep.subr.bf16.mxu0 0
        %1358 = vmatpush1.bf16.msra.mxu0 0
        %1359 = vmatprep.subr.bf16.mxu0 0
        %1360 = vmatpush1.bf16.msra.mxu0 0
        %1361 = vmatprep.subr.bf16.mxu0 0
        %1362 = vmatpush1.bf16.msra.mxu0 0
        %1363 = vmatprep.subr.bf16.mxu0 0
        %1364 = vmatpush1.bf16.msra.mxu0 0
        %1365 = vmatprep.subr.bf16.mxu0 0
        %1366 = vmatpush1.bf16.msra.mxu0 0
        %1367 = vmatprep.mubr.bf16.mxu0 0
        %1368 = vmatmul.mubr.bf16.gmra.mrb[0].mxu0 %v1333
        %v1369 = vpop.f32.mrb[0].mxu0
        %v1370 = vadd.f32 0.0, %v1369
        %v1371 = vpop.f32.mrb[0].mxu0
        %v1372 = vpop.f32.mrb[0].mxu0
        %v1373 = vpop.f32.mrb[0].mxu0
        %1374 = vdwg.mxu0
        %v1375 = vpack.c.bf16 %v1370, %v1370
        %v1376 = vlaneseq
        %v1377 = vshrl.u32 %v1376, 7
        %v1378 = vsub.s32 1, %v1377
        %v1379 = vrot.slane %v1150, %v1378
        %1381 = vrot.lane.b32.xlu0 %v1379, 8
        %v1382 = vpop.permute.xlu0 %1381
        %v1384 = vadd.f32 %v1084, %v1382
        %v1385 = vpack.c.bf16 %v1384, %v1384
        %v1386 = vlaneseq
        %v1387 = vshrl.u32 %v1386, 7
        %v1388 = vsub.s32 1, %v1387
        %v1389 = vrot.slane %v1151, %v1388
        %1391 = vrot.lane.b32.xlu0 %v1389, 8
        %v1392 = vpop.permute.xlu0 %1391
        %v1394 = vadd.f32 %v1084, %v1392
        %v1395 = vpack.c.bf16 %v1394, %v1394
        %1397 = vrot.lane.b32.xlu0 %v1395, 120
        %v1398 = vpop.permute.xlu0 %1397
        %1400 = vrot.lane.b32.xlu0 %v1169, 120
        %v1401 = vpop.permute.xlu0 %1400
        %v1403 = vsel %vm1170, %v1398, 0
        %v1406 = vsel %vm1170, %v1401, 0
        %1408 = vmatprep.subr.bf16.mxu0 0
        %1409 = vmatpush1.bf16.xpose.msra.mxu0 %v1406
        %1410 = vmatprep.subr.bf16.mxu0 0
        %1411 = vmatpush1.bf16.xpose.msra.mxu0 0
        %1412 = vmatprep.subr.bf16.mxu0 0
        %1413 = vmatpush1.bf16.xpose.msra.mxu0 0
        %1414 = vmatprep.subr.bf16.mxu0 0
        %1415 = vmatpush1.bf16.xpose.msra.mxu0 0
        %1416 = vmatprep.subr.bf16.mxu0 0
        %1417 = vmatpush1.bf16.xpose.msra.mxu0 0
        %1418 = vmatprep.subr.bf16.mxu0 0
        %1419 = vmatpush1.bf16.xpose.msra.mxu0 0
        %1420 = vmatprep.subr.bf16.mxu0 0
        %1421 = vmatpush1.bf16.xpose.msra.mxu0 0
        %1422 = vmatprep.subr.bf16.mxu0 0
        %1423 = vmatpush1.bf16.xpose.msra.mxu0 0
        %1424 = vmatprep.subr.bf16.mxu0 0
        %1425 = vmatpush1.bf16.xpose.msra.mxu0 0
        %1426 = vmatprep.subr.bf16.mxu0 0
        %1427 = vmatpush1.bf16.xpose.msra.mxu0 0
        %1428 = vmatprep.subr.bf16.mxu0 0
        %1429 = vmatpush1.bf16.xpose.msra.mxu0 0
        %1430 = vmatprep.subr.bf16.mxu0 0
        %1431 = vmatpush1.bf16.xpose.msra.mxu0 0
        %1432 = vmatprep.subr.bf16.mxu0 0
        %1433 = vmatpush1.bf16.xpose.msra.mxu0 0
        %1434 = vmatprep.subr.bf16.mxu0 0
        %1435 = vmatpush1.bf16.xpose.msra.mxu0 0
        %1436 = vmatprep.subr.bf16.mxu0 0
        %1437 = vmatpush1.bf16.xpose.msra.mxu0 0
        %1438 = vmatprep.subr.bf16.mxu0 0
        %1439 = vmatpush1.bf16.xpose.msra.mxu0 0
        %1440 = vmatprep.mubr.bf16.mxu0 0
        %1441 = vmatmul.mubr.bf16.gmra.mrb[0].mxu0 %v1403
        %v1442 = vpop.f32.mrb[0].mxu0
        %v1443 = vadd.f32 0.0, %v1442
        %v1444 = vpop.f32.mrb[0].mxu0
        %v1445 = vpop.f32.mrb[0].mxu0
        %v1446 = vpop.f32.mrb[0].mxu0
        %1447 = vdwg.mxu0
        %v1449 = vrot.slane %v1443, 1
        %1450 = vrot.lane.b32.xlu0 %v1449, 17
        %v1451 = vpop.permute.xlu0 %1450
        %v1453 = vsel %vm1222, %v1443, 0.0
        %v1454 = vsel %vm1224, %v1453, %v1451
        %v1455 = vsel %vm1224, %v1453, 0.0
        %1457 = vrot.lane.b32.xlu0 %v1454, 1
        %v1458 = vpop.permute.xlu0 %1457
        %1460 = vrot.lane.b32.xlu0 %v1454, 2
        %v1461 = vpop.permute.xlu0 %1460
        %1463 = vrot.lane.b32.xlu0 %v1454, 3
        %v1464 = vpop.permute.xlu0 %1463
        %1466 = vrot.lane.b32.xlu0 %v1454, 4
        %v1467 = vpop.permute.xlu0 %1466
        %1469 = vrot.lane.b32.xlu0 %v1454, 5
        %v1470 = vpop.permute.xlu0 %1469
        %1472 = vrot.lane.b32.xlu0 %v1454, 6
        %v1473 = vpop.permute.xlu0 %1472
        %1476 = vrot.lane.b32.xlu0 %v1455, 7
        %v1477 = vpop.permute.xlu0 %1476
        %v1479 = vsel %vm1250, %v1454, %v1458
        %v1480 = vsel %vm1252, %v1479, %v1461
        %v1481 = vsel %vm1254, %v1480, %v1464
        %v1482 = vsel %vm1256, %v1481, %v1467
        %v1483 = vsel %vm1258, %v1482, %v1470
        %v1484 = vsel %vm1260, %v1483, %v1473
        %v1485 = vsel %vm1262, %v1484, %v1477
        %1487 = vrot.lane.b32.xlu0 %v1385, 120
        %v1488 = vpop.permute.xlu0 %1487
        %1489 = vrot.lane.b32.xlu0 %v1162, 120
        %v1490 = vpop.permute.xlu0 %1489
        %1492 = vrot.lane.b32.xlu0 %v1485, 121
        %v1493 = vpop.permute.xlu0 %1492
        %v1496 = vsel %vm1170, %v1488, 0
        %v1499 = vsel %vm1170, %v1490, 0
        %1501 = vmatprep.subr.bf16.mxu0 0
        %1502 = vmatpush1.bf16.xpose.msra.mxu0 %v1499
        %1503 = vmatprep.subr.bf16.mxu0 0
        %1504 = vmatpush1.bf16.xpose.msra.mxu0 0
        %1505 = vmatprep.subr.bf16.mxu0 0
        %1506 = vmatpush1.bf16.xpose.msra.mxu0 0
        %1507 = vmatprep.subr.bf16.mxu0 0
        %1508 = vmatpush1.bf16.xpose.msra.mxu0 0
        %1509 = vmatprep.subr.bf16.mxu0 0
        %1510 = vmatpush1.bf16.xpose.msra.mxu0 0
        %1511 = vmatprep.subr.bf16.mxu0 0
        %1512 = vmatpush1.bf16.xpose.msra.mxu0 0
        %1513 = vmatprep.subr.bf16.mxu0 0
        %1514 = vmatpush1.bf16.xpose.msra.mxu0 0
        %1515 = vmatprep.subr.bf16.mxu0 0
        %1516 = vmatpush1.bf16.xpose.msra.mxu0 0
        %1517 = vmatprep.subr.bf16.mxu0 0
        %1518 = vmatpush1.bf16.xpose.msra.mxu0 0
        %1519 = vmatprep.subr.bf16.mxu0 0
        %1520 = vmatpush1.bf16.xpose.msra.mxu0 0
        %1521 = vmatprep.subr.bf16.mxu0 0
        %1522 = vmatpush1.bf16.xpose.msra.mxu0 0
        %1523 = vmatprep.subr.bf16.mxu0 0
        %1524 = vmatpush1.bf16.xpose.msra.mxu0 0
        %1525 = vmatprep.subr.bf16.mxu0 0
        %1526 = vmatpush1.bf16.xpose.msra.mxu0 0
        %1527 = vmatprep.subr.bf16.mxu0 0
        %1528 = vmatpush1.bf16.xpose.msra.mxu0 0
        %1529 = vmatprep.subr.bf16.mxu0 0
        %1530 = vmatpush1.bf16.xpose.msra.mxu0 0
        %1531 = vmatprep.subr.bf16.mxu0 0
        %1532 = vmatpush1.bf16.xpose.msra.mxu0 0
        %1533 = vmatprep.mubr.bf16.mxu0 0
        %1534 = vmatmul.mubr.bf16.gmra.mrb[0].mxu0 %v1496
        %v1535 = vpop.f32.mrb[0].mxu0
        %v1536 = vadd.f32 %v1493, %v1535
        %v1537 = vpop.f32.mrb[0].mxu0
        %v1538 = vpop.f32.mrb[0].mxu0
        %v1539 = vpop.f32.mrb[0].mxu0
        %1540 = vdwg.mxu0
        %v1541 = vsel %vm936, -inf, %v1536
        %v1542 = vmul.f32 %v1541, 0.35355338
        %v1543 = vsel %vm1222, %v1542, -inf
        %1544 = vmax.xlane.f32.xlu0 %v1543
        %v1545 = vpop.xlane.xlu0 %1544
        %v1546 = vsub.f32 %v1542, %v1545
        %v1547 = vmul.f32 %v1546, 1.442695
        %v1548 = vpow.pop %v1547
        %v1549 = vsel %vm1222, %v1548, 0.0
        %1550 = vadd.xlane.f32.xlu0 %v1549
        %v1551 = vpop.xlane.xlu0 %1550
        %v1552 = vrcp.pop %v1551
        %v1553 = vmul.f32 %v1548, %v1552
        %v1554 = vpack.c.bf16 %v1553, %v1553
        %1555 = vrot.lane.b32.xlu0 %v1162, 88
        %v1556 = vpop.permute.xlu0 %1555
        %v1559 = vsel %vm1222, %v1554, 0
        %1561 = vmatprep.subr.bf16.mxu0 0
        %1562 = vmatpush1.bf16.msra.mxu0 %v1556
        %1563 = vmatprep.subr.bf16.mxu0 0
        %1564 = vmatpush1.bf16.msra.mxu0 0
        %1565 = vmatprep.subr.bf16.mxu0 0
        %1566 = vmatpush1.bf16.msra.mxu0 0
        %1567 = vmatprep.subr.bf16.mxu0 0
        %1568 = vmatpush1.bf16.msra.mxu0 0
        %1569 = vmatprep.subr.bf16.mxu0 0
        %1570 = vmatpush1.bf16.msra.mxu0 0
        %1571 = vmatprep.subr.bf16.mxu0 0
        %1572 = vmatpush1.bf16.msra.mxu0 0
        %1573 = vmatprep.subr.bf16.mxu0 0
        %1574 = vmatpush1.bf16.msra.mxu0 0
        %1575 = vmatprep.subr.bf16.mxu0 0
        %1576 = vmatpush1.bf16.msra.mxu0 0
        %1577 = vmatprep.subr.bf16.mxu0 0
        %1578 = vmatpush1.bf16.msra.mxu0 0
        %1579 = vmatprep.subr.bf16.mxu0 0
        %1580 = vmatpush1.bf16.msra.mxu0 0
        %1581 = vmatprep.subr.bf16.mxu0 0
        %1582 = vmatpush1.bf16.msra.mxu0 0
        %1583 = vmatprep.subr.bf16.mxu0 0
        %1584 = vmatpush1.bf16.msra.mxu0 0
        %1585 = vmatprep.subr.bf16.mxu0 0
        %1586 = vmatpush1.bf16.msra.mxu0 0
        %1587 = vmatprep.subr.bf16.mxu0 0
        %1588 = vmatpush1.bf16.msra.mxu0 0
        %1589 = vmatprep.subr.bf16.mxu0 0
        %1590 = vmatpush1.bf16.msra.mxu0 0
        %1591 = vmatprep.subr.bf16.mxu0 0
        %1592 = vmatpush1.bf16.msra.mxu0 0
        %1593 = vmatprep.mubr.bf16.mxu0 0
        %1594 = vmatmul.mubr.bf16.gmra.mrb[0].mxu0 %v1559
        %v1595 = vpop.f32.mrb[0].mxu0
        %v1596 = vadd.f32 0.0, %v1595
        %v1597 = vpop.f32.mrb[0].mxu0
        %v1598 = vpop.f32.mrb[0].mxu0
        %v1599 = vpop.f32.mrb[0].mxu0
        %1600 = vdwg.mxu0
        %v1601 = vpack.c.bf16 %v1596, %v1596
        %v1603 = vsel %vm1170, %v1601, 0
        %v1606 = vsel %vm1256, %v1153, 0
        %1608 = vmatprep.subr.bf16.mxu0 0
        %1609 = vmatpush1.bf16.msra.mxu0 %v1606
        %1610 = vmatprep.subr.bf16.mxu0 0
        %1611 = vmatpush1.bf16.msra.mxu0 0
        %1612 = vmatprep.subr.bf16.mxu0 0
        %1613 = vmatpush1.bf16.msra.mxu0 0
        %1614 = vmatprep.subr.bf16.mxu0 0
        %1615 = vmatpush1.bf16.msra.mxu0 0
        %1616 = vmatprep.subr.bf16.mxu0 0
        %1617 = vmatpush1.bf16.msra.mxu0 0
        %1618 = vmatprep.subr.bf16.mxu0 0
        %1619 = vmatpush1.bf16.msra.mxu0 0
        %1620 = vmatprep.subr.bf16.mxu0 0
        %1621 = vmatpush1.bf16.msra.mxu0 0
        %1622 = vmatprep.subr.bf16.mxu0 0
        %1623 = vmatpush1.bf16.msra.mxu0 0
        %1624 = vmatprep.subr.bf16.mxu0 0
        %1625 = vmatpush1.bf16.msra.mxu0 0
        %1626 = vmatprep.subr.bf16.mxu0 0
        %1627 = vmatpush1.bf16.msra.mxu0 0
        %1628 = vmatprep.subr.bf16.mxu0 0
        %1629 = vmatpush1.bf16.msra.mxu0 0
        %1630 = vmatprep.subr.bf16.mxu0 0
        %1631 = vmatpush1.bf16.msra.mxu0 0
        %1632 = vmatprep.subr.bf16.mxu0 0
        %1633 = vmatpush1.bf16.msra.mxu0 0
        %1634 = vmatprep.subr.bf16.mxu0 0
        %1635 = vmatpush1.bf16.msra.mxu0 0
        %1636 = vmatprep.subr.bf16.mxu0 0
        %1637 = vmatpush1.bf16.msra.mxu0 0
        %1638 = vmatprep.subr.bf16.mxu0 0
        %1639 = vmatpush1.bf16.msra.mxu0 0
        %1640 = vmatprep.mubr.bf16.mxu0 0
        %1641 = vmatmul.mubr.bf16.gmra.mrb[0].mxu0 %v1603
        %v1642 = vpop.f32.mrb[0].mxu0
        %v1643 = vadd.f32 0.0, %v1642
        %v1644 = vpop.f32.mrb[0].mxu0
        %v1645 = vpop.f32.mrb[0].mxu0
        %v1646 = vpop.f32.mrb[0].mxu0
        %1647 = vdwg.mxu0
        %v1649 = vsel %vm1170, %v1375, 0
        %v1652 = vsel %vm1256, %v1152, 0
        %1654 = vmatprep.subr.bf16.mxu0 0
        %1655 = vmatpush1.bf16.msra.mxu0 %v1652
        %1656 = vmatprep.subr.bf16.mxu0 0
        %1657 = vmatpush1.bf16.msra.mxu0 0
        %1658 = vmatprep.subr.bf16.mxu0 0
        %1659 = vmatpush1.bf16.msra.mxu0 0
        %1660 = vmatprep.subr.bf16.mxu0 0
        %1661 = vmatpush1.bf16.msra.mxu0 0
        %1662 = vmatprep.subr.bf16.mxu0 0
        %1663 = vmatpush1.bf16.msra.mxu0 0
        %1664 = vmatprep.subr.bf16.mxu0 0
        %1665 = vmatpush1.bf16.msra.mxu0 0
        %1666 = vmatprep.subr.bf16.mxu0 0
        %1667 = vmatpush1.bf16.msra.mxu0 0
        %1668 = vmatprep.subr.bf16.mxu0 0
        %1669 = vmatpush1.bf16.msra.mxu0 0
        %1670 = vmatprep.subr.bf16.mxu0 0
        %1671 = vmatpush1.bf16.msra.mxu0 0
        %1672 = vmatprep.subr.bf16.mxu0 0
        %1673 = vmatpush1.bf16.msra.mxu0 0
        %1674 = vmatprep.subr.bf16.mxu0 0
        %1675 = vmatpush1.bf16.msra.mxu0 0
        %1676 = vmatprep.subr.bf16.mxu0 0
        %1677 = vmatpush1.bf16.msra.mxu0 0
        %1678 = vmatprep.subr.bf16.mxu0 0
        %1679 = vmatpush1.bf16.msra.mxu0 0
        %1680 = vmatprep.subr.bf16.mxu0 0
        %1681 = vmatpush1.bf16.msra.mxu0 0
        %1682 = vmatprep.subr.bf16.mxu0 0
        %1683 = vmatpush1.bf16.msra.mxu0 0
        %1684 = vmatprep.subr.bf16.mxu0 0
        %1685 = vmatpush1.bf16.msra.mxu0 0
        %1686 = vmatprep.mubr.bf16.mxu0 0
        %1687 = vmatmul.mubr.bf16.gmra.mrb[0].mxu0 %v1649
        %v1688 = vpop.f32.mrb[0].mxu0
        %v1689 = vadd.f32 %v1643, %v1688
        %v1690 = vpop.f32.mrb[0].mxu0
        %v1691 = vpop.f32.mrb[0].mxu0
        %v1692 = vpop.f32.mrb[0].mxu0
        %1693 = vdwg.mxu0
        %v1694 = vlaneseq
        %v1695 = vshrl.u32 %v1694, 7
        %v1696 = vsub.s32 2, %v1695
        %v1697 = vrot.slane %v1150, %v1696
        %1699 = vrot.lane.b32.xlu0 %v1697, 16
        %v1700 = vpop.permute.xlu0 %1699
        %v1702 = vadd.f32 %v1084, %v1700
        %v1703 = vpack.c.bf16 %v1702, %v1702
        %v1704 = vlaneseq
        %v1705 = vshrl.u32 %v1704, 7
        %v1706 = vsub.s32 2, %v1705
        %v1707 = vrot.slane %v1151, %v1706
        %1709 = vrot.lane.b32.xlu0 %v1707, 16
        %v1710 = vpop.permute.xlu0 %1709
        %v1712 = vadd.f32 %v1084, %v1710
        %v1713 = vpack.c.bf16 %v1712, %v1712
        %1715 = vrot.lane.b32.xlu0 %v1713, 112
        %v1716 = vpop.permute.xlu0 %1715
        %1717 = vrot.lane.b32.xlu0 %v1169, 112
        %v1718 = vpop.permute.xlu0 %1717
        %v1720 = vsel %vm1170, %v1716, 0
        %v1723 = vsel %vm1170, %v1718, 0
        %1725 = vmatprep.subr.bf16.mxu0 0
        %1726 = vmatpush1.bf16.xpose.msra.mxu0 %v1723
        %1727 = vmatprep.subr.bf16.mxu0 0
        %1728 = vmatpush1.bf16.xpose.msra.mxu0 0
        %1729 = vmatprep.subr.bf16.mxu0 0
        %1730 = vmatpush1.bf16.xpose.msra.mxu0 0
        %1731 = vmatprep.subr.bf16.mxu0 0
        %1732 = vmatpush1.bf16.xpose.msra.mxu0 0
        %1733 = vmatprep.subr.bf16.mxu0 0
        %1734 = vmatpush1.bf16.xpose.msra.mxu0 0
        %1735 = vmatprep.subr.bf16.mxu0 0
        %1736 = vmatpush1.bf16.xpose.msra.mxu0 0
        %1737 = vmatprep.subr.bf16.mxu0 0
        %1738 = vmatpush1.bf16.xpose.msra.mxu0 0
        %1739 = vmatprep.subr.bf16.mxu0 0
        %1740 = vmatpush1.bf16.xpose.msra.mxu0 0
        %1741 = vmatprep.subr.bf16.mxu0 0
        %1742 = vmatpush1.bf16.xpose.msra.mxu0 0
        %1743 = vmatprep.subr.bf16.mxu0 0
        %1744 = vmatpush1.bf16.xpose.msra.mxu0 0
        %1745 = vmatprep.subr.bf16.mxu0 0
        %1746 = vmatpush1.bf16.xpose.msra.mxu0 0
        %1747 = vmatprep.subr.bf16.mxu0 0
        %1748 = vmatpush1.bf16.xpose.msra.mxu0 0
        %1749 = vmatprep.subr.bf16.mxu0 0
        %1750 = vmatpush1.bf16.xpose.msra.mxu0 0
        %1751 = vmatprep.subr.bf16.mxu0 0
        %1752 = vmatpush1.bf16.xpose.msra.mxu0 0
        %1753 = vmatprep.subr.bf16.mxu0 0
        %1754 = vmatpush1.bf16.xpose.msra.mxu0 0
        %1755 = vmatprep.subr.bf16.mxu0 0
        %1756 = vmatpush1.bf16.xpose.msra.mxu0 0
        %1757 = vmatprep.mubr.bf16.mxu0 0
        %1758 = vmatmul.mubr.bf16.gmra.mrb[0].mxu0 %v1720
        %v1759 = vpop.f32.mrb[0].mxu0
        %v1760 = vadd.f32 0.0, %v1759
        %v1761 = vpop.f32.mrb[0].mxu0
        %v1762 = vpop.f32.mrb[0].mxu0
        %v1763 = vpop.f32.mrb[0].mxu0
        %1764 = vdwg.mxu0
        %v1766 = vrot.slane %v1760, 1
        %1767 = vrot.lane.b32.xlu0 %v1766, 17
        %v1768 = vpop.permute.xlu0 %1767
        %v1770 = vsel %vm1222, %v1760, 0.0
        %v1771 = vsel %vm1224, %v1770, %v1768
        %v1772 = vsel %vm1224, %v1770, 0.0
        %1774 = vrot.lane.b32.xlu0 %v1771, 1
        %v1775 = vpop.permute.xlu0 %1774
        %1777 = vrot.lane.b32.xlu0 %v1771, 2
        %v1778 = vpop.permute.xlu0 %1777
        %1780 = vrot.lane.b32.xlu0 %v1771, 3
        %v1781 = vpop.permute.xlu0 %1780
        %1783 = vrot.lane.b32.xlu0 %v1771, 4
        %v1784 = vpop.permute.xlu0 %1783
        %1786 = vrot.lane.b32.xlu0 %v1771, 5
        %v1787 = vpop.permute.xlu0 %1786
        %1789 = vrot.lane.b32.xlu0 %v1771, 6
        %v1790 = vpop.permute.xlu0 %1789
        %1793 = vrot.lane.b32.xlu0 %v1772, 7
        %v1794 = vpop.permute.xlu0 %1793
        %v1796 = vsel %vm1250, %v1771, %v1775
        %v1797 = vsel %vm1252, %v1796, %v1778
        %v1798 = vsel %vm1254, %v1797, %v1781
        %v1799 = vsel %vm1256, %v1798, %v1784
        %v1800 = vsel %vm1258, %v1799, %v1787
        %v1801 = vsel %vm1260, %v1800, %v1790
        %v1802 = vsel %vm1262, %v1801, %v1794
        %1804 = vrot.lane.b32.xlu0 %v1703, 112
        %v1805 = vpop.permute.xlu0 %1804
        %1806 = vrot.lane.b32.xlu0 %v1162, 112
        %v1807 = vpop.permute.xlu0 %1806
        %1809 = vrot.lane.b32.xlu0 %v1802, 121
        %v1810 = vpop.permute.xlu0 %1809
        %v1813 = vsel %vm1170, %v1805, 0
        %v1816 = vsel %vm1170, %v1807, 0
        %1818 = vmatprep.subr.bf16.mxu0 0
        %1819 = vmatpush1.bf16.xpose.msra.mxu0 %v1816
        %1820 = vmatprep.subr.bf16.mxu0 0
        %1821 = vmatpush1.bf16.xpose.msra.mxu0 0
        %1822 = vmatprep.subr.bf16.mxu0 0
        %1823 = vmatpush1.bf16.xpose.msra.mxu0 0
        %1824 = vmatprep.subr.bf16.mxu0 0
        %1825 = vmatpush1.bf16.xpose.msra.mxu0 0
        %1826 = vmatprep.subr.bf16.mxu0 0
        %1827 = vmatpush1.bf16.xpose.msra.mxu0 0
        %1828 = vmatprep.subr.bf16.mxu0 0
        %1829 = vmatpush1.bf16.xpose.msra.mxu0 0
        %1830 = vmatprep.subr.bf16.mxu0 0
        %1831 = vmatpush1.bf16.xpose.msra.mxu0 0
        %1832 = vmatprep.subr.bf16.mxu0 0
        %1833 = vmatpush1.bf16.xpose.msra.mxu0 0
        %1834 = vmatprep.subr.bf16.mxu0 0
        %1835 = vmatpush1.bf16.xpose.msra.mxu0 0
        %1836 = vmatprep.subr.bf16.mxu0 0
        %1837 = vmatpush1.bf16.xpose.msra.mxu0 0
        %1838 = vmatprep.subr.bf16.mxu0 0
        %1839 = vmatpush1.bf16.xpose.msra.mxu0 0
        %1840 = vmatprep.subr.bf16.mxu0 0
        %1841 = vmatpush1.bf16.xpose.msra.mxu0 0
        %1842 = vmatprep.subr.bf16.mxu0 0
        %1843 = vmatpush1.bf16.xpose.msra.mxu0 0
        %1844 = vmatprep.subr.bf16.mxu0 0
        %1845 = vmatpush1.bf16.xpose.msra.mxu0 0
        %1846 = vmatprep.subr.bf16.mxu0 0
        %1847 = vmatpush1.bf16.xpose.msra.mxu0 0
        %1848 = vmatprep.subr.bf16.mxu0 0
        %1849 = vmatpush1.bf16.xpose.msra.mxu0 0
        %1850 = vmatprep.mubr.bf16.mxu0 0
        %1851 = vmatmul.mubr.bf16.gmra.mrb[0].mxu0 %v1813
        %v1852 = vpop.f32.mrb[0].mxu0
        %v1853 = vadd.f32 %v1810, %v1852
        %v1854 = vpop.f32.mrb[0].mxu0
        %v1855 = vpop.f32.mrb[0].mxu0
        %v1856 = vpop.f32.mrb[0].mxu0
        %1857 = vdwg.mxu0
        %v1858 = vsel %vm936, -inf, %v1853
        %v1859 = vmul.f32 %v1858, 0.35355338
        %v1860 = vsel %vm1222, %v1859, -inf
        %1861 = vmax.xlane.f32.xlu0 %v1860
        %v1862 = vpop.xlane.xlu0 %1861
        %v1863 = vsub.f32 %v1859, %v1862
        %v1864 = vmul.f32 %v1863, 1.442695
        %v1865 = vpow.pop %v1864
        %v1866 = vsel %vm1222, %v1865, 0.0
        %1867 = vadd.xlane.f32.xlu0 %v1866
        %v1868 = vpop.xlane.xlu0 %1867
        %v1869 = vrcp.pop %v1868
        %v1870 = vmul.f32 %v1865, %v1869
        %v1871 = vpack.c.bf16 %v1870, %v1870
        %1872 = vrot.lane.b32.xlu0 %v1162, 80
        %v1873 = vpop.permute.xlu0 %1872
        %v1876 = vsel %vm1222, %v1871, 0
        %1878 = vmatprep.subr.bf16.mxu0 0
        %1879 = vmatpush1.bf16.msra.mxu0 %v1873
        %1880 = vmatprep.subr.bf16.mxu0 0
        %1881 = vmatpush1.bf16.msra.mxu0 0
        %1882 = vmatprep.subr.bf16.mxu0 0
        %1883 = vmatpush1.bf16.msra.mxu0 0
        %1884 = vmatprep.subr.bf16.mxu0 0
        %1885 = vmatpush1.bf16.msra.mxu0 0
        %1886 = vmatprep.subr.bf16.mxu0 0
        %1887 = vmatpush1.bf16.msra.mxu0 0
        %1888 = vmatprep.subr.bf16.mxu0 0
        %1889 = vmatpush1.bf16.msra.mxu0 0
        %1890 = vmatprep.subr.bf16.mxu0 0
        %1891 = vmatpush1.bf16.msra.mxu0 0
        %1892 = vmatprep.subr.bf16.mxu0 0
        %1893 = vmatpush1.bf16.msra.mxu0 0
        %1894 = vmatprep.subr.bf16.mxu0 0
        %1895 = vmatpush1.bf16.msra.mxu0 0
        %1896 = vmatprep.subr.bf16.mxu0 0
        %1897 = vmatpush1.bf16.msra.mxu0 0
        %1898 = vmatprep.subr.bf16.mxu0 0
        %1899 = vmatpush1.bf16.msra.mxu0 0
        %1900 = vmatprep.subr.bf16.mxu0 0
        %1901 = vmatpush1.bf16.msra.mxu0 0
        %1902 = vmatprep.subr.bf16.mxu0 0
        %1903 = vmatpush1.bf16.msra.mxu0 0
        %1904 = vmatprep.subr.bf16.mxu0 0
        %1905 = vmatpush1.bf16.msra.mxu0 0
        %1906 = vmatprep.subr.bf16.mxu0 0
        %1907 = vmatpush1.bf16.msra.mxu0 0
        %1908 = vmatprep.subr.bf16.mxu0 0
        %1909 = vmatpush1.bf16.msra.mxu0 0
        %1910 = vmatprep.mubr.bf16.mxu0 0
        %1911 = vmatmul.mubr.bf16.gmra.mrb[0].mxu0 %v1876
        %v1912 = vpop.f32.mrb[0].mxu0
        %v1913 = vadd.f32 0.0, %v1912
        %v1914 = vpop.f32.mrb[0].mxu0
        %v1915 = vpop.f32.mrb[0].mxu0
        %v1916 = vpop.f32.mrb[0].mxu0
        %1917 = vdwg.mxu0
        %v1918 = vpack.c.bf16 %v1913, %v1913
        %v1920 = vsel %vm1170, %v1918, 0
        %v1923 = vsel %vm1256, %v1154, 0
        %1925 = vmatprep.subr.bf16.mxu0 0
        %1926 = vmatpush1.bf16.msra.mxu0 %v1923
        %1927 = vmatprep.subr.bf16.mxu0 0
        %1928 = vmatpush1.bf16.msra.mxu0 0
        %1929 = vmatprep.subr.bf16.mxu0 0
        %1930 = vmatpush1.bf16.msra.mxu0 0
        %1931 = vmatprep.subr.bf16.mxu0 0
        %1932 = vmatpush1.bf16.msra.mxu0 0
        %1933 = vmatprep.subr.bf16.mxu0 0
        %1934 = vmatpush1.bf16.msra.mxu0 0
        %1935 = vmatprep.subr.bf16.mxu0 0
        %1936 = vmatpush1.bf16.msra.mxu0 0
        %1937 = vmatprep.subr.bf16.mxu0 0
        %1938 = vmatpush1.bf16.msra.mxu0 0
        %1939 = vmatprep.subr.bf16.mxu0 0
        %1940 = vmatpush1.bf16.msra.mxu0 0
        %1941 = vmatprep.subr.bf16.mxu0 0
        %1942 = vmatpush1.bf16.msra.mxu0 0
        %1943 = vmatprep.subr.bf16.mxu0 0
        %1944 = vmatpush1.bf16.msra.mxu0 0
        %1945 = vmatprep.subr.bf16.mxu0 0
        %1946 = vmatpush1.bf16.msra.mxu0 0
        %1947 = vmatprep.subr.bf16.mxu0 0
        %1948 = vmatpush1.bf16.msra.mxu0 0
        %1949 = vmatprep.subr.bf16.mxu0 0
        %1950 = vmatpush1.bf16.msra.mxu0 0
        %1951 = vmatprep.subr.bf16.mxu0 0
        %1952 = vmatpush1.bf16.msra.mxu0 0
        %1953 = vmatprep.subr.bf16.mxu0 0
        %1954 = vmatpush1.bf16.msra.mxu0 0
        %1955 = vmatprep.subr.bf16.mxu0 0
        %1956 = vmatpush1.bf16.msra.mxu0 0
        %1957 = vmatprep.mubr.bf16.mxu0 0
        %1958 = vmatmul.mubr.bf16.gmra.mrb[0].mxu0 %v1920
        %v1959 = vpop.f32.mrb[0].mxu0
        %v1960 = vadd.f32 0.0, %v1959
        %v1961 = vpop.f32.mrb[0].mxu0
        %v1962 = vpop.f32.mrb[0].mxu0
        %v1963 = vpop.f32.mrb[0].mxu0
        %1964 = vdwg.mxu0
        %v1965 = vadd.f32 %v1689, %v1960
        %v1966 = vlaneseq
        %v1967 = vshrl.u32 %v1966, 7
        %v1968 = vsub.s32 3, %v1967
        %v1969 = vrot.slane %v1150, %v1968
        %1971 = vrot.lane.b32.xlu0 %v1969, 24
        %v1972 = vpop.permute.xlu0 %1971
        %v1974 = vadd.f32 %v1084, %v1972
        %v1975 = vpack.c.bf16 %v1974, %v1974
        %v1976 = vlaneseq
        %v1977 = vshrl.u32 %v1976, 7
        %v1978 = vsub.s32 3, %v1977
        %v1979 = vrot.slane %v1151, %v1978
        %1981 = vrot.lane.b32.xlu0 %v1979, 24
        %v1982 = vpop.permute.xlu0 %1981
        %v1984 = vadd.f32 %v1084, %v1982
        %v1985 = vpack.c.bf16 %v1984, %v1984
        %1987 = vrot.lane.b32.xlu0 %v1985, 104
        %v1988 = vpop.permute.xlu0 %1987
        %1989 = vrot.lane.b32.xlu0 %v1169, 104
        %v1990 = vpop.permute.xlu0 %1989
        %v1992 = vsel %vm1170, %v1988, 0
        %v1995 = vsel %vm1170, %v1990, 0
        %1997 = vmatprep.subr.bf16.mxu0 0
        %1998 = vmatpush1.bf16.xpose.msra.mxu0 %v1995
        %1999 = vmatprep.subr.bf16.mxu0 0
        %2000 = vmatpush1.bf16.xpose.msra.mxu0 0
        %2001 = vmatprep.subr.bf16.mxu0 0
        %2002 = vmatpush1.bf16.xpose.msra.mxu0 0
        %2003 = vmatprep.subr.bf16.mxu0 0
        %2004 = vmatpush1.bf16.xpose.msra.mxu0 0
        %2005 = vmatprep.subr.bf16.mxu0 0
        %2006 = vmatpush1.bf16.xpose.msra.mxu0 0
        %2007 = vmatprep.subr.bf16.mxu0 0
        %2008 = vmatpush1.bf16.xpose.msra.mxu0 0
        %2009 = vmatprep.subr.bf16.mxu0 0
        %2010 = vmatpush1.bf16.xpose.msra.mxu0 0
        %2011 = vmatprep.subr.bf16.mxu0 0
        %2012 = vmatpush1.bf16.xpose.msra.mxu0 0
        %2013 = vmatprep.subr.bf16.mxu0 0
        %2014 = vmatpush1.bf16.xpose.msra.mxu0 0
        %2015 = vmatprep.subr.bf16.mxu0 0
        %2016 = vmatpush1.bf16.xpose.msra.mxu0 0
        %2017 = vmatprep.subr.bf16.mxu0 0
        %2018 = vmatpush1.bf16.xpose.msra.mxu0 0
        %2019 = vmatprep.subr.bf16.mxu0 0
        %2020 = vmatpush1.bf16.xpose.msra.mxu0 0
        %2021 = vmatprep.subr.bf16.mxu0 0
        %2022 = vmatpush1.bf16.xpose.msra.mxu0 0
        %2023 = vmatprep.subr.bf16.mxu0 0
        %2024 = vmatpush1.bf16.xpose.msra.mxu0 0
        %2025 = vmatprep.subr.bf16.mxu0 0
        %2026 = vmatpush1.bf16.xpose.msra.mxu0 0
        %2027 = vmatprep.subr.bf16.mxu0 0
        %2028 = vmatpush1.bf16.xpose.msra.mxu0 0
        %2029 = vmatprep.mubr.bf16.mxu0 0
        %2030 = vmatmul.mubr.bf16.gmra.mrb[0].mxu0 %v1992
        %v2031 = vpop.f32.mrb[0].mxu0
        %v2032 = vadd.f32 0.0, %v2031
        %v2033 = vpop.f32.mrb[0].mxu0
        %v2034 = vpop.f32.mrb[0].mxu0
        %v2035 = vpop.f32.mrb[0].mxu0
        %2036 = vdwg.mxu0
        %v2038 = vrot.slane %v2032, 1
        %2039 = vrot.lane.b32.xlu0 %v2038, 17
        %v2040 = vpop.permute.xlu0 %2039
        %v2042 = vsel %vm1222, %v2032, 0.0
        %v2043 = vsel %vm1224, %v2042, %v2040
        %v2044 = vsel %vm1224, %v2042, 0.0
        %2046 = vrot.lane.b32.xlu0 %v2043, 1
        %v2047 = vpop.permute.xlu0 %2046
        %2049 = vrot.lane.b32.xlu0 %v2043, 2
        %v2050 = vpop.permute.xlu0 %2049
        %2052 = vrot.lane.b32.xlu0 %v2043, 3
        %v2053 = vpop.permute.xlu0 %2052
        %2055 = vrot.lane.b32.xlu0 %v2043, 4
        %v2056 = vpop.permute.xlu0 %2055
        %2058 = vrot.lane.b32.xlu0 %v2043, 5
        %v2059 = vpop.permute.xlu0 %2058
        %2061 = vrot.lane.b32.xlu0 %v2043, 6
        %v2062 = vpop.permute.xlu0 %2061
        %2065 = vrot.lane.b32.xlu0 %v2044, 7
        %v2066 = vpop.permute.xlu0 %2065
        %v2068 = vsel %vm1250, %v2043, %v2047
        %v2069 = vsel %vm1252, %v2068, %v2050
        %v2070 = vsel %vm1254, %v2069, %v2053
        %v2071 = vsel %vm1256, %v2070, %v2056
        %v2072 = vsel %vm1258, %v2071, %v2059
        %v2073 = vsel %vm1260, %v2072, %v2062
        %v2074 = vsel %vm1262, %v2073, %v2066
        %2076 = vrot.lane.b32.xlu0 %v1975, 104
        %v2077 = vpop.permute.xlu0 %2076
        %2078 = vrot.lane.b32.xlu0 %v1162, 104
        %v2079 = vpop.permute.xlu0 %2078
        %2081 = vrot.lane.b32.xlu0 %v2074, 121
        %v2082 = vpop.permute.xlu0 %2081
        %v2085 = vsel %vm1170, %v2077, 0
        %v2088 = vsel %vm1170, %v2079, 0
        %2090 = vmatprep.subr.bf16.mxu0 0
        %2091 = vmatpush1.bf16.xpose.msra.mxu0 %v2088
        %2092 = vmatprep.subr.bf16.mxu0 0
        %2093 = vmatpush1.bf16.xpose.msra.mxu0 0
        %2094 = vmatprep.subr.bf16.mxu0 0
        %2095 = vmatpush1.bf16.xpose.msra.mxu0 0
        %2096 = vmatprep.subr.bf16.mxu0 0
        %2097 = vmatpush1.bf16.xpose.msra.mxu0 0
        %2098 = vmatprep.subr.bf16.mxu0 0
        %2099 = vmatpush1.bf16.xpose.msra.mxu0 0
        %2100 = vmatprep.subr.bf16.mxu0 0
        %2101 = vmatpush1.bf16.xpose.msra.mxu0 0
        %2102 = vmatprep.subr.bf16.mxu0 0
        %2103 = vmatpush1.bf16.xpose.msra.mxu0 0
        %2104 = vmatprep.subr.bf16.mxu0 0
        %2105 = vmatpush1.bf16.xpose.msra.mxu0 0
        %2106 = vmatprep.subr.bf16.mxu0 0
        %2107 = vmatpush1.bf16.xpose.msra.mxu0 0
        %2108 = vmatprep.subr.bf16.mxu0 0
        %2109 = vmatpush1.bf16.xpose.msra.mxu0 0
        %2110 = vmatprep.subr.bf16.mxu0 0
        %2111 = vmatpush1.bf16.xpose.msra.mxu0 0
        %2112 = vmatprep.subr.bf16.mxu0 0
        %2113 = vmatpush1.bf16.xpose.msra.mxu0 0
        %2114 = vmatprep.subr.bf16.mxu0 0
        %2115 = vmatpush1.bf16.xpose.msra.mxu0 0
        %2116 = vmatprep.subr.bf16.mxu0 0
        %2117 = vmatpush1.bf16.xpose.msra.mxu0 0
        %2118 = vmatprep.subr.bf16.mxu0 0
        %2119 = vmatpush1.bf16.xpose.msra.mxu0 0
        %2120 = vmatprep.subr.bf16.mxu0 0
        %2121 = vmatpush1.bf16.xpose.msra.mxu0 0
        %2122 = vmatprep.mubr.bf16.mxu0 0
        %2123 = vmatmul.mubr.bf16.gmra.mrb[0].mxu0 %v2085
        %v2124 = vpop.f32.mrb[0].mxu0
        %v2125 = vadd.f32 %v2082, %v2124
        %v2126 = vpop.f32.mrb[0].mxu0
        %v2127 = vpop.f32.mrb[0].mxu0
        %v2128 = vpop.f32.mrb[0].mxu0
        %2129 = vdwg.mxu0
        %v2130 = vsel %vm936, -inf, %v2125
        %v2131 = vmul.f32 %v2130, 0.35355338
        %v2132 = vsel %vm1222, %v2131, -inf
        %2133 = vmax.xlane.f32.xlu0 %v2132
        %v2134 = vpop.xlane.xlu0 %2133
        %v2135 = vsub.f32 %v2131, %v2134
        %v2136 = vmul.f32 %v2135, 1.442695
        %v2137 = vpow.pop %v2136
        %v2138 = vsel %vm1222, %v2137, 0.0
        %2139 = vadd.xlane.f32.xlu0 %v2138
        %v2140 = vpop.xlane.xlu0 %2139
        %v2141 = vrcp.pop %v2140
        %v2142 = vmul.f32 %v2137, %v2141
        %v2143 = vpack.c.bf16 %v2142, %v2142
        %2144 = vrot.lane.b32.xlu0 %v1162, 72
        %v2145 = vpop.permute.xlu0 %2144
        %v2148 = vsel %vm1222, %v2143, 0
        %2150 = vmatprep.subr.bf16.mxu0 0
        %2151 = vmatpush1.bf16.msra.mxu0 %v2145
        %2152 = vmatprep.subr.bf16.mxu0 0
        %2153 = vmatpush1.bf16.msra.mxu0 0
        %2154 = vmatprep.subr.bf16.mxu0 0
        %2155 = vmatpush1.bf16.msra.mxu0 0
        %2156 = vmatprep.subr.bf16.mxu0 0
        %2157 = vmatpush1.bf16.msra.mxu0 0
        %2158 = vmatprep.subr.bf16.mxu0 0
        %2159 = vmatpush1.bf16.msra.mxu0 0
        %2160 = vmatprep.subr.bf16.mxu0 0
        %2161 = vmatpush1.bf16.msra.mxu0 0
        %2162 = vmatprep.subr.bf16.mxu0 0
        %2163 = vmatpush1.bf16.msra.mxu0 0
        %2164 = vmatprep.subr.bf16.mxu0 0
        %2165 = vmatpush1.bf16.msra.mxu0 0
        %2166 = vmatprep.subr.bf16.mxu0 0
        %2167 = vmatpush1.bf16.msra.mxu0 0
        %2168 = vmatprep.subr.bf16.mxu0 0
        %2169 = vmatpush1.bf16.msra.mxu0 0
        %2170 = vmatprep.subr.bf16.mxu0 0
        %2171 = vmatpush1.bf16.msra.mxu0 0
        %2172 = vmatprep.subr.bf16.mxu0 0
        %2173 = vmatpush1.bf16.msra.mxu0 0
        %2174 = vmatprep.subr.bf16.mxu0 0
        %2175 = vmatpush1.bf16.msra.mxu0 0
        %2176 = vmatprep.subr.bf16.mxu0 0
        %2177 = vmatpush1.bf16.msra.mxu0 0
        %2178 = vmatprep.subr.bf16.mxu0 0
        %2179 = vmatpush1.bf16.msra.mxu0 0
        %2180 = vmatprep.subr.bf16.mxu0 0
        %2181 = vmatpush1.bf16.msra.mxu0 0
        %2182 = vmatprep.mubr.bf16.mxu0 0
        %2183 = vmatmul.mubr.bf16.gmra.mrb[0].mxu0 %v2148
        %v2184 = vpop.f32.mrb[0].mxu0
        %v2185 = vadd.f32 0.0, %v2184
        %v2186 = vpop.f32.mrb[0].mxu0
        %v2187 = vpop.f32.mrb[0].mxu0
        %v2188 = vpop.f32.mrb[0].mxu0
        %2189 = vdwg.mxu0
        %v2190 = vpack.c.bf16 %v2185, %v2185
        %v2192 = vsel %vm1170, %v2190, 0
        %v2195 = vsel %vm1256, %v1155, 0
        %2197 = vmatprep.subr.bf16.mxu0 0
        %2198 = vmatpush1.bf16.msra.mxu0 %v2195
        %2199 = vmatprep.subr.bf16.mxu0 0
        %2200 = vmatpush1.bf16.msra.mxu0 0
        %2201 = vmatprep.subr.bf16.mxu0 0
        %2202 = vmatpush1.bf16.msra.mxu0 0
        %2203 = vmatprep.subr.bf16.mxu0 0
        %2204 = vmatpush1.bf16.msra.mxu0 0
        %2205 = vmatprep.subr.bf16.mxu0 0
        %2206 = vmatpush1.bf16.msra.mxu0 0
        %2207 = vmatprep.subr.bf16.mxu0 0
        %2208 = vmatpush1.bf16.msra.mxu0 0
        %2209 = vmatprep.subr.bf16.mxu0 0
        %2210 = vmatpush1.bf16.msra.mxu0 0
        %2211 = vmatprep.subr.bf16.mxu0 0
        %2212 = vmatpush1.bf16.msra.mxu0 0
        %2213 = vmatprep.subr.bf16.mxu0 0
        %2214 = vmatpush1.bf16.msra.mxu0 0
        %2215 = vmatprep.subr.bf16.mxu0 0
        %2216 = vmatpush1.bf16.msra.mxu0 0
        %2217 = vmatprep.subr.bf16.mxu0 0
        %2218 = vmatpush1.bf16.msra.mxu0 0
        %2219 = vmatprep.subr.bf16.mxu0 0
        %2220 = vmatpush1.bf16.msra.mxu0 0
        %2221 = vmatprep.subr.bf16.mxu0 0
        %2222 = vmatpush1.bf16.msra.mxu0 0
        %2223 = vmatprep.subr.bf16.mxu0 0
        %2224 = vmatpush1.bf16.msra.mxu0 0
        %2225 = vmatprep.subr.bf16.mxu0 0
        %2226 = vmatpush1.bf16.msra.mxu0 0
        %2227 = vmatprep.subr.bf16.mxu0 0
        %2228 = vmatpush1.bf16.msra.mxu0 0
        %2229 = vmatprep.mubr.bf16.mxu0 0
        %2230 = vmatmul.mubr.bf16.gmra.mrb[0].mxu0 %v2192
        %v2231 = vpop.f32.mrb[0].mxu0
        %v2232 = vadd.f32 0.0, %v2231
        %v2233 = vpop.f32.mrb[0].mxu0
        %v2234 = vpop.f32.mrb[0].mxu0
        %v2235 = vpop.f32.mrb[0].mxu0
        %2236 = vdwg.mxu0
        %v2237 = vadd.f32 %v1965, %v2232
        %v2238 = vld [vmem:[%s18] sm:$0xf]
        %v2239 = vld [vmem:[%s18 + $0x4] sm:$0xf]
        %v2240 = vld [vmem:[%s18 + $0x8] sm:$0xf]
        %v2241 = vld [vmem:[%s18 + $0xc] sm:$0xf]
        %v2242 = vld [vmem:[%s18 + $0x10] sm:$0xf]
        %v2243 = vld [vmem:[%s18 + $0x14] sm:$0xf]
        %v2244 = vld [vmem:[%s18 + $0x18] sm:$0xf]
        %v2245 = vld [vmem:[%s18 + $0x1c] sm:$0xf]
        %v2246 = vld [vmem:[%s18 + $0x20] sm:$0xf]
        %v2247 = vld [vmem:[%s18 + $0x24] sm:$0xf]
        %v2248 = vld [vmem:[%s18 + $0x28] sm:$0xf]
        %v2249 = vld [vmem:[%s18 + $0x2c] sm:$0xf]
        %v2250 = vld [vmem:[%s18 + $0x30] sm:$0xf]
        %v2251 = vld [vmem:[%s18 + $0x34] sm:$0xf]
        %v2252 = vld [vmem:[%s18 + $0x38] sm:$0xf]
        %v2253 = vld [vmem:[%s18 + $0x3c] sm:$0xf]
        %v2254 = vld [vmem:[%s18 + $0x40] sm:$0xf]
        %v2255 = vld [vmem:[%s18 + $0x44] sm:$0xf]
        %v2256 = vld [vmem:[%s18 + $0x48] sm:$0xf]
        %v2257 = vld [vmem:[%s18 + $0x4c] sm:$0xf]
        %v2258 = vld [vmem:[%s18 + $0x50] sm:$0xf]
        %v2259 = vld [vmem:[%s18 + $0x54] sm:$0xf]
        %v2260 = vld [vmem:[%s18 + $0x58] sm:$0xf]
        %v2261 = vld [vmem:[%s18 + $0x5c] sm:$0xf]
        %v2262 = vld [vmem:[#allocation26] sm:$0x7]
        %v2263 = vpack.c.bf16 %v931, %v931
        %v2264 = vpack.c.bf16 %v2237, %v2237
        %v2269 = vunpack.c.l.b16 %v2242
        %v2270 = vunpack.c.l.b16 %v2243
        %v2271 = vunpack.c.l.b16 %v2244
        %v2272 = vunpack.c.l.b16 %v2245
        %v2273 = vpack.c.b16 %v2270, %v2269
        %v2274 = vpack.c.b16 %v2272, %v2271
        %v2278 = vsel %vm939, %v2263, 0
        %2280 = vmatprep.subr.bf16.mxu0 0
        %2281 = vmatpush1.bf16.msra.mxu0 %v2273
        %2282 = vmatprep.subr.bf16.mxu0 0
        %2283 = vmatpush1.bf16.msra.mxu0 %v2274
        %2284 = vmatprep.subr.bf16.mxu0 0
        %2285 = vmatpush1.bf16.msra.mxu0 0
        %2286 = vmatprep.subr.bf16.mxu0 0
        %2287 = vmatpush1.bf16.msra.mxu0 0
        %2288 = vmatprep.subr.bf16.mxu0 0
        %2289 = vmatpush1.bf16.msra.mxu0 0
        %2290 = vmatprep.subr.bf16.mxu0 0
        %2291 = vmatpush1.bf16.msra.mxu0 0
        %2292 = vmatprep.subr.bf16.mxu0 0
        %2293 = vmatpush1.bf16.msra.mxu0 0
        %2294 = vmatprep.subr.bf16.mxu0 0
        %2295 = vmatpush1.bf16.msra.mxu0 0
        %2296 = vmatprep.subr.bf16.mxu0 0
        %2297 = vmatpush1.bf16.msra.mxu0 0
        %2298 = vmatprep.subr.bf16.mxu0 0
        %2299 = vmatpush1.bf16.msra.mxu0 0
        %2300 = vmatprep.subr.bf16.mxu0 0
        %2301 = vmatpush1.bf16.msra.mxu0 0
        %2302 = vmatprep.subr.bf16.mxu0 0
        %2303 = vmatpush1.bf16.msra.mxu0 0
        %2304 = vmatprep.subr.bf16.mxu0 0
        %2305 = vmatpush1.bf16.msra.mxu0 0
        %2306 = vmatprep.subr.bf16.mxu0 0
        %2307 = vmatpush1.bf16.msra.mxu0 0
        %2308 = vmatprep.subr.bf16.mxu0 0
        %2309 = vmatpush1.bf16.msra.mxu0 0
        %2310 = vmatprep.subr.bf16.mxu0 0
        %2311 = vmatpush1.bf16.msra.mxu0 0
        %2312 = vmatprep.mubr.bf16.mxu0 0
        %2313 = vmatmul.mubr.bf16.gmra.mrb[0].mxu0 %v2278
        %v2314 = vpop.f32.mrb[0].mxu0
        %v2315 = vadd.f32 0.0, %v2314
        %v2316 = vpop.f32.mrb[0].mxu0
        %v2317 = vpop.f32.mrb[0].mxu0
        %v2318 = vpop.f32.mrb[0].mxu0
        %2319 = vdwg.mxu0
        %v2324 = vunpack.c.l.b16 %v2238
        %v2325 = vunpack.c.l.b16 %v2239
        %v2326 = vunpack.c.l.b16 %v2240
        %v2327 = vunpack.c.l.b16 %v2241
        %v2328 = vpack.c.b16 %v2325, %v2324
        %v2329 = vpack.c.b16 %v2327, %v2326
        %v2333 = vsel %vm939, %v2264, 0
        %2335 = vmatprep.subr.bf16.mxu0 0
        %2336 = vmatpush1.bf16.msra.mxu0 %v2328
        %2337 = vmatprep.subr.bf16.mxu0 0
        %2338 = vmatpush1.bf16.msra.mxu0 %v2329
        %2339 = vmatprep.subr.bf16.mxu0 0
        %2340 = vmatpush1.bf16.msra.mxu0 0
        %2341 = vmatprep.subr.bf16.mxu0 0
        %2342 = vmatpush1.bf16.msra.mxu0 0
        %2343 = vmatprep.subr.bf16.mxu0 0
        %2344 = vmatpush1.bf16.msra.mxu0 0
        %2345 = vmatprep.subr.bf16.mxu0 0
        %2346 = vmatpush1.bf16.msra.mxu0 0
        %2347 = vmatprep.subr.bf16.mxu0 0
        %2348 = vmatpush1.bf16.msra.mxu0 0
        %2349 = vmatprep.subr.bf16.mxu0 0
        %2350 = vmatpush1.bf16.msra.mxu0 0
        %2351 = vmatprep.subr.bf16.mxu0 0
        %2352 = vmatpush1.bf16.msra.mxu0 0
        %2353 = vmatprep.subr.bf16.mxu0 0
        %2354 = vmatpush1.bf16.msra.mxu0 0
        %2355 = vmatprep.subr.bf16.mxu0 0
        %2356 = vmatpush1.bf16.msra.mxu0 0
        %2357 = vmatprep.subr.bf16.mxu0 0
        %2358 = vmatpush1.bf16.msra.mxu0 0
        %2359 = vmatprep.subr.bf16.mxu0 0
        %2360 = vmatpush1.bf16.msra.mxu0 0
        %2361 = vmatprep.subr.bf16.mxu0 0
        %2362 = vmatpush1.bf16.msra.mxu0 0
        %2363 = vmatprep.subr.bf16.mxu0 0
        %2364 = vmatpush1.bf16.msra.mxu0 0
        %2365 = vmatprep.subr.bf16.mxu0 0
        %2366 = vmatpush1.bf16.msra.mxu0 0
        %2367 = vmatprep.mubr.bf16.mxu0 0
        %2368 = vmatmul.mubr.bf16.gmra.mrb[0].mxu0 %v2333
        %v2369 = vpop.f32.mrb[0].mxu0
        %v2370 = vadd.f32 %v2315, %v2369
        %v2371 = vpop.f32.mrb[0].mxu0
        %v2372 = vpop.f32.mrb[0].mxu0
        %v2373 = vpop.f32.mrb[0].mxu0
        %2374 = vdwg.mxu0
        %v2375 = vlaneseq
        %v2376 = vshrl.u32 %v2375, 7
        %v2377 = vsub.s32 0, %v2376
        %v2378 = vrot.slane %v2262, %v2377
        %v2379 = vadd.f32 %v2370, %v2378
        %v2380 = vxor.u32 %v2379, 2147483648
        %v2381 = vmul.f32 %v2380, 1.442695
        %v2382 = vpow.pop %v2381
        %v2383 = vadd.f32 %v2382, 1.0
        %v2384 = vrcp.pop %v2383
        %v2385 = vmul.f32 1.0, %v2384
        %v2390 = vunpack.c.l.b16 %v2250
        %v2391 = vunpack.c.l.b16 %v2251
        %v2392 = vunpack.c.l.b16 %v2252
        %v2393 = vunpack.c.l.b16 %v2253
        %v2394 = vpack.c.b16 %v2391, %v2390
        %v2395 = vpack.c.b16 %v2393, %v2392
        %2398 = vmatprep.subr.bf16.mxu0 0
        %2399 = vmatpush1.bf16.msra.mxu0 %v2394
        %2400 = vmatprep.subr.bf16.mxu0 0
        %2401 = vmatpush1.bf16.msra.mxu0 %v2395
        %2402 = vmatprep.subr.bf16.mxu0 0
        %2403 = vmatpush1.bf16.msra.mxu0 0
        %2404 = vmatprep.subr.bf16.mxu0 0
        %2405 = vmatpush1.bf16.msra.mxu0 0
        %2406 = vmatprep.subr.bf16.mxu0 0
        %2407 = vmatpush1.bf16.msra.mxu0 0
        %2408 = vmatprep.subr.bf16.mxu0 0
        %2409 = vmatpush1.bf16.msra.mxu0 0
        %2410 = vmatprep.subr.bf16.mxu0 0
        %2411 = vmatpush1.bf16.msra.mxu0 0
        %2412 = vmatprep.subr.bf16.mxu0 0
        %2413 = vmatpush1.bf16.msra.mxu0 0
        %2414 = vmatprep.subr.bf16.mxu0 0
        %2415 = vmatpush1.bf16.msra.mxu0 0
        %2416 = vmatprep.subr.bf16.mxu0 0
        %2417 = vmatpush1.bf16.msra.mxu0 0
        %2418 = vmatprep.subr.bf16.mxu0 0
        %2419 = vmatpush1.bf16.msra.mxu0 0
        %2420 = vmatprep.subr.bf16.mxu0 0
        %2421 = vmatpush1.bf16.msra.mxu0 0
        %2422 = vmatprep.subr.bf16.mxu0 0
        %2423 = vmatpush1.bf16.msra.mxu0 0
        %2424 = vmatprep.subr.bf16.mxu0 0
        %2425 = vmatpush1.bf16.msra.mxu0 0
        %2426 = vmatprep.subr.bf16.mxu0 0
        %2427 = vmatpush1.bf16.msra.mxu0 0
        %2428 = vmatprep.subr.bf16.mxu0 0
        %2429 = vmatpush1.bf16.msra.mxu0 0
        %2430 = vmatprep.mubr.bf16.mxu0 0
        %2431 = vmatmul.mubr.bf16.gmra.mrb[0].mxu0 %v2278
        %v2432 = vpop.f32.mrb[0].mxu0
        %v2433 = vadd.f32 0.0, %v2432
        %v2434 = vpop.f32.mrb[0].mxu0
        %v2435 = vpop.f32.mrb[0].mxu0
        %v2436 = vpop.f32.mrb[0].mxu0
        %2437 = vdwg.mxu0
        %v2442 = vunpack.c.l.b16 %v2246
        %v2443 = vunpack.c.l.b16 %v2247
        %v2444 = vunpack.c.l.b16 %v2248
        %v2445 = vunpack.c.l.b16 %v2249
        %v2446 = vpack.c.b16 %v2443, %v2442
        %v2447 = vpack.c.b16 %v2445, %v2444
        %2450 = vmatprep.subr.bf16.mxu0 0
        %2451 = vmatpush1.bf16.msra.mxu0 %v2446
        %2452 = vmatprep.subr.bf16.mxu0 0
        %2453 = vmatpush1.bf16.msra.mxu0 %v2447
        %2454 = vmatprep.subr.bf16.mxu0 0
        %2455 = vmatpush1.bf16.msra.mxu0 0
        %2456 = vmatprep.subr.bf16.mxu0 0
        %2457 = vmatpush1.bf16.msra.mxu0 0
        %2458 = vmatprep.subr.bf16.mxu0 0
        %2459 = vmatpush1.bf16.msra.mxu0 0
        %2460 = vmatprep.subr.bf16.mxu0 0
        %2461 = vmatpush1.bf16.msra.mxu0 0
        %2462 = vmatprep.subr.bf16.mxu0 0
        %2463 = vmatpush1.bf16.msra.mxu0 0
        %2464 = vmatprep.subr.bf16.mxu0 0
        %2465 = vmatpush1.bf16.msra.mxu0 0
        %2466 = vmatprep.subr.bf16.mxu0 0
        %2467 = vmatpush1.bf16.msra.mxu0 0
        %2468 = vmatprep.subr.bf16.mxu0 0
        %2469 = vmatpush1.bf16.msra.mxu0 0
        %2470 = vmatprep.subr.bf16.mxu0 0
        %2471 = vmatpush1.bf16.msra.mxu0 0
        %2472 = vmatprep.subr.bf16.mxu0 0
        %2473 = vmatpush1.bf16.msra.mxu0 0
        %2474 = vmatprep.subr.bf16.mxu0 0
        %2475 = vmatpush1.bf16.msra.mxu0 0
        %2476 = vmatprep.subr.bf16.mxu0 0
        %2477 = vmatpush1.bf16.msra.mxu0 0
        %2478 = vmatprep.subr.bf16.mxu0 0
        %2479 = vmatpush1.bf16.msra.mxu0 0
        %2480 = vmatprep.subr.bf16.mxu0 0
        %2481 = vmatpush1.bf16.msra.mxu0 0
        %2482 = vmatprep.mubr.bf16.mxu0 0
        %2483 = vmatmul.mubr.bf16.gmra.mrb[0].mxu0 %v2333
        %v2484 = vpop.f32.mrb[0].mxu0
        %v2485 = vadd.f32 %v2433, %v2484
        %v2486 = vpop.f32.mrb[0].mxu0
        %v2487 = vpop.f32.mrb[0].mxu0
        %v2488 = vpop.f32.mrb[0].mxu0
        %2489 = vdwg.mxu0
        %v2490 = vlaneseq
        %v2491 = vshrl.u32 %v2490, 7
        %v2492 = vsub.s32 1, %v2491
        %v2493 = vrot.slane %v2262, %v2492
        %v2494 = vadd.f32 %v2485, %v2493
        %v2495 = vsub.f32 %v2494, 0.1
        %v2496 = vxor.u32 %v2495, 2147483648
        %v2497 = vmul.f32 %v2496, 1.442695
        %v2498 = vpow.pop %v2497
        %v2499 = vadd.f32 %v2498, 1.0
        %v2500 = vrcp.pop %v2499
        %v2501 = vmul.f32 1.0, %v2500
        %v2502 = vmul.f32 %v2385, %v931
        %v2503 = vpack.c.bf16 %v2502, %v2502
        %v2508 = vunpack.c.l.b16 %v2258
        %v2509 = vunpack.c.l.b16 %v2259
        %v2510 = vunpack.c.l.b16 %v2260
        %v2511 = vunpack.c.l.b16 %v2261
        %v2512 = vpack.c.b16 %v2509, %v2508
        %v2513 = vpack.c.b16 %v2511, %v2510
        %v2517 = vsel %vm939, %v2503, 0
        %2519 = vmatprep.subr.bf16.mxu0 0
        %2520 = vmatpush1.bf16.msra.mxu0 %v2512
        %2521 = vmatprep.subr.bf16.mxu0 0
        %2522 = vmatpush1.bf16.msra.mxu0 %v2513
        %2523 = vmatprep.subr.bf16.mxu0 0
        %2524 = vmatpush1.bf16.msra.mxu0 0
        %2525 = vmatprep.subr.bf16.mxu0 0
        %2526 = vmatpush1.bf16.msra.mxu0 0
        %2527 = vmatprep.subr.bf16.mxu0 0
        %2528 = vmatpush1.bf16.msra.mxu0 0
        %2529 = vmatprep.subr.bf16.mxu0 0
        %2530 = vmatpush1.bf16.msra.mxu0 0
        %2531 = vmatprep.subr.bf16.mxu0 0
        %2532 = vmatpush1.bf16.msra.mxu0 0
        %2533 = vmatprep.subr.bf16.mxu0 0
        %2534 = vmatpush1.bf16.msra.mxu0 0
        %2535 = vmatprep.subr.bf16.mxu0 0
        %2536 = vmatpush1.bf16.msra.mxu0 0
        %2537 = vmatprep.subr.bf16.mxu0 0
        %2538 = vmatpush1.bf16.msra.mxu0 0
        %2539 = vmatprep.subr.bf16.mxu0 0
        %2540 = vmatpush1.bf16.msra.mxu0 0
        %2541 = vmatprep.subr.bf16.mxu0 0
        %2542 = vmatpush1.bf16.msra.mxu0 0
        %2543 = vmatprep.subr.bf16.mxu0 0
        %2544 = vmatpush1.bf16.msra.mxu0 0
        %2545 = vmatprep.subr.bf16.mxu0 0
        %2546 = vmatpush1.bf16.msra.mxu0 0
        %2547 = vmatprep.subr.bf16.mxu0 0
        %2548 = vmatpush1.bf16.msra.mxu0 0
        %2549 = vmatprep.subr.bf16.mxu0 0
        %2550 = vmatpush1.bf16.msra.mxu0 0
        %2551 = vmatprep.mubr.bf16.mxu0 0
        %2552 = vmatmul.mubr.bf16.gmra.mrb[0].mxu0 %v2517
        %v2553 = vpop.f32.mrb[0].mxu0
        %v2554 = vadd.f32 0.0, %v2553
        %v2555 = vpop.f32.mrb[0].mxu0
        %v2556 = vpop.f32.mrb[0].mxu0
        %v2557 = vpop.f32.mrb[0].mxu0
        %2558 = vdwg.mxu0
        %v2563 = vunpack.c.l.b16 %v2254
        %v2564 = vunpack.c.l.b16 %v2255
        %v2565 = vunpack.c.l.b16 %v2256
        %v2566 = vunpack.c.l.b16 %v2257
        %v2567 = vpack.c.b16 %v2564, %v2563
        %v2568 = vpack.c.b16 %v2566, %v2565
        %2571 = vmatprep.subr.bf16.mxu0 0
        %2572 = vmatpush1.bf16.msra.mxu0 %v2567
        %2573 = vmatprep.subr.bf16.mxu0 0
        %2574 = vmatpush1.bf16.msra.mxu0 %v2568
        %2575 = vmatprep.subr.bf16.mxu0 0
        %2576 = vmatpush1.bf16.msra.mxu0 0
        %2577 = vmatprep.subr.bf16.mxu0 0
        %2578 = vmatpush1.bf16.msra.mxu0 0
        %2579 = vmatprep.subr.bf16.mxu0 0
        %2580 = vmatpush1.bf16.msra.mxu0 0
        %2581 = vmatprep.subr.bf16.mxu0 0
        %2582 = vmatpush1.bf16.msra.mxu0 0
        %2583 = vmatprep.subr.bf16.mxu0 0
        %2584 = vmatpush1.bf16.msra.mxu0 0
        %2585 = vmatprep.subr.bf16.mxu0 0
        %2586 = vmatpush1.bf16.msra.mxu0 0
        %2587 = vmatprep.subr.bf16.mxu0 0
        %2588 = vmatpush1.bf16.msra.mxu0 0
        %2589 = vmatprep.subr.bf16.mxu0 0
        %2590 = vmatpush1.bf16.msra.mxu0 0
        %2591 = vmatprep.subr.bf16.mxu0 0
        %2592 = vmatpush1.bf16.msra.mxu0 0
        %2593 = vmatprep.subr.bf16.mxu0 0
        %2594 = vmatpush1.bf16.msra.mxu0 0
        %2595 = vmatprep.subr.bf16.mxu0 0
        %2596 = vmatpush1.bf16.msra.mxu0 0
        %2597 = vmatprep.subr.bf16.mxu0 0
        %2598 = vmatpush1.bf16.msra.mxu0 0
        %2599 = vmatprep.subr.bf16.mxu0 0
        %2600 = vmatpush1.bf16.msra.mxu0 0
        %2601 = vmatprep.subr.bf16.mxu0 0
        %2602 = vmatpush1.bf16.msra.mxu0 0
        %2603 = vmatprep.mubr.bf16.mxu0 0
        %2604 = vmatmul.mubr.bf16.gmra.mrb[0].mxu0 %v2333
        %v2605 = vpop.f32.mrb[0].mxu0
        %v2606 = vadd.f32 %v2554, %v2605
        %v2607 = vpop.f32.mrb[0].mxu0
        %v2608 = vpop.f32.mrb[0].mxu0
        %v2609 = vpop.f32.mrb[0].mxu0
        %2610 = vdwg.mxu0
        %v2611 = vlaneseq
        %v2612 = vshrl.u32 %v2611, 7
        %v2613 = vsub.s32 2, %v2612
        %v2614 = vrot.slane %v2262, %v2613
        %v2615 = vadd.f32 %v2606, %v2614
        %v2616 = vtanh.pop %v2615
        %v2617 = vsub.f32 1.0, %v2501
        %v2618 = vmul.f32 %v2617, %v931
        %v2619 = vmul.f32 %v2501, %v2616
        %v2620 = vadd.f32 %v2618, %v2619
        %v2621 = vld [vmem:[#allocation19] sm:$0x1]
        %v2622 = vld [vmem:[#allocation20] sm:$0x1]
        %v2623 = vsel %vm939, %v2620, 0.0
        %2624 = vadd.xlane.f32.xlu0 %v2623
        %v2625 = vpop.xlane.xlu0 %2624
        %v2626 = vmul.f32 %v2625, %v943
        %v2627 = vsub.f32 %v2620, %v2626
        %v2628 = vmul.f32 %v2627, %v2627
        %v2629 = vsel %vm939, %v2628, 0.0
        %2630 = vadd.xlane.f32.xlu0 %v2629
        %v2631 = vpop.xlane.xlu0 %2630
        %v2632 = vmul.f32 %v2631, %v943
        %v2633 = vadd.f32 %v2632, 1e-05
        %v2634 = vrsqrt.pop %v2633
        %v2635 = vmul.f32 %v2627, %v2634
        %v2637 = vlaneseq
        %v2638 = vshrl.u32 %v2637, 7
        %v2639 = vsub.s32 0, %v2638
        %v2640 = vrot.slane %v2621, %v2639
        %v2642 = vmul.f32 %v2635, %v2640
        %v2644 = vlaneseq
        %v2645 = vshrl.u32 %v2644, 7
        %v2646 = vsub.s32 0, %v2645
        %v2647 = vrot.slane %v2622, %v2646
        %v2649 = vadd.f32 %v2642, %v2647
        %v2650 = vld [vmem:[#allocation22] sm:$0xf]
        %v2651 = vld [vmem:[#allocation22 + $0x4] sm:$0xf]
        %v2652 = vld [vmem:[#allocation22 + $0x8] sm:$0xf]
        %v2653 = vld [vmem:[#allocation22 + $0xc] sm:$0xf]
        %v2654 = vpack.c.bf16 %v2649, %v2649
        %v2655 = vld [vmem:[#allocation23] sm:$0x1]
        %v2657 = vlaneseq
        %v2658 = vshrl.u32 %v2657, 7
        %v2659 = vsub.s32 0, %v2658
        %v2660 = vrot.slane %v2655, %v2659
        %v2666 = vunpack.c.l.b16 %v2650
        %v2667 = vunpack.c.l.b16 %v2651
        %v2668 = vunpack.c.l.b16 %v2652
        %v2669 = vunpack.c.l.b16 %v2653
        %v2670 = vpack.c.b16 %v2667, %v2666
        %v2671 = vpack.c.b16 %v2669, %v2668
        %v2675 = vsel %vm939, %v2654, 0
        %2677 = vmatprep.subr.bf16.mxu0 0
        %2678 = vmatpush1.bf16.msra.mxu0 %v2670
        %2679 = vmatprep.subr.bf16.mxu0 0
        %2680 = vmatpush1.bf16.msra.mxu0 %v2671
        %2681 = vmatprep.subr.bf16.mxu0 0
        %2682 = vmatpush1.bf16.msra.mxu0 0
        %2683 = vmatprep.subr.bf16.mxu0 0
        %2684 = vmatpush1.bf16.msra.mxu0 0
        %2685 = vmatprep.subr.bf16.mxu0 0
        %2686 = vmatpush1.bf16.msra.mxu0 0
        %2687 = vmatprep.subr.bf16.mxu0 0
        %2688 = vmatpush1.bf16.msra.mxu0 0
        %2689 = vmatprep.subr.bf16.mxu0 0
        %2690 = vmatpush1.bf16.msra.mxu0 0
        %2691 = vmatprep.subr.bf16.mxu0 0
        %2692 = vmatpush1.bf16.msra.mxu0 0
        %2693 = vmatprep.subr.bf16.mxu0 0
        %2694 = vmatpush1.bf16.msra.mxu0 0
        %2695 = vmatprep.subr.bf16.mxu0 0
        %2696 = vmatpush1.bf16.msra.mxu0 0
        %2697 = vmatprep.subr.bf16.mxu0 0
        %2698 = vmatpush1.bf16.msra.mxu0 0
        %2699 = vmatprep.subr.bf16.mxu0 0
        %2700 = vmatpush1.bf16.msra.mxu0 0
        %2701 = vmatprep.subr.bf16.mxu0 0
        %2702 = vmatpush1.bf16.msra.mxu0 0
        %2703 = vmatprep.subr.bf16.mxu0 0
        %2704 = vmatpush1.bf16.msra.mxu0 0
        %2705 = vmatprep.subr.bf16.mxu0 0
        %2706 = vmatpush1.bf16.msra.mxu0 0
        %2707 = vmatprep.subr.bf16.mxu0 0
        %2708 = vmatpush1.bf16.msra.mxu0 0
        %2709 = vmatprep.mubr.bf16.mxu0 0
        %2710 = vmatmul.mubr.bf16.gmra.mrb[0].mxu0 %v2675
        %v2711 = vpop.f32.mrb[0].mxu0
        %v2712 = vadd.f32 %v2660, %v2711
        %v2713 = vpop.f32.mrb[0].mxu0
        %v2714 = vpop.f32.mrb[0].mxu0
        %v2715 = vpop.f32.mrb[0].mxu0
        %2716 = vdwg.mxu0
        %v2717 = vmax.f32 %v2712, 0.0
        %v2718 = vld [vmem:[%s16] sm:$0xf]
        %v2719 = vld [vmem:[%s16 + $0x4] sm:$0xf]
        %v2720 = vld [vmem:[%s16 + $0x8] sm:$0xf]
        %v2721 = vld [vmem:[%s16 + $0xc] sm:$0xf]
        %v2722 = vld [vmem:[%s16 + $0x10] sm:$0xf]
        %v2723 = vld [vmem:[%s16 + $0x14] sm:$0xf]
        %v2724 = vld [vmem:[%s16 + $0x18] sm:$0xf]
        %v2725 = vld [vmem:[%s16 + $0x1c] sm:$0xf]
        %v2726 = vpack.c.bf16 %v2717, %v2717
        %v2727 = vld [vmem:[#allocation25] sm:$0x1]
        %v2729 = vlaneseq
        %v2730 = vshrl.u32 %v2729, 7
        %v2731 = vsub.s32 0, %v2730
        %v2732 = vrot.slane %v2727, %v2731
        %v2742 = vunpack.c.l.b16 %v2718
        %v2743 = vunpack.c.l.b16 %v2719
        %v2744 = vunpack.c.l.b16 %v2720
        %v2745 = vunpack.c.l.b16 %v2721
        %v2746 = vunpack.c.l.b16 %v2722
        %v2747 = vunpack.c.l.b16 %v2723
        %v2748 = vunpack.c.l.b16 %v2724
        %v2749 = vunpack.c.l.b16 %v2725
        %v2750 = vpack.c.b16 %v2743, %v2742
        %v2751 = vpack.c.b16 %v2745, %v2744
        %v2752 = vpack.c.b16 %v2747, %v2746
        %v2753 = vpack.c.b16 %v2749, %v2748
        %vm2758 = vcmask 523264
        %v2760 = vsel %vm2758, %v2726, 0
        %2762 = vmatprep.subr.bf16.mxu0 0
        %2763 = vmatpush1.bf16.msra.mxu0 %v2750
        %2764 = vmatprep.subr.bf16.mxu0 0
        %2765 = vmatpush1.bf16.msra.mxu0 %v2751
        %2766 = vmatprep.subr.bf16.mxu0 0
        %2767 = vmatpush1.bf16.msra.mxu0 %v2752
        %2768 = vmatprep.subr.bf16.mxu0 0
        %2769 = vmatpush1.bf16.msra.mxu0 %v2753
        %2770 = vmatprep.subr.bf16.mxu0 0
        %2771 = vmatpush1.bf16.msra.mxu0 0
        %2772 = vmatprep.subr.bf16.mxu0 0
        %2773 = vmatpush1.bf16.msra.mxu0 0
        %2774 = vmatprep.subr.bf16.mxu0 0
        %2775 = vmatpush1.bf16.msra.mxu0 0
        %2776 = vmatprep.subr.bf16.mxu0 0
        %2777 = vmatpush1.bf16.msra.mxu0 0
        %2778 = vmatprep.subr.bf16.mxu0 0
        %2779 = vmatpush1.bf16.msra.mxu0 0
        %2780 = vmatprep.subr.bf16.mxu0 0
        %2781 = vmatpush1.bf16.msra.mxu0 0
        %2782 = vmatprep.subr.bf16.mxu0 0
        %2783 = vmatpush1.bf16.msra.mxu0 0
        %2784 = vmatprep.subr.bf16.mxu0 0
        %2785 = vmatpush1.bf16.msra.mxu0 0
        %2786 = vmatprep.subr.bf16.mxu0 0
        %2787 = vmatpush1.bf16.msra.mxu0 0
        %2788 = vmatprep.subr.bf16.mxu0 0
        %2789 = vmatpush1.bf16.msra.mxu0 0
        %2790 = vmatprep.subr.bf16.mxu0 0
        %2791 = vmatpush1.bf16.msra.mxu0 0
        %2792 = vmatprep.subr.bf16.mxu0 0
        %2793 = vmatpush1.bf16.msra.mxu0 0
        %2794 = vmatprep.mubr.bf16.mxu0 0
        %2795 = vmatmul.mubr.bf16.gmra.mrb[0].mxu0 %v2760
        %v2796 = vpop.f32.mrb[0].mxu0
        %v2797 = vadd.f32 %v2732, %v2796
        %v2798 = vpop.f32.mrb[0].mxu0
        %v2799 = vpop.f32.mrb[0].mxu0
        %v2800 = vpop.f32.mrb[0].mxu0
        %2801 = vdwg.mxu0
        %v2802 = vld [vmem:[#allocation28] sm:$0xf]
        %v2803 = vld [vmem:[#allocation28 + $0x4] sm:$0xf]
        %v2804 = vld [vmem:[#allocation28 + $0x8] sm:$0xf]
        %v2805 = vld [vmem:[#allocation28 + $0xc] sm:$0xf]
        %v2806 = vld [vmem:[#allocation28 + $0x10] sm:$0xf]
        %v2807 = vld [vmem:[#allocation28 + $0x14] sm:$0xf]
        %v2808 = vld [vmem:[#allocation28 + $0x18] sm:$0xf]
        %v2809 = vld [vmem:[#allocation28 + $0x1c] sm:$0xf]
        %v2810 = vld [vmem:[#allocation28 + $0x20] sm:$0xf]
        %v2811 = vld [vmem:[#allocation28 + $0x24] sm:$0xf]
        %v2812 = vld [vmem:[#allocation28 + $0x28] sm:$0xf]
        %v2813 = vld [vmem:[#allocation28 + $0x2c] sm:$0xf]
        %v2814 = vld [vmem:[#allocation28 + $0x30] sm:$0xf]
        %v2815 = vld [vmem:[#allocation28 + $0x34] sm:$0xf]
        %v2816 = vld [vmem:[#allocation28 + $0x38] sm:$0xf]
        %v2817 = vld [vmem:[#allocation28 + $0x3c] sm:$0xf]
        %v2818 = vld [vmem:[#allocation28 + $0x40] sm:$0xf]
        %v2819 = vld [vmem:[#allocation28 + $0x44] sm:$0xf]
        %v2820 = vld [vmem:[#allocation28 + $0x48] sm:$0xf]
        %v2821 = vld [vmem:[#allocation28 + $0x4c] sm:$0xf]
        %v2822 = vld [vmem:[#allocation28 + $0x50] sm:$0xf]
        %v2823 = vld [vmem:[#allocation28 + $0x54] sm:$0xf]
        %v2824 = vld [vmem:[#allocation28 + $0x58] sm:$0xf]
        %v2825 = vld [vmem:[#allocation28 + $0x5c] sm:$0xf]
        %v2826 = vld [vmem:[%s21] sm:$0x7]
        %v2827 = vpack.c.bf16 %v2620, %v2620
        %v2828 = vpack.c.bf16 %v2797, %v2797
        %v2833 = vunpack.c.l.b16 %v2806
        %v2834 = vunpack.c.l.b16 %v2807
        %v2835 = vunpack.c.l.b16 %v2808
        %v2836 = vunpack.c.l.b16 %v2809
        %v2837 = vpack.c.b16 %v2834, %v2833
        %v2838 = vpack.c.b16 %v2836, %v2835
        %v2842 = vsel %vm939, %v2827, 0
        %2844 = vmatprep.subr.bf16.mxu0 0
        %2845 = vmatpush1.bf16.msra.mxu0 %v2837
        %2846 = vmatprep.subr.bf16.mxu0 0
        %2847 = vmatpush1.bf16.msra.mxu0 %v2838
        %2848 = vmatprep.subr.bf16.mxu0 0
        %2849 = vmatpush1.bf16.msra.mxu0 0
        %2850 = vmatprep.subr.bf16.mxu0 0
        %2851 = vmatpush1.bf16.msra.mxu0 0
        %2852 = vmatprep.subr.bf16.mxu0 0
        %2853 = vmatpush1.bf16.msra.mxu0 0
        %2854 = vmatprep.subr.bf16.mxu0 0
        %2855 = vmatpush1.bf16.msra.mxu0 0
        %2856 = vmatprep.subr.bf16.mxu0 0
        %2857 = vmatpush1.bf16.msra.mxu0 0
        %2858 = vmatprep.subr.bf16.mxu0 0
        %2859 = vmatpush1.bf16.msra.mxu0 0
        %2860 = vmatprep.subr.bf16.mxu0 0
        %2861 = vmatpush1.bf16.msra.mxu0 0
        %2862 = vmatprep.subr.bf16.mxu0 0
        %2863 = vmatpush1.bf16.msra.mxu0 0
        %2864 = vmatprep.subr.bf16.mxu0 0
        %2865 = vmatpush1.bf16.msra.mxu0 0
        %2866 = vmatprep.subr.bf16.mxu0 0
        %2867 = vmatpush1.bf16.msra.mxu0 0
        %2868 = vmatprep.subr.bf16.mxu0 0
        %2869 = vmatpush1.bf16.msra.mxu0 0
        %2870 = vmatprep.subr.bf16.mxu0 0
        %2871 = vmatpush1.bf16.msra.mxu0 0
        %2872 = vmatprep.subr.bf16.mxu0 0
        %2873 = vmatpush1.bf16.msra.mxu0 0
        %2874 = vmatprep.subr.bf16.mxu0 0
        %2875 = vmatpush1.bf16.msra.mxu0 0
        %2876 = vmatprep.mubr.bf16.mxu0 0
        %2877 = vmatmul.mubr.bf16.gmra.mrb[0].mxu0 %v2842
        %v2878 = vpop.f32.mrb[0].mxu0
        %v2879 = vadd.f32 0.0, %v2878
        %v2880 = vpop.f32.mrb[0].mxu0
        %v2881 = vpop.f32.mrb[0].mxu0
        %v2882 = vpop.f32.mrb[0].mxu0
        %2883 = vdwg.mxu0
        %v2888 = vunpack.c.l.b16 %v2802
        %v2889 = vunpack.c.l.b16 %v2803
        %v2890 = vunpack.c.l.b16 %v2804
        %v2891 = vunpack.c.l.b16 %v2805
        %v2892 = vpack.c.b16 %v2889, %v2888
        %v2893 = vpack.c.b16 %v2891, %v2890
        %v2897 = vsel %vm939, %v2828, 0
        %2899 = vmatprep.subr.bf16.mxu0 0
        %2900 = vmatpush1.bf16.msra.mxu0 %v2892
        %2901 = vmatprep.subr.bf16.mxu0 0
        %2902 = vmatpush1.bf16.msra.mxu0 %v2893
        %2903 = vmatprep.subr.bf16.mxu0 0
        %2904 = vmatpush1.bf16.msra.mxu0 0
        %2905 = vmatprep.subr.bf16.mxu0 0
        %2906 = vmatpush1.bf16.msra.mxu0 0
        %2907 = vmatprep.subr.bf16.mxu0 0
        %2908 = vmatpush1.bf16.msra.mxu0 0
        %2909 = vmatprep.subr.bf16.mxu0 0
        %2910 = vmatpush1.bf16.msra.mxu0 0
        %2911 = vmatprep.subr.bf16.mxu0 0
        %2912 = vmatpush1.bf16.msra.mxu0 0
        %2913 = vmatprep.subr.bf16.mxu0 0
        %2914 = vmatpush1.bf16.msra.mxu0 0
        %2915 = vmatprep.subr.bf16.mxu0 0
        %2916 = vmatpush1.bf16.msra.mxu0 0
        %2917 = vmatprep.subr.bf16.mxu0 0
        %2918 = vmatpush1.bf16.msra.mxu0 0
        %2919 = vmatprep.subr.bf16.mxu0 0
        %2920 = vmatpush1.bf16.msra.mxu0 0
        %2921 = vmatprep.subr.bf16.mxu0 0
        %2922 = vmatpush1.bf16.msra.mxu0 0
        %2923 = vmatprep.subr.bf16.mxu0 0
        %2924 = vmatpush1.bf16.msra.mxu0 0
        %2925 = vmatprep.subr.bf16.mxu0 0
        %2926 = vmatpush1.bf16.msra.mxu0 0
        %2927 = vmatprep.subr.bf16.mxu0 0
        %2928 = vmatpush1.bf16.msra.mxu0 0
        %2929 = vmatprep.subr.bf16.mxu0 0
        %2930 = vmatpush1.bf16.msra.mxu0 0
        %2931 = vmatprep.mubr.bf16.mxu0 0
        %2932 = vmatmul.mubr.bf16.gmra.mrb[0].mxu0 %v2897
        %v2933 = vpop.f32.mrb[0].mxu0
        %v2934 = vadd.f32 %v2879, %v2933
        %v2935 = vpop.f32.mrb[0].mxu0
        %v2936 = vpop.f32.mrb[0].mxu0
        %v2937 = vpop.f32.mrb[0].mxu0
        %2938 = vdwg.mxu0
        %v2939 = vlaneseq
        %v2940 = vshrl.u32 %v2939, 7
        %v2941 = vsub.s32 0, %v2940
        %v2942 = vrot.slane %v2826, %v2941
        %v2943 = vadd.f32 %v2934, %v2942
        %v2944 = vxor.u32 %v2943, 2147483648
        %v2945 = vmul.f32 %v2944, 1.442695
        %v2946 = vpow.pop %v2945
        %v2947 = vadd.f32 %v2946, 1.0
        %v2948 = vrcp.pop %v2947
        %v2949 = vmul.f32 1.0, %v2948
        %v2954 = vunpack.c.l.b16 %v2814
        %v2955 = vunpack.c.l.b16 %v2815
        %v2956 = vunpack.c.l.b16 %v2816
        %v2957 = vunpack.c.l.b16 %v2817
        %v2958 = vpack.c.b16 %v2955, %v2954
        %v2959 = vpack.c.b16 %v2957, %v2956
        %2962 = vmatprep.subr.bf16.mxu0 0
        %2963 = vmatpush1.bf16.msra.mxu0 %v2958
        %2964 = vmatprep.subr.bf16.mxu0 0
        %2965 = vmatpush1.bf16.msra.mxu0 %v2959
        %2966 = vmatprep.subr.bf16.mxu0 0
        %2967 = vmatpush1.bf16.msra.mxu0 0
        %2968 = vmatprep.subr.bf16.mxu0 0
        %2969 = vmatpush1.bf16.msra.mxu0 0
        %2970 = vmatprep.subr.bf16.mxu0 0
        %2971 = vmatpush1.bf16.msra.mxu0 0
        %2972 = vmatprep.subr.bf16.mxu0 0
        %2973 = vmatpush1.bf16.msra.mxu0 0
        %2974 = vmatprep.subr.bf16.mxu0 0
        %2975 = vmatpush1.bf16.msra.mxu0 0
        %2976 = vmatprep.subr.bf16.mxu0 0
        %2977 = vmatpush1.bf16.msra.mxu0 0
        %2978 = vmatprep.subr.bf16.mxu0 0
        %2979 = vmatpush1.bf16.msra.mxu0 0
        %2980 = vmatprep.subr.bf16.mxu0 0
        %2981 = vmatpush1.bf16.msra.mxu0 0
        %2982 = vmatprep.subr.bf16.mxu0 0
        %2983 = vmatpush1.bf16.msra.mxu0 0
        %2984 = vmatprep.subr.bf16.mxu0 0
        %2985 = vmatpush1.bf16.msra.mxu0 0
        %2986 = vmatprep.subr.bf16.mxu0 0
        %2987 = vmatpush1.bf16.msra.mxu0 0
        %2988 = vmatprep.subr.bf16.mxu0 0
        %2989 = vmatpush1.bf16.msra.mxu0 0
        %2990 = vmatprep.subr.bf16.mxu0 0
        %2991 = vmatpush1.bf16.msra.mxu0 0
        %2992 = vmatprep.subr.bf16.mxu0 0
        %2993 = vmatpush1.bf16.msra.mxu0 0
        %2994 = vmatprep.mubr.bf16.mxu0 0
        %2995 = vmatmul.mubr.bf16.gmra.mrb[0].mxu0 %v2842
        %v2996 = vpop.f32.mrb[0].mxu0
        %v2997 = vadd.f32 0.0, %v2996
        %v2998 = vpop.f32.mrb[0].mxu0
        %v2999 = vpop.f32.mrb[0].mxu0
        %v3000 = vpop.f32.mrb[0].mxu0
        %3001 = vdwg.mxu0
        %v3006 = vunpack.c.l.b16 %v2810
        %v3007 = vunpack.c.l.b16 %v2811
        %v3008 = vunpack.c.l.b16 %v2812
        %v3009 = vunpack.c.l.b16 %v2813
        %v3010 = vpack.c.b16 %v3007, %v3006
        %v3011 = vpack.c.b16 %v3009, %v3008
        %3014 = vmatprep.subr.bf16.mxu0 0
        %3015 = vmatpush1.bf16.msra.mxu0 %v3010
        %3016 = vmatprep.subr.bf16.mxu0 0
        %3017 = vmatpush1.bf16.msra.mxu0 %v3011
        %3018 = vmatprep.subr.bf16.mxu0 0
        %3019 = vmatpush1.bf16.msra.mxu0 0
        %3020 = vmatprep.subr.bf16.mxu0 0
        %3021 = vmatpush1.bf16.msra.mxu0 0
        %3022 = vmatprep.subr.bf16.mxu0 0
        %3023 = vmatpush1.bf16.msra.mxu0 0
        %3024 = vmatprep.subr.bf16.mxu0 0
        %3025 = vmatpush1.bf16.msra.mxu0 0
        %3026 = vmatprep.subr.bf16.mxu0 0
        %3027 = vmatpush1.bf16.msra.mxu0 0
        %3028 = vmatprep.subr.bf16.mxu0 0
        %3029 = vmatpush1.bf16.msra.mxu0 0
        %3030 = vmatprep.subr.bf16.mxu0 0
        %3031 = vmatpush1.bf16.msra.mxu0 0
        %3032 = vmatprep.subr.bf16.mxu0 0
        %3033 = vmatpush1.bf16.msra.mxu0 0
        %3034 = vmatprep.subr.bf16.mxu0 0
        %3035 = vmatpush1.bf16.msra.mxu0 0
        %3036 = vmatprep.subr.bf16.mxu0 0
        %3037 = vmatpush1.bf16.msra.mxu0 0
        %3038 = vmatprep.subr.bf16.mxu0 0
        %3039 = vmatpush1.bf16.msra.mxu0 0
        %3040 = vmatprep.subr.bf16.mxu0 0
        %3041 = vmatpush1.bf16.msra.mxu0 0
        %3042 = vmatprep.subr.bf16.mxu0 0
        %3043 = vmatpush1.bf16.msra.mxu0 0
        %3044 = vmatprep.subr.bf16.mxu0 0
        %3045 = vmatpush1.bf16.msra.mxu0 0
        %3046 = vmatprep.mubr.bf16.mxu0 0
        %3047 = vmatmul.mubr.bf16.gmra.mrb[0].mxu0 %v2897
        %v3048 = vpop.f32.mrb[0].mxu0
        %v3049 = vadd.f32 %v2997, %v3048
        %v3050 = vpop.f32.mrb[0].mxu0
        %v3051 = vpop.f32.mrb[0].mxu0
        %v3052 = vpop.f32.mrb[0].mxu0
        %3053 = vdwg.mxu0
        %v3054 = vlaneseq
        %v3055 = vshrl.u32 %v3054, 7
        %v3056 = vsub.s32 1, %v3055
        %v3057 = vrot.slane %v2826, %v3056
        %v3058 = vadd.f32 %v3049, %v3057
        %v3059 = vsub.f32 %v3058, 0.1
        %v3060 = vxor.u32 %v3059, 2147483648
        %v3061 = vmul.f32 %v3060, 1.442695
        %v3062 = vpow.pop %v3061
        %v3063 = vadd.f32 %v3062, 1.0
        %v3064 = vrcp.pop %v3063
        %v3065 = vmul.f32 1.0, %v3064
        %v3066 = vmul.f32 %v2949, %v2620
        %v3067 = vpack.c.bf16 %v3066, %v3066
        %v3072 = vunpack.c.l.b16 %v2822
        %v3073 = vunpack.c.l.b16 %v2823
        %v3074 = vunpack.c.l.b16 %v2824
        %v3075 = vunpack.c.l.b16 %v2825
        %v3076 = vpack.c.b16 %v3073, %v3072
        %v3077 = vpack.c.b16 %v3075, %v3074
        %v3081 = vsel %vm939, %v3067, 0
        %3083 = vmatprep.subr.bf16.mxu0 0
        %3084 = vmatpush1.bf16.msra.mxu0 %v3076
        %3085 = vmatprep.subr.bf16.mxu0 0
        %3086 = vmatpush1.bf16.msra.mxu0 %v3077
        %3087 = vmatprep.subr.bf16.mxu0 0
        %3088 = vmatpush1.bf16.msra.mxu0 0
        %3089 = vmatprep.subr.bf16.mxu0 0
        %3090 = vmatpush1.bf16.msra.mxu0 0
        %3091 = vmatprep.subr.bf16.mxu0 0
        %3092 = vmatpush1.bf16.msra.mxu0 0
        %3093 = vmatprep.subr.bf16.mxu0 0
        %3094 = vmatpush1.bf16.msra.mxu0 0
        %3095 = vmatprep.subr.bf16.mxu0 0
        %3096 = vmatpush1.bf16.msra.mxu0 0
        %3097 = vmatprep.subr.bf16.mxu0 0
        %3098 = vmatpush1.bf16.msra.mxu0 0
        %3099 = vmatprep.subr.bf16.mxu0 0
        %3100 = vmatpush1.bf16.msra.mxu0 0
        %3101 = vmatprep.subr.bf16.mxu0 0
        %3102 = vmatpush1.bf16.msra.mxu0 0
        %3103 = vmatprep.subr.bf16.mxu0 0
        %3104 = vmatpush1.bf16.msra.mxu0 0
        %3105 = vmatprep.subr.bf16.mxu0 0
        %3106 = vmatpush1.bf16.msra.mxu0 0
        %3107 = vmatprep.subr.bf16.mxu0 0
        %3108 = vmatpush1.bf16.msra.mxu0 0
        %3109 = vmatprep.subr.bf16.mxu0 0
        %3110 = vmatpush1.bf16.msra.mxu0 0
        %3111 = vmatprep.subr.bf16.mxu0 0
        %3112 = vmatpush1.bf16.msra.mxu0 0
        %3113 = vmatprep.subr.bf16.mxu0 0
        %3114 = vmatpush1.bf16.msra.mxu0 0
        %3115 = vmatprep.mubr.bf16.mxu0 0
        %3116 = vmatmul.mubr.bf16.gmra.mrb[0].mxu0 %v3081
        %v3117 = vpop.f32.mrb[0].mxu0
        %v3118 = vadd.f32 0.0, %v3117
        %v3119 = vpop.f32.mrb[0].mxu0
        %v3120 = vpop.f32.mrb[0].mxu0
        %v3121 = vpop.f32.mrb[0].mxu0
        %3122 = vdwg.mxu0
        %v3127 = vunpack.c.l.b16 %v2818
        %v3128 = vunpack.c.l.b16 %v2819
        %v3129 = vunpack.c.l.b16 %v2820
        %v3130 = vunpack.c.l.b16 %v2821
        %v3131 = vpack.c.b16 %v3128, %v3127
        %v3132 = vpack.c.b16 %v3130, %v3129
        %3135 = vmatprep.subr.bf16.mxu0 0
        %3136 = vmatpush1.bf16.msra.mxu0 %v3131
        %3137 = vmatprep.subr.bf16.mxu0 0
        %3138 = vmatpush1.bf16.msra.mxu0 %v3132
        %3139 = vmatprep.subr.bf16.mxu0 0
        %3140 = vmatpush1.bf16.msra.mxu0 0
        %3141 = vmatprep.subr.bf16.mxu0 0
        %3142 = vmatpush1.bf16.msra.mxu0 0
        %3143 = vmatprep.subr.bf16.mxu0 0
        %3144 = vmatpush1.bf16.msra.mxu0 0
        %3145 = vmatprep.subr.bf16.mxu0 0
        %3146 = vmatpush1.bf16.msra.mxu0 0
        %3147 = vmatprep.subr.bf16.mxu0 0
        %3148 = vmatpush1.bf16.msra.mxu0 0
        %3149 = vmatprep.subr.bf16.mxu0 0
        %3150 = vmatpush1.bf16.msra.mxu0 0
        %3151 = vmatprep.subr.bf16.mxu0 0
        %3152 = vmatpush1.bf16.msra.mxu0 0
        %3153 = vmatprep.subr.bf16.mxu0 0
        %3154 = vmatpush1.bf16.msra.mxu0 0
        %3155 = vmatprep.subr.bf16.mxu0 0
        %3156 = vmatpush1.bf16.msra.mxu0 0
        %3157 = vmatprep.subr.bf16.mxu0 0
        %3158 = vmatpush1.bf16.msra.mxu0 0
        %3159 = vmatprep.subr.bf16.mxu0 0
        %3160 = vmatpush1.bf16.msra.mxu0 0
        %3161 = vmatprep.subr.bf16.mxu0 0
        %3162 = vmatpush1.bf16.msra.mxu0 0
        %3163 = vmatprep.subr.bf16.mxu0 0
        %3164 = vmatpush1.bf16.msra.mxu0 0
        %3165 = vmatprep.subr.bf16.mxu0 0
        %3166 = vmatpush1.bf16.msra.mxu0 0
        %3167 = vmatprep.mubr.bf16.mxu0 0
        %3168 = vmatmul.mubr.bf16.gmra.mrb[0].mxu0 %v2897
        %v3169 = vpop.f32.mrb[0].mxu0
        %v3170 = vadd.f32 %v3118, %v3169
        %v3171 = vpop.f32.mrb[0].mxu0
        %v3172 = vpop.f32.mrb[0].mxu0
        %v3173 = vpop.f32.mrb[0].mxu0
        %3174 = vdwg.mxu0
        %v3175 = vlaneseq
        %v3176 = vshrl.u32 %v3175, 7
        %v3177 = vsub.s32 2, %v3176
        %v3178 = vrot.slane %v2826, %v3177
        %v3179 = vadd.f32 %v3170, %v3178
        %v3180 = vtanh.pop %v3179
        %v3181 = vsub.f32 1.0, %v3065
        %v3182 = vmul.f32 %v3181, %v2620
        %v3183 = vmul.f32 %v3065, %v3180
        %v3184 = vadd.f32 %v3182, %v3183
        %3185 = vst.msk [vmem:[%s925] sm:$0xff] %vm939, %v3184
        %s3186 = sand.u32 %s527, 1
        %s3187 = scalar_lea.sflag [#allocation4], %s3186
        %s3188 = sand.u32 %s527, 1
        %s3189 = smul.addr %s3188, 8
        %s3190 = scalar_lea.vmem [#allocation29], %s3189
        // Predicated region
        $region177: #{tpu_custom_call.1} parent=107 // pred_check
          %p3191 = pneg %p537
        $region178: #{tpu_custom_call.1} parent=107 // pred_check_branch
          %3193 = sbr.rel (%p3191) target = $region180
        $region179: #{tpu_custom_call.1} parent=107 // pred_region
          %s3195 = ssub.s32 128, 128
          %3196 = vsyncadd %s3187, %s3195
          %s3197 = smul.addr %s47, 128
          %s3198 = scalar_lea.hbm %s22, %s3197
          %s3200 = sshll.u32 %s3190, 4
          %s3201 = int_to_ptr.vmem [resolvable:$true] %s3200
          %3203 = dma.vmem_to_hbm [thread:$0]  %s3201, 128, %s3198, %s3187
        $region180: #{tpu_custom_call.1} parent=107 // pred_fallthru
          _
      $region108: #{tpu_custom_call.1} parent=5 // pred_fallthru
        _
      %p3204 = scmp.le.s32.totalorder 2, %s42
      // Predicated region
      $region181: #{tpu_custom_call.1} parent=5 // pred_check
        %p3205 = pneg %p3204
      $region182: #{tpu_custom_call.1} parent=5 // pred_check_branch
        %3207 = sbr.rel (%p3205) target = $region184
      $region183: #{tpu_custom_call.1} parent=5 // pred_region
        %s3208 = ssub.s32 %s42, 2
        // Predicated region
        $region185: #{tpu_custom_call.1} parent=183 // pred_check
          %p3209 = pneg %p543
        $region186: #{tpu_custom_call.1} parent=183 // pred_check_branch
          %3211 = sbr.rel (%p3209) target = $region188
        $region187: #{tpu_custom_call.1} parent=183 // pred_region
          %s3212 = sand.u32 %s528, 1
          %s3213 = scalar_lea.sflag [#allocation4], %s3212
          %s3214 = sand.u32 %s528, 1
          %s3215 = smul.addr %s3214, 8
          %s3216 = scalar_lea.vmem [#allocation29], %s3215
          %3217 = dma.done %s3213, 128
        $region188: #{tpu_custom_call.1} parent=183 // pred_fallthru
          _
      $region184: #{tpu_custom_call.1} parent=5 // pred_fallthru
        _
    $region6: #{tpu_custom_call.1} parent=1 // loop_footer
      %s46 = sadd.s32 1, %s42
    $region7: #{tpu_custom_call.1} parent=1 // loop_footer_branch
      %41 = sbr.rel target = $region3
    $region8: #{tpu_custom_call.1} parent=1 // loop_exit
      _
    %3218 = vsyncpa [#allocation3], 1
    %s3219 = scalar_lea.sflag [#allocation3], 1
    %3220 = vsyncpa %s3219, 1
    %3221 = vsyncpa [#allocation6], 1
    %3222 = vsyncpa [#allocation9], 1
    %3223 = vsyncpa [#allocation12], 1
    %3224 = vsyncpa [#allocation15], 1
    %3225 = vsyncpa [#allocation18], 1
    %3226 = vsyncpa [#allocation21], 1
    %3227 = vsyncpa [#allocation24], 1
    %3228 = vsyncpa [#allocation27], 1
    %3229 = vsyncpa [#allocation4], 1
    %s3230 = scalar_lea.sflag [#allocation4], 1
    %3231 = vsyncpa %s3230, 1

</llo_original>
